<compile_context>
chip_gen: v5e
topology: v5e:2x2
jax: 0.10.0
libtpu: 0.0.40
codegen_flags: <defaults>
</compile_context>

<pallas_src>
import math
import jax
import jax.numpy as jnp
from jax.experimental import pallas as pl
from jax.experimental.pallas import tpu as pltpu

HIDDEN = 1024
N_HIDDEN_LAYERS = 4
HEAD_PAD = 128            # lane-dense padded head width (true head width = 1)
MAX_TB = 1024             # max batch-tile rows (~15 MiB VMEM at TB=1024)


def calc_coeff(iter_num, high=1.0, low=0.0, alpha=10.0, max_iter=10000.0):
    return float(2.0 * (high - low) / (1.0 + math.exp(-alpha * iter_num / max_iter))
                 - (high - low) + low)


def _round_up(x, m):
    return (x + m - 1) // m * m


def mlp_kernel(x_ref, w_ref, b_ref, wd_ref, bd_ref, out_ref, h_ref):
    """Grid = (batch_tiles, layers).  One hidden layer per inner step; activation tile is
    carried in h_ref (VMEM scratch) across the layer axis; weights stream layer-by-layer."""
    l = pl.program_id(1)

    @pl.when(l == 0)
    def _():
        # Ingest f32 activations and cast in-kernel (saves a wrapper-side cast pass).
        h_ref[...] = x_ref[...].astype(jnp.bfloat16)

    # Hidden layer: bf16 MXU matmul with f32 accumulation, bias, ReLU.
    # Dropout(0.5) is identity at inference.
    a = jnp.dot(h_ref[...], w_ref[...], preferred_element_type=jnp.float32) + b_ref[...]
    h_ref[...] = jnp.maximum(a, 0.0).astype(jnp.bfloat16)

    @pl.when(l == pl.num_programs(1) - 1)
    def _():
        # Lane-dense padded head: (TB, 128) f32; true logit lives in column 0.
        out_ref[...] = (jnp.dot(h_ref[...], wd_ref[...],
                                preferred_element_type=jnp.float32) + bd_ref[...])


def prepare_params(params):
    """One-time, out-of-the-forward weight prep (kernel-ready layouts)."""
    w_stack = jnp.stack([w.astype(jnp.bfloat16) for (w, _) in params["hidden"]])          # (4,1024,1024) bf16
    b_stack = jnp.stack([b.astype(jnp.float32).reshape(1, HIDDEN)
                         for (_, b) in params["hidden"]])                                  # (4,1,1024) f32
    wd, bd = params["head"]
    wd_pad = jnp.zeros((HIDDEN, HEAD_PAD), jnp.bfloat16).at[:, 0].set(
        wd[:, 0].astype(jnp.bfloat16))                                                     # (1024,128) bf16
    bd_pad = jnp.zeros((1, HEAD_PAD), jnp.float32).at[0, 0].set(bd[0, 0].astype(jnp.float32))
    return {"w_stack": w_stack, "b_stack": b_stack, "wd_pad": wd_pad, "bd_pad": bd_pad}


def domain_classifier_forward(x, prep, iter_num):
    """Forward pass of DomainClassifier. `iter_num` only feeds the (backward-only) GRL coeff."""
    _coeff = calc_coeff(iter_num, 1.0, 0.0, 10, 10000.0)  # forward-inert (gradient hook only)

    B = x.shape[0]
    TB = min(MAX_TB, _round_up(B, 16))        # 16-row pad: bf16 sublane packing + MXU M-fill
    B_pad = _round_up(B, TB)
    nb = B_pad // TB

    x_f32 = x.astype(jnp.float32)
    if B_pad != B:
        x_f32 = jnp.pad(x_f32, ((0, B_pad - B), (0, 0)))

    grid = (nb, N_HIDDEN_LAYERS)

    # x / out blocks are constant along the layer axis -> DMA'd once per batch tile.
    x_spec = pl.BlockSpec((TB, HIDDEN), lambda b, l: (b, 0))
    # Stacked hidden weights/biases stream layer-by-layer (double-buffered by default,
    # so layer l+1 prefetches under layer l compute).
    w_spec = pl.BlockSpec((None, HIDDEN, HIDDEN), lambda b, l: (l, 0, 0))
    b_spec = pl.BlockSpec((None, 1, HIDDEN), lambda b, l: (l, 0, 0))
    # Tiny grid-invariant head: single-buffered (double-buffering is pure waste here).
    wd_spec = pl.BlockSpec((HIDDEN, HEAD_PAD), lambda b, l: (0, 0),
                           pipeline_mode=pl.Buffered(1))
    bd_spec = pl.BlockSpec((1, HEAD_PAD), lambda b, l: (0, 0),
                           pipeline_mode=pl.Buffered(1))
    out_spec = pl.BlockSpec((TB, HEAD_PAD), lambda b, l: (b, 0))

    weight_bytes_per_tile = (N_HIDDEN_LAYERS * HIDDEN * HIDDEN * 2   # bf16 hidden weights
                             + N_HIDDEN_LAYERS * HIDDEN * 4          # f32 biases
                             + HIDDEN * HEAD_PAD * 2 + HEAD_PAD * 4)  # padded head
    cost = pl.CostEstimate(
        flops=2 * B_pad * HIDDEN * HIDDEN * N_HIDDEN_LAYERS + 2 * B_pad * HIDDEN * HEAD_PAD,
        transcendentals=0,
        bytes_accessed=nb * weight_bytes_per_tile
                       + B_pad * HIDDEN * 4          # f32 activations in
                       + B_pad * HEAD_PAD * 4,       # f32 padded logits out
    )

    out = pl.pallas_call(
        mlp_kernel,
        out_shape=jax.ShapeDtypeStruct((B_pad, HEAD_PAD), jnp.float32),
        grid=grid,
        in_specs=[x_spec, w_spec, b_spec, wd_spec, bd_spec],
        out_specs=out_spec,
        scratch_shapes=[pltpu.VMEM((TB, HIDDEN), jnp.bfloat16)],
        compiler_params=pltpu.CompilerParams(
            dimension_semantics=("parallel", "arbitrary"),
            vmem_limit_bytes=32 * 1024 * 1024,
        ),
        cost_estimate=cost,
    )(x_f32, prep["w_stack"], prep["b_stack"], prep["wd_pad"], prep["bd_pad"])

    return out[:B, :1]


def init_params(key):
    """Deterministic init mimicking PyTorch nn.Linear default: U(-1/sqrt(fan_in), 1/sqrt(fan_in))."""
    params = {"hidden": [], "head": None}
    keys = jax.random.split(key, 2 * (N_HIDDEN_LAYERS + 1))
    k_idx = 0
    bound = 1.0 / math.sqrt(HIDDEN)
    for _ in range(N_HIDDEN_LAYERS):
        w = jax.random.uniform(keys[k_idx], (HIDDEN, HIDDEN), jnp.float32, -bound, bound)
        b = jax.random.uniform(keys[k_idx + 1], (1, HIDDEN), jnp.float32, -bound, bound)
        k_idx += 2
        params["hidden"].append((w, b))
    wd = jax.random.uniform(keys[k_idx], (HIDDEN, 1), jnp.float32, -bound, bound)
    bd = jax.random.uniform(keys[k_idx + 1], (1, 1), jnp.float32, -bound, bound)
    params["head"] = (wd, bd)
    return params


def reference_forward_bf16(x, params):
    """Pure-JAX reference mirroring the kernel's mixed-precision path exactly."""
    h = x.astype(jnp.bfloat16)
    for (w, b) in params["hidden"]:
        a = jnp.dot(h, w.astype(jnp.bfloat16), preferred_element_type=jnp.float32) + b
        h = jnp.maximum(a, 0.0).astype(jnp.bfloat16)
    wd, bd = params["head"]
    return jnp.dot(h, wd.astype(jnp.bfloat16), preferred_element_type=jnp.float32) + bd


def reference_forward_f32(x, params):
    h = x
    for (w, b) in params["hidden"]:
        h = jnp.maximum(h @ w + b, 0.0)
    wd, bd = params["head"]
    return h @ wd + bd


if __name__ == "__main__":
    key = jax.random.PRNGKey(0)
    kx, kp = jax.random.split(key)

    B = 8  # small batch
    x = jax.random.normal(kx, (B, HIDDEN), jnp.float32)
    params = init_params(kp)

    # One-time weight prep (hoisted out of the per-call forward).
    prep = prepare_params(params)
    prep = jax.tree_util.tree_map(jax.block_until_ready, prep)

    out = domain_classifier_forward(x, prep, iter_num=100)
    out = jax.block_until_ready(out)
    assert out.shape == (B, 1), out.shape

    # Exact-path (bf16-emulated) reference: tight tolerance.
    ref_bf16 = jax.block_until_ready(reference_forward_bf16(x, params))
    assert jnp.allclose(out, ref_bf16, atol=1e-2, rtol=1e-2), \
        float(jnp.max(jnp.abs(out - ref_bf16)))

    # Full f32 reference: loose tolerance (bf16 weight quantization).
    ref_f32 = jax.block_until_ready(reference_forward_f32(x, params))
    assert jnp.allclose(out, ref_f32, atol=5e-2, rtol=5e-2), \
        float(jnp.max(jnp.abs(out - ref_f32)))

    print("KERNEL_OK")
</pallas_src>

<mosaic_0001>
module attributes {stable_mosaic.version = 11 : i64} {
  func.func @mlp_kernel(%arg0: i32, %arg1: i32, %arg2: memref<16x1024xf32, #tpu.memory_space<vmem>>, %arg3: memref<1x1024x1024xbf16, #tpu.memory_space<vmem>>, %arg4: memref<1x1x1024xf32, #tpu.memory_space<vmem>>, %arg5: memref<1024x128xbf16, #tpu.memory_space<vmem>>, %arg6: memref<1x128xf32, #tpu.memory_space<vmem>>, %arg7: memref<16x128xf32, #tpu.memory_space<vmem>>, %arg8: memref<16x1024xbf16, #tpu.memory_space<vmem>>) attributes {dimension_semantics = [#tpu.dimension_semantics<parallel>, #tpu.dimension_semantics<arbitrary>], iteration_bounds = array<i64: 1, 4>, scalar_prefetch = 0 : i64, scratch_operands = 1 : i64, tpu.core_type = #tpu.core_type<tc>, window_params = [{transform_indices = @transform_0, window_bounds = array<i64: 16, 1024>}, {transform_indices = @transform_1, window_bounds = array<i64: 1, 1024, 1024>}, {transform_indices = @transform_2, window_bounds = array<i64: 1, 1, 1024>}, {pipeline_mode = #tpu.pipeline_mode<synchronous>, transform_indices = @transform_3, window_bounds = array<i64: 1024, 128>}, {pipeline_mode = #tpu.pipeline_mode<synchronous>, transform_indices = @transform_4, window_bounds = array<i64: 1, 128>}, {transform_indices = @transform_5, window_bounds = array<i64: 16, 128>}]} {
    %c0_i32 = arith.constant 0 : i32
    %0 = arith.cmpi eq, %arg1, %c0_i32 : i32
    %1 = arith.extui %0 : i1 to i32
    %c0_i32_0 = arith.constant 0 : i32
    %2 = arith.cmpi ne, %1, %c0_i32_0 : i32
    scf.if %2 {
      %c0_12 = arith.constant 0 : index
      %c0_13 = arith.constant 0 : index
      %18 = vector.load %arg2[%c0_12, %c0_13] : memref<16x1024xf32, #tpu.memory_space<vmem>>, vector<16x1024xf32>
      %19 = arith.truncf %18 : vector<16x1024xf32> to vector<16x1024xbf16>
      %c0_14 = arith.constant 0 : index
      %c0_15 = arith.constant 0 : index
      %20 = vector.load %arg8[%c0_14, %c0_15] : memref<16x1024xbf16, #tpu.memory_space<vmem>>, vector<16x1024xbf16>
      tpu.vector_store %arg8[%c0_14, %c0_15], %19 {strides = array<i32>} : memref<16x1024xbf16, #tpu.memory_space<vmem>>, vector<16x1024xbf16>,
    } else {
    }
    %c0 = arith.constant 0 : index
    %c0_1 = arith.constant 0 : index
    %3 = vector.load %arg8[%c0, %c0_1] : memref<16x1024xbf16, #tpu.memory_space<vmem>>, vector<16x1024xbf16>
    %c0_2 = arith.constant 0 : index
    %c0_3 = arith.constant 0 : index
    %c0_4 = arith.constant 0 : index
    %4 = vector.load %arg3[%c0_2, %c0_3, %c0_4] : memref<1x1024x1024xbf16, #tpu.memory_space<vmem>>, vector<1x1024x1024xbf16>
    %5 = vector.shape_cast %4 : vector<1x1024x1024xbf16> to vector<1024x1024xbf16>
    %cst = arith.constant dense<0.000000e+00> : vector<16x1024xf32>
    %6 = tpu.matmul %3, %5, %cst {dimension_numbers = #tpu.dot_dimension_numbers<[1], [0], [0], [1], [0, 0, 1, 1], [], []>} : vector<16x1024xbf16>, vector<1024x1024xbf16>, vector<16x1024xf32> -> vector<16x1024xf32>
    %c0_5 = arith.constant 0 : index
    %c0_6 = arith.constant 0 : index
    %c0_7 = arith.constant 0 : index
    %7 = vector.load %arg4[%c0_5, %c0_6, %c0_7] : memref<1x1x1024xf32, #tpu.memory_space<vmem>>, vector<1x1x1024xf32>
    %8 = vector.shape_cast %7 : vector<1x1x1024xf32> to vector<1x1024xf32>
    %9 = vector.broadcast %8 : vector<1x1024xf32> to vector<16x1024xf32>
    %10 = arith.addf %6, %9 : vector<16x1024xf32>
    %cst_8 = arith.constant 0.000000e+00 : f32
    %11 = vector.broadcast %cst_8 : f32 to vector<16x1024xf32>
    %12 = arith.maximumf %10, %11 : vector<16x1024xf32>
    %13 = arith.truncf %12 : vector<16x1024xf32> to vector<16x1024xbf16>
    %c0_9 = arith.constant 0 : index
    %c0_10 = arith.constant 0 : index
    %14 = vector.load %arg8[%c0_9, %c0_10] : memref<16x1024xbf16, #tpu.memory_space<vmem>>, vector<16x1024xbf16>
    tpu.vector_store %arg8[%c0_9, %c0_10], %13 {strides = array<i32>} : memref<16x1024xbf16, #tpu.memory_space<vmem>>, vector<16x1024xbf16>,
    %c3_i32 = arith.constant 3 : i32
    %15 = arith.cmpi eq, %arg1, %c3_i32 : i32
    %16 = arith.extui %15 : i1 to i32
    %c0_i32_11 = arith.constant 0 : i32
    %17 = arith.cmpi ne, %16, %c0_i32_11 : i32
    scf.if %17 {
      %c0_12 = arith.constant 0 : index
      %c0_13 = arith.constant 0 : index
      %18 = vector.load %arg8[%c0_12, %c0_13] : memref<16x1024xbf16, #tpu.memory_space<vmem>>, vector<16x1024xbf16>
      %c0_14 = arith.constant 0 : index
      %c0_15 = arith.constant 0 : index
      %19 = vector.load %arg5[%c0_14, %c0_15] : memref<1024x128xbf16, #tpu.memory_space<vmem>>, vector<1024x128xbf16>
      %cst_16 = arith.constant dense<0.000000e+00> : vector<16x128xf32>
      %20 = tpu.matmul %18, %19, %cst_16 {dimension_numbers = #tpu.dot_dimension_numbers<[1], [0], [0], [1], [0, 0, 1, 1], [], []>} : vector<16x1024xbf16>, vector<1024x128xbf16>, vector<16x128xf32> -> vector<16x128xf32>
      %c0_17 = arith.constant 0 : index
      %c0_18 = arith.constant 0 : index
      %21 = vector.load %arg6[%c0_17, %c0_18] : memref<1x128xf32, #tpu.memory_space<vmem>>, vector<1x128xf32>
      %22 = vector.broadcast %21 : vector<1x128xf32> to vector<16x128xf32>
      %23 = arith.addf %20, %22 : vector<16x128xf32>
      %c0_19 = arith.constant 0 : index
      %c0_20 = arith.constant 0 : index
      %24 = vector.load %arg7[%c0_19, %c0_20] : memref<16x128xf32, #tpu.memory_space<vmem>>, vector<16x128xf32>
      tpu.vector_store %arg7[%c0_19, %c0_20], %23 {strides = array<i32>} : memref<16x128xf32, #tpu.memory_space<vmem>>, vector<16x128xf32>,
    } else {
    }
    return
  }
  func.func @transform_0(%arg0: i32, %arg1: i32) -> (i32, i32) {
    %c0_i32 = arith.constant 0 : i32
    %c0_i32_0 = arith.constant 0 : i32
    return %arg0, %c0_i32 : i32, i32
  }
  func.func @transform_1(%arg0: i32, %arg1: i32) -> (i32, i32, i32) {
    %c0_i32 = arith.constant 0 : i32
    %c0_i32_0 = arith.constant 0 : i32
    %c0_i32_1 = arith.constant 0 : i32
    return %arg1, %c0_i32, %c0_i32_0 : i32, i32, i32
  }
  func.func @transform_2(%arg0: i32, %arg1: i32) -> (i32, i32, i32) {
    %c0_i32 = arith.constant 0 : i32
    %c0_i32_0 = arith.constant 0 : i32
    %c0_i32_1 = arith.constant 0 : i32
    return %arg1, %c0_i32, %c0_i32_0 : i32, i32, i32
  }
  func.func @transform_3(%arg0: i32, %arg1: i32) -> (i32, i32) {
    %c0_i32 = arith.constant 0 : i32
    %c0_i32_0 = arith.constant 0 : i32
    %c0_i32_1 = arith.constant 0 : i32
    return %c0_i32, %c0_i32_0 : i32, i32
  }
  func.func @transform_4(%arg0: i32, %arg1: i32) -> (i32, i32) {
    %c0_i32 = arith.constant 0 : i32
    %c0_i32_0 = arith.constant 0 : i32
    %c0_i32_1 = arith.constant 0 : i32
    return %c0_i32, %c0_i32_0 : i32, i32
  }
  func.func @transform_5(%arg0: i32, %arg1: i32) -> (i32, i32) {
    %c0_i32 = arith.constant 0 : i32
    %c0_i32_0 = arith.constant 0 : i32
    return %arg0, %c0_i32 : i32, i32
  }
}

</mosaic_0001>

<llo_original>
// kernel: tpu_custom_call.1
$region0: #{tpu_custom_call.1}
  #allocation0 [shape = 'u32[]', space=smem, size = 0x4, offset = 0x4, fixed_abs, tag = 'smem constant byte address 0x4 - core index']
  #allocation1 [shape = 'u32[72,128]{1,0:T(1,128)}', space=vmem, size = 0x9000, scoped, tag = 'internal scratch']
  #allocation2 [shape = 'bf16[16,1024]{1,0:T(8,128)(2,1)}', space=vmem, size = 0x8000, scoped, tag = 'scratch operand']
  %s0 = inlined_call_operand.hbm [shape: f32[16,1024], index: 0, kind: input, shape index: {}]
  %s1 = inlined_call_operand.hbm [shape: bf16[4,1024,1024], index: 1, kind: input, shape index: {}]
  %s2 = inlined_call_operand.hbm [shape: f32[4,1,1024], index: 2, kind: input, shape index: {}]
  %s3 = inlined_call_operand.hbm [shape: bf16[1024,128], index: 3, kind: input, shape index: {}]
  %s4 = inlined_call_operand.hbm [shape: f32[1,128], index: 4, kind: input, shape index: {}]
  %s5 = inlined_call_operand.hbm [shape: f32[16,128], index: 5, kind: output, shape index: {}]
  %s6 = sld [smem:[#allocation0]]
  $region81: #{tpu_custom_call.1} parent=0
    _
  %s8 = ssub.s32 1, %s6
  %s9 = scalar_select 0, %s8, %s6
  $region1: #{tpu_custom_call.1} parent=0
    #allocation3 [shape = 'u8[65536]{0}', space=vmem, size = 0x10000, scoped, tag = 'input window, operand 0, single buffered']
    #allocation4 [shape = 's32[2]{0}', space=sflag, size = 0x8, scoped, tag = 'scoped memory for tpu_custom_call.1']
    #allocation5 [shape = 's32[2]{0}', space=sflag, size = 0x8, scoped, tag = 'scoped memory for tpu_custom_call.1']
    #allocation6 [shape = 'u8[4194304]{0}', space=vmem, size = 0x400000, scoped, tag = 'input window, operand 1']
    #allocation7 [shape = 's32[2]{0}', space=sflag, size = 0x8, scoped, tag = 'scoped memory for tpu_custom_call.1']
    #allocation8 [shape = 'u8[8192]{0}', space=vmem, size = 0x2000, scoped, tag = 'input window, operand 2']
    #allocation9 [shape = 'u8[262144]{0}', space=vmem, size = 0x40000, scoped, tag = 'input window, operand 3, single buffered']
    #allocation10 [shape = 's32[1]{0}', space=sflag, size = 0x4, scoped, tag = 'scoped memory for tpu_custom_call.1']
    #allocation11 [shape = 'u8[512]{0}', space=vmem, size = 0x400, scoped, tag = 'input window, operand 4, single buffered']
    #allocation12 [shape = 'u8[8192]{0}', space=vmem, size = 0x2000, scoped, tag = 'output window, operand 0, single buffered']
    %10 = vsyncpa [#allocation4], 0
    %11 = vsyncpa [#allocation7], 0
    %s12 = scalar_lea.sflag [#allocation7], 1
    %13 = vsyncpa %s12, 0
    %14 = vsyncpa [#allocation10], 0
    %15 = vsyncpa [#allocation5], 0
    loop: start=0, step=1, limit=6
    $region2: #{tpu_custom_call.1} parent=1 // loop_pre_header
      _
    $region3: #{tpu_custom_call.1} parent=1 // loop_header
      %s17 = sphi 0, %s21
      %p18 = scmp.ge.s32.totalorder %s17, 6
      %s24 = sphi 0, %s36
      %s25 = sphi 0, %s32
      %s26 = sphi 0, %s24
      %s27 = sphi 0, %s25
      %s28 = sphi 0, %s26
      %s29 = sphi 0, %s27
      %s39 = sphi 0, %s41
      %s42 = sphi 0, %s39
      %s43 = sphi 0, %s42
      %s59 = sphi 0, %s43
      %s65 = sphi 0, %s67
      %s68 = sphi 0, %s65
      %s69 = sphi 0, %s68
      %s85 = sphi 0, %s69
      %s91 = sphi 0, %s93
      %s94 = sphi 0, %s91
      %s95 = sphi 0, %s94
      %s111 = sphi 0, %s95
      %s115 = sphi 0, %s115
      %s117 = sphi 0, %s115
      %s118 = sphi 0, %s117
      %s132 = sphi 0, %s118
      %s136 = sphi 0, %s136
      %s138 = sphi 0, %s136
      %s139 = sphi 0, %s138
      %s153 = sphi 0, %s139
      %s159 = sphi 0, %s161
      %s162 = sphi 0, %s159
      %s163 = sphi 0, %s162
      %s179 = sphi 0, %s163
    $region4: #{tpu_custom_call.1} parent=1 // loop_header_branch
      %20 = sbr.rel (%p18) target = $region8
    $region5: #{tpu_custom_call.1} parent=1 // loop_body
      %s22 = ssub.s32 %s17, 1
      %s23 = ssub.s32 %s17, 2
      %s30 = sadd.s32 1, %s25
      %p31 = scmp.ge.s32.totalorder %s30, 4
      %s32 = scalar_select %p31, 0, %s30
      %s33 = sadd.s32 1, %s24
      %s34 = scalar_select %p31, %s33, %s24
      %p35 = scmp.ge.s32.totalorder %s34, 1
      %s36 = scalar_select %p35, 0, %s34
      %s37 = ssub.s32 %s24, %s36
      %p38 = scmp.eq.s32.totalorder %s37, 0
      %s40 = sadd.s32 %s39, 1
      %s41 = scalar_select %p38, %s39, %s40
      %p44 = pneg %p38
      %p45 = scmp.eq.s32.totalorder %s17, 3
      %p46 = por %p44, %p45
      %p47 = scmp.ne.s32.totalorder %s39, %s42
      %p48 = scmp.eq.s32.totalorder %s17, 0
      %p49 = por %p47, %p48
      %p50 = scmp.ne.s32.totalorder %s39, %s42
      %p51 = scmp.eq.s32.totalorder %s22, 3
      %p52 = por %p50, %p51
      %p53 = scmp.ne.s32.totalorder %s42, %s43
      %p54 = scmp.eq.s32.totalorder %s22, 0
      %p55 = por %p53, %p54
      %p56 = scmp.ne.s32.totalorder %s42, %s43
      %p57 = scmp.eq.s32.totalorder %s23, 3
      %p58 = por %p56, %p57
      %p60 = scmp.ne.s32.totalorder %s43, %s59
      %p61 = scmp.eq.s32.totalorder %s23, 0
      %p62 = por %p60, %p61
      %s63 = ssub.s32 %s25, %s32
      %p64 = scmp.eq.s32.totalorder %s63, 0
      %s66 = sadd.s32 %s65, 1
      %s67 = scalar_select %p64, %s65, %s66
      %p70 = pneg %p64
      %p71 = scmp.eq.s32.totalorder %s17, 3
      %p72 = por %p70, %p71
      %p73 = scmp.ne.s32.totalorder %s65, %s68
      %p74 = scmp.eq.s32.totalorder %s17, 0
      %p75 = por %p73, %p74
      %p76 = scmp.ne.s32.totalorder %s65, %s68
      %p77 = scmp.eq.s32.totalorder %s22, 3
      %p78 = por %p76, %p77
      %p79 = scmp.ne.s32.totalorder %s68, %s69
      %p80 = scmp.eq.s32.totalorder %s22, 0
      %p81 = por %p79, %p80
      %p82 = scmp.ne.s32.totalorder %s68, %s69
      %p83 = scmp.eq.s32.totalorder %s23, 3
      %p84 = por %p82, %p83
      %p86 = scmp.ne.s32.totalorder %s69, %s85
      %p87 = scmp.eq.s32.totalorder %s23, 0
      %p88 = por %p86, %p87
      %s89 = ssub.s32 %s25, %s32
      %p90 = scmp.eq.s32.totalorder %s89, 0
      %s92 = sadd.s32 %s91, 1
      %s93 = scalar_select %p90, %s91, %s92
      %p96 = pneg %p90
      %p97 = scmp.eq.s32.totalorder %s17, 3
      %p98 = por %p96, %p97
      %p99 = scmp.ne.s32.totalorder %s91, %s94
      %p100 = scmp.eq.s32.totalorder %s17, 0
      %p101 = por %p99, %p100
      %p102 = scmp.ne.s32.totalorder %s91, %s94
      %p103 = scmp.eq.s32.totalorder %s22, 3
      %p104 = por %p102, %p103
      %p105 = scmp.ne.s32.totalorder %s94, %s95
      %p106 = scmp.eq.s32.totalorder %s22, 0
      %p107 = por %p105, %p106
      %p108 = scmp.ne.s32.totalorder %s94, %s95
      %p109 = scmp.eq.s32.totalorder %s23, 3
      %p110 = por %p108, %p109
      %p112 = scmp.ne.s32.totalorder %s95, %s111
      %p113 = scmp.eq.s32.totalorder %s23, 0
      %p114 = por %p112, %p113
      %s116 = sadd.s32 %s115, 1
      %p119 = scmp.eq.s32.totalorder %s17, 3
      %p120 = scmp.ne.s32.totalorder %s115, %s117
      %p121 = scmp.eq.s32.totalorder %s17, 0
      %p122 = por %p120, %p121
      %p123 = scmp.ne.s32.totalorder %s115, %s117
      %p124 = scmp.eq.s32.totalorder %s22, 3
      %p125 = por %p123, %p124
      %p126 = scmp.ne.s32.totalorder %s117, %s118
      %p127 = scmp.eq.s32.totalorder %s22, 0
      %p128 = por %p126, %p127
      %p129 = scmp.ne.s32.totalorder %s117, %s118
      %p130 = scmp.eq.s32.totalorder %s23, 3
      %p131 = por %p129, %p130
      %p133 = scmp.ne.s32.totalorder %s118, %s132
      %p134 = scmp.eq.s32.totalorder %s23, 0
      %p135 = por %p133, %p134
      %s137 = sadd.s32 %s136, 1
      %p140 = scmp.eq.s32.totalorder %s17, 3
      %p141 = scmp.ne.s32.totalorder %s136, %s138
      %p142 = scmp.eq.s32.totalorder %s17, 0
      %p143 = por %p141, %p142
      %p144 = scmp.ne.s32.totalorder %s136, %s138
      %p145 = scmp.eq.s32.totalorder %s22, 3
      %p146 = por %p144, %p145
      %p147 = scmp.ne.s32.totalorder %s138, %s139
      %p148 = scmp.eq.s32.totalorder %s22, 0
      %p149 = por %p147, %p148
      %p150 = scmp.ne.s32.totalorder %s138, %s139
      %p151 = scmp.eq.s32.totalorder %s23, 3
      %p152 = por %p150, %p151
      %p154 = scmp.ne.s32.totalorder %s139, %s153
      %p155 = scmp.eq.s32.totalorder %s23, 0
      %p156 = por %p154, %p155
      %s157 = ssub.s32 %s24, %s36
      %p158 = scmp.eq.s32.totalorder %s157, 0
      %s160 = sadd.s32 %s159, 1
      %s161 = scalar_select %p158, %s159, %s160
      %p164 = pneg %p158
      %p165 = scmp.eq.s32.totalorder %s17, 3
      %p166 = por %p164, %p165
      %p167 = scmp.ne.s32.totalorder %s159, %s162
      %p168 = scmp.eq.s32.totalorder %s17, 0
      %p169 = por %p167, %p168
      %p170 = scmp.ne.s32.totalorder %s159, %s162
      %p171 = scmp.eq.s32.totalorder %s22, 3
      %p172 = por %p170, %p171
      %p173 = scmp.ne.s32.totalorder %s162, %s163
      %p174 = scmp.eq.s32.totalorder %s22, 0
      %p175 = por %p173, %p174
      %p176 = scmp.ne.s32.totalorder %s162, %s163
      %p177 = scmp.eq.s32.totalorder %s23, 3
      %p178 = por %p176, %p177
      %p180 = scmp.ne.s32.totalorder %s163, %s179
      %p181 = scmp.eq.s32.totalorder %s23, 0
      %p182 = por %p180, %p181
      %p183 = scmp.le.s32.totalorder 1, %s17
      %p184 = scmp.lt.s32.totalorder %s17, 5
      %p185 = pnand %p183, %p184
      %p186 = pneg %p185
      // Predicated region
      $region9: #{tpu_custom_call.1} parent=5 // pred_check
        _
      $region10: #{tpu_custom_call.1} parent=5 // pred_check_branch
        %188 = sbr.rel (%p185) target = $region12
      $region11: #{tpu_custom_call.1} parent=5 // pred_region
        %s189 = ssub.s32 %s17, 1
        // Predicated region
        $region13: #{tpu_custom_call.1} parent=11 // pred_check
          %p190 = pneg %p55
        $region14: #{tpu_custom_call.1} parent=11 // pred_check_branch
          %192 = sbr.rel (%p190) target = $region16
        $region15: #{tpu_custom_call.1} parent=11 // pred_region
          %s193 = smul.u32 2, %s26
          %195 = vsyncadd [#allocation4], 0
          %s196 = smul.addr %s193, 8
          %s197 = smul.addr %s196, 8
          %s198 = scalar_lea.hbm %s0, %s197
          %s199 = sshll.u32 %s198, 4
          %s200 = int_to_ptr.hbm [resolvable:$true] %s199
          %s201 = sshll.u32 [#allocation3], 4
          %s202 = int_to_ptr.vmem [resolvable:$true] %s201
          %207 = dma.hbm_to_vmem [thread:$0]  %s200, 2048, %s202, [#allocation4], 1024, 1024, 64
        $region16: #{tpu_custom_call.1} parent=11 // pred_fallthru
          _
        // Predicated region
        $region17: #{tpu_custom_call.1} parent=11 // pred_check
          %p208 = pneg %p128
        $region18: #{tpu_custom_call.1} parent=11 // pred_check_branch
          %210 = sbr.rel (%p208) target = $region20
        $region19: #{tpu_custom_call.1} parent=11 // pred_region
          %212 = vsyncadd [#allocation10], 0
          %s213 = sshll.u32 %s3, 4
          %s214 = int_to_ptr.hbm [resolvable:$true] %s213
          %s215 = sshll.u32 [#allocation9], 4
          %s216 = int_to_ptr.vmem [resolvable:$true] %s215
          %221 = dma.hbm_to_vmem [thread:$0]  %s214, 8192, %s216, [#allocation10], 64, 64, 4
        $region20: #{tpu_custom_call.1} parent=11 // pred_fallthru
          _
        // Predicated region
        $region21: #{tpu_custom_call.1} parent=11 // pred_check
          %p222 = pneg %p149
        $region22: #{tpu_custom_call.1} parent=11 // pred_check_branch
          %224 = sbr.rel (%p222) target = $region24
        $region23: #{tpu_custom_call.1} parent=11 // pred_region
          %226 = vsyncadd [#allocation10], 0
          %s228 = sshll.u32 %s4, 4
          %s229 = int_to_ptr.hbm [resolvable:$true] %s228
          %s230 = sshll.u32 [#allocation11], 4
          %s231 = int_to_ptr.vmem [resolvable:$true] %s230
          %233 = dma.hbm_to_vmem [thread:$0]  %s229, 16, %s231, [#allocation10]
        $region24: #{tpu_custom_call.1} parent=11 // pred_fallthru
          _
      $region12: #{tpu_custom_call.1} parent=5 // pred_fallthru
        _
      %p234 = scmp.lt.s32.totalorder %s17, 4
      // Predicated region
      $region25: #{tpu_custom_call.1} parent=5 // pred_check
        %p235 = pneg %p234
      $region26: #{tpu_custom_call.1} parent=5 // pred_check_branch
        %237 = sbr.rel (%p235) target = $region28
      $region27: #{tpu_custom_call.1} parent=5 // pred_region
        // Predicated region
        $region29: #{tpu_custom_call.1} parent=27 // pred_check
          %p238 = pneg %p75
        $region30: #{tpu_custom_call.1} parent=27 // pred_check_branch
          %240 = sbr.rel (%p238) target = $region32
        $region31: #{tpu_custom_call.1} parent=27 // pred_region
          %s241 = sand.u32 %s17, 1
          %s242 = scalar_lea.sflag [#allocation7], %s241
          %s243 = sand.u32 %s65, 1
          %s244 = smul.addr %s243, 4096
          %s245 = scalar_lea.vmem [#allocation6], %s244
          %247 = vsyncadd %s242, 0
          %s248 = smul.addr %s25, 1024
          %s249 = smul.addr %s248, 4
          %s250 = scalar_lea.hbm %s1, %s249
          %s251 = sshll.u32 %s250, 4
          %s252 = int_to_ptr.hbm [resolvable:$true] %s251
          %s253 = sshll.u32 %s245, 4
          %s254 = int_to_ptr.vmem [resolvable:$true] %s253
          %259 = dma.hbm_to_vmem [thread:$0]  %s252, 65536, %s254, %s242, 512, 512, 32
        $region32: #{tpu_custom_call.1} parent=27 // pred_fallthru
          _
        // Predicated region
        $region33: #{tpu_custom_call.1} parent=27 // pred_check
          %p260 = pneg %p101
        $region34: #{tpu_custom_call.1} parent=27 // pred_check_branch
          %262 = sbr.rel (%p260) target = $region36
        $region35: #{tpu_custom_call.1} parent=27 // pred_region
          %s263 = sand.u32 %s17, 1
          %s264 = scalar_lea.sflag [#allocation7], %s263
          %s265 = sand.u32 %s91, 1
          %s266 = smul.addr %s265, 8
          %s267 = scalar_lea.vmem [#allocation8], %s266
          %269 = vsyncadd %s264, 0
          %s270 = smul.addr %s25, 8
          %s271 = scalar_lea.hbm %s2, %s270
          %s273 = sshll.u32 %s271, 4
          %s274 = int_to_ptr.hbm [resolvable:$true] %s273
          %s275 = sshll.u32 %s267, 4
          %s276 = int_to_ptr.vmem [resolvable:$true] %s275
          %278 = dma.hbm_to_vmem [thread:$0]  %s274, 128, %s276, %s264
        $region36: #{tpu_custom_call.1} parent=27 // pred_fallthru
          _
      $region28: #{tpu_custom_call.1} parent=5 // pred_fallthru
        _
      %p279 = scmp.le.s32.totalorder 1, %s17
      %p280 = scmp.lt.s32.totalorder %s17, 5
      %p281 = pnand %p279, %p280
      %p282 = pneg %p281
      // Predicated region
      $region37: #{tpu_custom_call.1} parent=5 // pred_check
        _
      $region38: #{tpu_custom_call.1} parent=5 // pred_check_branch
        %284 = sbr.rel (%p281) target = $region40
      $region39: #{tpu_custom_call.1} parent=5 // pred_region
        %s285 = ssub.s32 %s17, 1
        // Predicated region
        $region41: #{tpu_custom_call.1} parent=39 // pred_check
          %p286 = pneg %p55
        $region42: #{tpu_custom_call.1} parent=39 // pred_check_branch
          %288 = sbr.rel (%p286) target = $region44
        $region43: #{tpu_custom_call.1} parent=39 // pred_region
          %290 = dma.done [#allocation4], 2048
        $region44: #{tpu_custom_call.1} parent=39 // pred_fallthru
          _
        %s291 = sand.u32 %s22, 1
        %s292 = scalar_lea.sflag [#allocation7], %s291
        %s293 = sand.u32 %s68, 1
        %s294 = smul.addr %s293, 4096
        %s295 = scalar_lea.vmem [#allocation6], %s294
        // Predicated region
        $region45: #{tpu_custom_call.1} parent=39 // pred_check
          %p296 = pneg %p81
        $region46: #{tpu_custom_call.1} parent=39 // pred_check_branch
          %298 = sbr.rel (%p296) target = $region48
        $region47: #{tpu_custom_call.1} parent=39 // pred_region
          %300 = dma.done %s292, 65536
        $region48: #{tpu_custom_call.1} parent=39 // pred_fallthru
          _
        %s301 = sand.u32 %s22, 1
        %s302 = scalar_lea.sflag [#allocation7], %s301
        %s303 = sand.u32 %s94, 1
        %s304 = smul.addr %s303, 8
        %s305 = scalar_lea.vmem [#allocation8], %s304
        // Predicated region
        $region49: #{tpu_custom_call.1} parent=39 // pred_check
          %p306 = pneg %p107
        $region50: #{tpu_custom_call.1} parent=39 // pred_check_branch
          %308 = sbr.rel (%p306) target = $region52
        $region51: #{tpu_custom_call.1} parent=39 // pred_region
          %310 = dma.done %s302, 128
        $region52: #{tpu_custom_call.1} parent=39 // pred_fallthru
          _
        // Predicated region
        $region53: #{tpu_custom_call.1} parent=39 // pred_check
          %p311 = pneg %p128
        $region54: #{tpu_custom_call.1} parent=39 // pred_check_branch
          %313 = sbr.rel (%p311) target = $region56
        $region55: #{tpu_custom_call.1} parent=39 // pred_region
          %315 = dma.done [#allocation10], 8192
        $region56: #{tpu_custom_call.1} parent=39 // pred_fallthru
          _
        // Predicated region
        $region57: #{tpu_custom_call.1} parent=39 // pred_check
          %p316 = pneg %p149
        $region58: #{tpu_custom_call.1} parent=39 // pred_check_branch
          %318 = sbr.rel (%p316) target = $region60
        $region59: #{tpu_custom_call.1} parent=39 // pred_region
          %320 = dma.done [#allocation10], 16
        $region60: #{tpu_custom_call.1} parent=39 // pred_fallthru
          _
        %p321 = pneg %p55
        %p322 = pneg %p52
        %s323 = sand.u32 %s22, 1
        %s324 = scalar_lea.sflag [#allocation7], %s323
        %s325 = sand.u32 %s68, 1
        %s326 = smul.addr %s325, 4096
        %s327 = scalar_lea.vmem [#allocation6], %s326
        %p328 = pneg %p81
        %p329 = pneg %p78
        %s330 = sand.u32 %s22, 1
        %s331 = scalar_lea.sflag [#allocation7], %s330
        %s332 = sand.u32 %s94, 1
        %s333 = smul.addr %s332, 8
        %s334 = scalar_lea.vmem [#allocation8], %s333
        %p335 = pneg %p107
        %p336 = pneg %p104
        %p337 = pneg %p128
        %p338 = pneg %p125
        %p339 = pneg %p149
        %p340 = pneg %p146
        %p341 = pneg %p175
        %p342 = pneg %p172
        %s343 = smul.u32 2, %s26
        %s344 = smul.u32 2, %s26
        %p345 = scmp.eq.s32.totalorder %s27, 0
        // Predicated region
        $region61: #{tpu_custom_call.1} parent=39 // pred_check
          %p346 = pneg %p345
        $region62: #{tpu_custom_call.1} parent=39 // pred_check_branch
          %348 = sbr.rel (%p346) target = $region64
        $region63: #{tpu_custom_call.1} parent=39 // pred_region
          %v349 = vld [vmem:[#allocation3] sm:$0xff]
          %v350 = vld [vmem:[#allocation3 + $0x8] sm:$0xff]
          %v351 = vld [vmem:[#allocation3 + $0x10] sm:$0xff]
          %v352 = vld [vmem:[#allocation3 + $0x18] sm:$0xff]
          %v353 = vld [vmem:[#allocation3 + $0x20] sm:$0xff]
          %v354 = vld [vmem:[#allocation3 + $0x28] sm:$0xff]
          %v355 = vld [vmem:[#allocation3 + $0x30] sm:$0xff]
          %v356 = vld [vmem:[#allocation3 + $0x38] sm:$0xff]
          %v357 = vld [vmem:[#allocation3 + $0x40] sm:$0xff]
          %v358 = vld [vmem:[#allocation3 + $0x48] sm:$0xff]
          %v359 = vld [vmem:[#allocation3 + $0x50] sm:$0xff]
          %v360 = vld [vmem:[#allocation3 + $0x58] sm:$0xff]
          %v361 = vld [vmem:[#allocation3 + $0x60] sm:$0xff]
          %v362 = vld [vmem:[#allocation3 + $0x68] sm:$0xff]
          %v363 = vld [vmem:[#allocation3 + $0x70] sm:$0xff]
          %v364 = vld [vmem:[#allocation3 + $0x78] sm:$0xff]
          %v365 = vpack.c.bf16 %v350, %v349
          %v366 = vpack.c.bf16 %v352, %v351
          %v367 = vpack.c.bf16 %v354, %v353
          %v368 = vpack.c.bf16 %v356, %v355
          %v369 = vpack.c.bf16 %v358, %v357
          %v370 = vpack.c.bf16 %v360, %v359
          %v371 = vpack.c.bf16 %v362, %v361
          %v372 = vpack.c.bf16 %v364, %v363
          %373 = vst [vmem:[#allocation2] sm:$0xff] %v365
          %374 = vst [vmem:[#allocation2 + $0x8] sm:$0xff] %v366
          %375 = vst [vmem:[#allocation2 + $0x10] sm:$0xff] %v367
          %376 = vst [vmem:[#allocation2 + $0x18] sm:$0xff] %v368
          %377 = vst [vmem:[#allocation2 + $0x20] sm:$0xff] %v369
          %378 = vst [vmem:[#allocation2 + $0x28] sm:$0xff] %v370
          %379 = vst [vmem:[#allocation2 + $0x30] sm:$0xff] %v371
          %380 = vst [vmem:[#allocation2 + $0x38] sm:$0xff] %v372
        $region64: #{tpu_custom_call.1} parent=39 // pred_fallthru
          _
        %v381 = vld [vmem:[#allocation2] sm:$0xff]
        %v382 = vld [vmem:[#allocation2 + $0x8] sm:$0xff]
        %v383 = vld [vmem:[#allocation2 + $0x10] sm:$0xff]
        %v384 = vld [vmem:[#allocation2 + $0x18] sm:$0xff]
        %v385 = vld [vmem:[#allocation2 + $0x20] sm:$0xff]
        %v386 = vld [vmem:[#allocation2 + $0x28] sm:$0xff]
        %v387 = vld [vmem:[#allocation2 + $0x30] sm:$0xff]
        %v388 = vld [vmem:[#allocation2 + $0x38] sm:$0xff]
        %v389 = vld [vmem:[%s295] sm:$0xff]
        %v390 = vld [vmem:[%s295 + $0x8] sm:$0xff]
        %v391 = vld [vmem:[%s295 + $0x10] sm:$0xff]
        %v392 = vld [vmem:[%s295 + $0x18] sm:$0xff]
        %v393 = vld [vmem:[%s295 + $0x20] sm:$0xff]
        %v394 = vld [vmem:[%s295 + $0x28] sm:$0xff]
        %v395 = vld [vmem:[%s295 + $0x30] sm:$0xff]
        %v396 = vld [vmem:[%s295 + $0x38] sm:$0xff]
        %v397 = vld [vmem:[%s295 + $0x40] sm:$0xff]
        %v398 = vld [vmem:[%s295 + $0x48] sm:$0xff]
        %v399 = vld [vmem:[%s295 + $0x50] sm:$0xff]
        %v400 = vld [vmem:[%s295 + $0x58] sm:$0xff]
        %v401 = vld [vmem:[%s295 + $0x60] sm:$0xff]
        %v402 = vld [vmem:[%s295 + $0x68] sm:$0xff]
        %v403 = vld [vmem:[%s295 + $0x70] sm:$0xff]
        %v404 = vld [vmem:[%s295 + $0x78] sm:$0xff]
        %v405 = vld [vmem:[%s295 + $0x80] sm:$0xff]
        %v406 = vld [vmem:[%s295 + $0x88] sm:$0xff]
        %v407 = vld [vmem:[%s295 + $0x90] sm:$0xff]
        %v408 = vld [vmem:[%s295 + $0x98] sm:$0xff]
        %v409 = vld [vmem:[%s295 + $0xa0] sm:$0xff]
        %v410 = vld [vmem:[%s295 + $0xa8] sm:$0xff]
        %v411 = vld [vmem:[%s295 + $0xb0] sm:$0xff]
        %v412 = vld [vmem:[%s295 + $0xb8] sm:$0xff]
        %v413 = vld [vmem:[%s295 + $0xc0] sm:$0xff]
        %v414 = vld [vmem:[%s295 + $0xc8] sm:$0xff]
        %v415 = vld [vmem:[%s295 + $0xd0] sm:$0xff]
        %v416 = vld [vmem:[%s295 + $0xd8] sm:$0xff]
        %v417 = vld [vmem:[%s295 + $0xe0] sm:$0xff]
        %v418 = vld [vmem:[%s295 + $0xe8] sm:$0xff]
        %v419 = vld [vmem:[%s295 + $0xf0] sm:$0xff]
        %v420 = vld [vmem:[%s295 + $0xf8] sm:$0xff]
        %v421 = vld [vmem:[%s295 + $0x100] sm:$0xff]
        %v422 = vld [vmem:[%s295 + $0x108] sm:$0xff]
        %v423 = vld [vmem:[%s295 + $0x110] sm:$0xff]
        %v424 = vld [vmem:[%s295 + $0x118] sm:$0xff]
        %v425 = vld [vmem:[%s295 + $0x120] sm:$0xff]
        %v426 = vld [vmem:[%s295 + $0x128] sm:$0xff]
        %v427 = vld [vmem:[%s295 + $0x130] sm:$0xff]
        %v428 = vld [vmem:[%s295 + $0x138] sm:$0xff]
        %v429 = vld [vmem:[%s295 + $0x140] sm:$0xff]
        %v430 = vld [vmem:[%s295 + $0x148] sm:$0xff]
        %v431 = vld [vmem:[%s295 + $0x150] sm:$0xff]
        %v432 = vld [vmem:[%s295 + $0x158] sm:$0xff]
        %v433 = vld [vmem:[%s295 + $0x160] sm:$0xff]
        %v434 = vld [vmem:[%s295 + $0x168] sm:$0xff]
        %v435 = vld [vmem:[%s295 + $0x170] sm:$0xff]
        %v436 = vld [vmem:[%s295 + $0x178] sm:$0xff]
        %v437 = vld [vmem:[%s295 + $0x180] sm:$0xff]
        %v438 = vld [vmem:[%s295 + $0x188] sm:$0xff]
        %v439 = vld [vmem:[%s295 + $0x190] sm:$0xff]
        %v440 = vld [vmem:[%s295 + $0x198] sm:$0xff]
        %v441 = vld [vmem:[%s295 + $0x1a0] sm:$0xff]
        %v442 = vld [vmem:[%s295 + $0x1a8] sm:$0xff]
        %v443 = vld [vmem:[%s295 + $0x1b0] sm:$0xff]
        %v444 = vld [vmem:[%s295 + $0x1b8] sm:$0xff]
        %v445 = vld [vmem:[%s295 + $0x1c0] sm:$0xff]
        %v446 = vld [vmem:[%s295 + $0x1c8] sm:$0xff]
        %v447 = vld [vmem:[%s295 + $0x1d0] sm:$0xff]
        %v448 = vld [vmem:[%s295 + $0x1d8] sm:$0xff]
        %v449 = vld [vmem:[%s295 + $0x1e0] sm:$0xff]
        %v450 = vld [vmem:[%s295 + $0x1e8] sm:$0xff]
        %v451 = vld [vmem:[%s295 + $0x1f0] sm:$0xff]
        %v452 = vld [vmem:[%s295 + $0x1f8] sm:$0xff]
        %v453 = vld [vmem:[%s295 + $0x200] sm:$0xff]
        %v454 = vld [vmem:[%s295 + $0x208] sm:$0xff]
        %v455 = vld [vmem:[%s295 + $0x210] sm:$0xff]
        %v456 = vld [vmem:[%s295 + $0x218] sm:$0xff]
        %v457 = vld [vmem:[%s295 + $0x220] sm:$0xff]
        %v458 = vld [vmem:[%s295 + $0x228] sm:$0xff]
        %v459 = vld [vmem:[%s295 + $0x230] sm:$0xff]
        %v460 = vld [vmem:[%s295 + $0x238] sm:$0xff]
        %v461 = vld [vmem:[%s295 + $0x240] sm:$0xff]
        %v462 = vld [vmem:[%s295 + $0x248] sm:$0xff]
        %v463 = vld [vmem:[%s295 + $0x250] sm:$0xff]
        %v464 = vld [vmem:[%s295 + $0x258] sm:$0xff]
        %v465 = vld [vmem:[%s295 + $0x260] sm:$0xff]
        %v466 = vld [vmem:[%s295 + $0x268] sm:$0xff]
        %v467 = vld [vmem:[%s295 + $0x270] sm:$0xff]
        %v468 = vld [vmem:[%s295 + $0x278] sm:$0xff]
        %v469 = vld [vmem:[%s295 + $0x280] sm:$0xff]
        %v470 = vld [vmem:[%s295 + $0x288] sm:$0xff]
        %v471 = vld [vmem:[%s295 + $0x290] sm:$0xff]
        %v472 = vld [vmem:[%s295 + $0x298] sm:$0xff]
        %v473 = vld [vmem:[%s295 + $0x2a0] sm:$0xff]
        %v474 = vld [vmem:[%s295 + $0x2a8] sm:$0xff]
        %v475 = vld [vmem:[%s295 + $0x2b0] sm:$0xff]
        %v476 = vld [vmem:[%s295 + $0x2b8] sm:$0xff]
        %v477 = vld [vmem:[%s295 + $0x2c0] sm:$0xff]
        %v478 = vld [vmem:[%s295 + $0x2c8] sm:$0xff]
        %v479 = vld [vmem:[%s295 + $0x2d0] sm:$0xff]
        %v480 = vld [vmem:[%s295 + $0x2d8] sm:$0xff]
        %v481 = vld [vmem:[%s295 + $0x2e0] sm:$0xff]
        %v482 = vld [vmem:[%s295 + $0x2e8] sm:$0xff]
        %v483 = vld [vmem:[%s295 + $0x2f0] sm:$0xff]
        %v484 = vld [vmem:[%s295 + $0x2f8] sm:$0xff]
        %v485 = vld [vmem:[%s295 + $0x300] sm:$0xff]
        %v486 = vld [vmem:[%s295 + $0x308] sm:$0xff]
        %v487 = vld [vmem:[%s295 + $0x310] sm:$0xff]
        %v488 = vld [vmem:[%s295 + $0x318] sm:$0xff]
        %v489 = vld [vmem:[%s295 + $0x320] sm:$0xff]
        %v490 = vld [vmem:[%s295 + $0x328] sm:$0xff]
        %v491 = vld [vmem:[%s295 + $0x330] sm:$0xff]
        %v492 = vld [vmem:[%s295 + $0x338] sm:$0xff]
        %v493 = vld [vmem:[%s295 + $0x340] sm:$0xff]
        %v494 = vld [vmem:[%s295 + $0x348] sm:$0xff]
        %v495 = vld [vmem:[%s295 + $0x350] sm:$0xff]
        %v496 = vld [vmem:[%s295 + $0x358] sm:$0xff]
        %v497 = vld [vmem:[%s295 + $0x360] sm:$0xff]
        %v498 = vld [vmem:[%s295 + $0x368] sm:$0xff]
        %v499 = vld [vmem:[%s295 + $0x370] sm:$0xff]
        %v500 = vld [vmem:[%s295 + $0x378] sm:$0xff]
        %v501 = vld [vmem:[%s295 + $0x380] sm:$0xff]
        %v502 = vld [vmem:[%s295 + $0x388] sm:$0xff]
        %v503 = vld [vmem:[%s295 + $0x390] sm:$0xff]
        %v504 = vld [vmem:[%s295 + $0x398] sm:$0xff]
        %v505 = vld [vmem:[%s295 + $0x3a0] sm:$0xff]
        %v506 = vld [vmem:[%s295 + $0x3a8] sm:$0xff]
        %v507 = vld [vmem:[%s295 + $0x3b0] sm:$0xff]
        %v508 = vld [vmem:[%s295 + $0x3b8] sm:$0xff]
        %v509 = vld [vmem:[%s295 + $0x3c0] sm:$0xff]
        %v510 = vld [vmem:[%s295 + $0x3c8] sm:$0xff]
        %v511 = vld [vmem:[%s295 + $0x3d0] sm:$0xff]
        %v512 = vld [vmem:[%s295 + $0x3d8] sm:$0xff]
        %v513 = vld [vmem:[%s295 + $0x3e0] sm:$0xff]
        %v514 = vld [vmem:[%s295 + $0x3e8] sm:$0xff]
        %v515 = vld [vmem:[%s295 + $0x3f0] sm:$0xff]
        %v516 = vld [vmem:[%s295 + $0x3f8] sm:$0xff]
        %v517 = vld [vmem:[%s295 + $0x400] sm:$0xff]
        %v518 = vld [vmem:[%s295 + $0x408] sm:$0xff]
        %v519 = vld [vmem:[%s295 + $0x410] sm:$0xff]
        %v520 = vld [vmem:[%s295 + $0x418] sm:$0xff]
        %v521 = vld [vmem:[%s295 + $0x420] sm:$0xff]
        %v522 = vld [vmem:[%s295 + $0x428] sm:$0xff]
        %v523 = vld [vmem:[%s295 + $0x430] sm:$0xff]
        %v524 = vld [vmem:[%s295 + $0x438] sm:$0xff]
        %v525 = vld [vmem:[%s295 + $0x440] sm:$0xff]
        %v526 = vld [vmem:[%s295 + $0x448] sm:$0xff]
        %v527 = vld [vmem:[%s295 + $0x450] sm:$0xff]
        %v528 = vld [vmem:[%s295 + $0x458] sm:$0xff]
        %v529 = vld [vmem:[%s295 + $0x460] sm:$0xff]
        %v530 = vld [vmem:[%s295 + $0x468] sm:$0xff]
        %v531 = vld [vmem:[%s295 + $0x470] sm:$0xff]
        %v532 = vld [vmem:[%s295 + $0x478] sm:$0xff]
        %v533 = vld [vmem:[%s295 + $0x480] sm:$0xff]
        %v534 = vld [vmem:[%s295 + $0x488] sm:$0xff]
        %v535 = vld [vmem:[%s295 + $0x490] sm:$0xff]
        %v536 = vld [vmem:[%s295 + $0x498] sm:$0xff]
        %v537 = vld [vmem:[%s295 + $0x4a0] sm:$0xff]
        %v538 = vld [vmem:[%s295 + $0x4a8] sm:$0xff]
        %v539 = vld [vmem:[%s295 + $0x4b0] sm:$0xff]
        %v540 = vld [vmem:[%s295 + $0x4b8] sm:$0xff]
        %v541 = vld [vmem:[%s295 + $0x4c0] sm:$0xff]
        %v542 = vld [vmem:[%s295 + $0x4c8] sm:$0xff]
        %v543 = vld [vmem:[%s295 + $0x4d0] sm:$0xff]
        %v544 = vld [vmem:[%s295 + $0x4d8] sm:$0xff]
        %v545 = vld [vmem:[%s295 + $0x4e0] sm:$0xff]
        %v546 = vld [vmem:[%s295 + $0x4e8] sm:$0xff]
        %v547 = vld [vmem:[%s295 + $0x4f0] sm:$0xff]
        %v548 = vld [vmem:[%s295 + $0x4f8] sm:$0xff]
        %v549 = vld [vmem:[%s295 + $0x500] sm:$0xff]
        %v550 = vld [vmem:[%s295 + $0x508] sm:$0xff]
        %v551 = vld [vmem:[%s295 + $0x510] sm:$0xff]
        %v552 = vld [vmem:[%s295 + $0x518] sm:$0xff]
        %v553 = vld [vmem:[%s295 + $0x520] sm:$0xff]
        %v554 = vld [vmem:[%s295 + $0x528] sm:$0xff]
        %v555 = vld [vmem:[%s295 + $0x530] sm:$0xff]
        %v556 = vld [vmem:[%s295 + $0x538] sm:$0xff]
        %v557 = vld [vmem:[%s295 + $0x540] sm:$0xff]
        %v558 = vld [vmem:[%s295 + $0x548] sm:$0xff]
        %v559 = vld [vmem:[%s295 + $0x550] sm:$0xff]
        %v560 = vld [vmem:[%s295 + $0x558] sm:$0xff]
        %v561 = vld [vmem:[%s295 + $0x560] sm:$0xff]
        %v562 = vld [vmem:[%s295 + $0x568] sm:$0xff]
        %v563 = vld [vmem:[%s295 + $0x570] sm:$0xff]
        %v564 = vld [vmem:[%s295 + $0x578] sm:$0xff]
        %v565 = vld [vmem:[%s295 + $0x580] sm:$0xff]
        %v566 = vld [vmem:[%s295 + $0x588] sm:$0xff]
        %v567 = vld [vmem:[%s295 + $0x590] sm:$0xff]
        %v568 = vld [vmem:[%s295 + $0x598] sm:$0xff]
        %v569 = vld [vmem:[%s295 + $0x5a0] sm:$0xff]
        %v570 = vld [vmem:[%s295 + $0x5a8] sm:$0xff]
        %v571 = vld [vmem:[%s295 + $0x5b0] sm:$0xff]
        %v572 = vld [vmem:[%s295 + $0x5b8] sm:$0xff]
        %v573 = vld [vmem:[%s295 + $0x5c0] sm:$0xff]
        %v574 = vld [vmem:[%s295 + $0x5c8] sm:$0xff]
        %v575 = vld [vmem:[%s295 + $0x5d0] sm:$0xff]
        %v576 = vld [vmem:[%s295 + $0x5d8] sm:$0xff]
        %v577 = vld [vmem:[%s295 + $0x5e0] sm:$0xff]
        %v578 = vld [vmem:[%s295 + $0x5e8] sm:$0xff]
        %v579 = vld [vmem:[%s295 + $0x5f0] sm:$0xff]
        %v580 = vld [vmem:[%s295 + $0x5f8] sm:$0xff]
        %v581 = vld [vmem:[%s295 + $0x600] sm:$0xff]
        %v582 = vld [vmem:[%s295 + $0x608] sm:$0xff]
        %v583 = vld [vmem:[%s295 + $0x610] sm:$0xff]
        %v584 = vld [vmem:[%s295 + $0x618] sm:$0xff]
        %v585 = vld [vmem:[%s295 + $0x620] sm:$0xff]
        %v586 = vld [vmem:[%s295 + $0x628] sm:$0xff]
        %v587 = vld [vmem:[%s295 + $0x630] sm:$0xff]
        %v588 = vld [vmem:[%s295 + $0x638] sm:$0xff]
        %v589 = vld [vmem:[%s295 + $0x640] sm:$0xff]
        %v590 = vld [vmem:[%s295 + $0x648] sm:$0xff]
        %v591 = vld [vmem:[%s295 + $0x650] sm:$0xff]
        %v592 = vld [vmem:[%s295 + $0x658] sm:$0xff]
        %v593 = vld [vmem:[%s295 + $0x660] sm:$0xff]
        %v594 = vld [vmem:[%s295 + $0x668] sm:$0xff]
        %v595 = vld [vmem:[%s295 + $0x670] sm:$0xff]
        %v596 = vld [vmem:[%s295 + $0x678] sm:$0xff]
        %v597 = vld [vmem:[%s295 + $0x680] sm:$0xff]
        %v598 = vld [vmem:[%s295 + $0x688] sm:$0xff]
        %v599 = vld [vmem:[%s295 + $0x690] sm:$0xff]
        %v600 = vld [vmem:[%s295 + $0x698] sm:$0xff]
        %v601 = vld [vmem:[%s295 + $0x6a0] sm:$0xff]
        %v602 = vld [vmem:[%s295 + $0x6a8] sm:$0xff]
        %v603 = vld [vmem:[%s295 + $0x6b0] sm:$0xff]
        %v604 = vld [vmem:[%s295 + $0x6b8] sm:$0xff]
        %v605 = vld [vmem:[%s295 + $0x6c0] sm:$0xff]
        %v606 = vld [vmem:[%s295 + $0x6c8] sm:$0xff]
        %v607 = vld [vmem:[%s295 + $0x6d0] sm:$0xff]
        %v608 = vld [vmem:[%s295 + $0x6d8] sm:$0xff]
        %v609 = vld [vmem:[%s295 + $0x6e0] sm:$0xff]
        %v610 = vld [vmem:[%s295 + $0x6e8] sm:$0xff]
        %v611 = vld [vmem:[%s295 + $0x6f0] sm:$0xff]
        %v612 = vld [vmem:[%s295 + $0x6f8] sm:$0xff]
        %v613 = vld [vmem:[%s295 + $0x700] sm:$0xff]
        %v614 = vld [vmem:[%s295 + $0x708] sm:$0xff]
        %v615 = vld [vmem:[%s295 + $0x710] sm:$0xff]
        %v616 = vld [vmem:[%s295 + $0x718] sm:$0xff]
        %v617 = vld [vmem:[%s295 + $0x720] sm:$0xff]
        %v618 = vld [vmem:[%s295 + $0x728] sm:$0xff]
        %v619 = vld [vmem:[%s295 + $0x730] sm:$0xff]
        %v620 = vld [vmem:[%s295 + $0x738] sm:$0xff]
        %v621 = vld [vmem:[%s295 + $0x740] sm:$0xff]
        %v622 = vld [vmem:[%s295 + $0x748] sm:$0xff]
        %v623 = vld [vmem:[%s295 + $0x750] sm:$0xff]
        %v624 = vld [vmem:[%s295 + $0x758] sm:$0xff]
        %v625 = vld [vmem:[%s295 + $0x760] sm:$0xff]
        %v626 = vld [vmem:[%s295 + $0x768] sm:$0xff]
        %v627 = vld [vmem:[%s295 + $0x770] sm:$0xff]
        %v628 = vld [vmem:[%s295 + $0x778] sm:$0xff]
        %v629 = vld [vmem:[%s295 + $0x780] sm:$0xff]
        %v630 = vld [vmem:[%s295 + $0x788] sm:$0xff]
        %v631 = vld [vmem:[%s295 + $0x790] sm:$0xff]
        %v632 = vld [vmem:[%s295 + $0x798] sm:$0xff]
        %v633 = vld [vmem:[%s295 + $0x7a0] sm:$0xff]
        %v634 = vld [vmem:[%s295 + $0x7a8] sm:$0xff]
        %v635 = vld [vmem:[%s295 + $0x7b0] sm:$0xff]
        %v636 = vld [vmem:[%s295 + $0x7b8] sm:$0xff]
        %v637 = vld [vmem:[%s295 + $0x7c0] sm:$0xff]
        %v638 = vld [vmem:[%s295 + $0x7c8] sm:$0xff]
        %v639 = vld [vmem:[%s295 + $0x7d0] sm:$0xff]
        %v640 = vld [vmem:[%s295 + $0x7d8] sm:$0xff]
        %v641 = vld [vmem:[%s295 + $0x7e0] sm:$0xff]
        %v642 = vld [vmem:[%s295 + $0x7e8] sm:$0xff]
        %v643 = vld [vmem:[%s295 + $0x7f0] sm:$0xff]
        %v644 = vld [vmem:[%s295 + $0x7f8] sm:$0xff]
        %v645 = vld [vmem:[%s295 + $0x800] sm:$0xff]
        %v646 = vld [vmem:[%s295 + $0x808] sm:$0xff]
        %v647 = vld [vmem:[%s295 + $0x810] sm:$0xff]
        %v648 = vld [vmem:[%s295 + $0x818] sm:$0xff]
        %v649 = vld [vmem:[%s295 + $0x820] sm:$0xff]
        %v650 = vld [vmem:[%s295 + $0x828] sm:$0xff]
        %v651 = vld [vmem:[%s295 + $0x830] sm:$0xff]
        %v652 = vld [vmem:[%s295 + $0x838] sm:$0xff]
        %v653 = vld [vmem:[%s295 + $0x840] sm:$0xff]
        %v654 = vld [vmem:[%s295 + $0x848] sm:$0xff]
        %v655 = vld [vmem:[%s295 + $0x850] sm:$0xff]
        %v656 = vld [vmem:[%s295 + $0x858] sm:$0xff]
        %v657 = vld [vmem:[%s295 + $0x860] sm:$0xff]
        %v658 = vld [vmem:[%s295 + $0x868] sm:$0xff]
        %v659 = vld [vmem:[%s295 + $0x870] sm:$0xff]
        %v660 = vld [vmem:[%s295 + $0x878] sm:$0xff]
        %v661 = vld [vmem:[%s295 + $0x880] sm:$0xff]
        %v662 = vld [vmem:[%s295 + $0x888] sm:$0xff]
        %v663 = vld [vmem:[%s295 + $0x890] sm:$0xff]
        %v664 = vld [vmem:[%s295 + $0x898] sm:$0xff]
        %v665 = vld [vmem:[%s295 + $0x8a0] sm:$0xff]
        %v666 = vld [vmem:[%s295 + $0x8a8] sm:$0xff]
        %v667 = vld [vmem:[%s295 + $0x8b0] sm:$0xff]
        %v668 = vld [vmem:[%s295 + $0x8b8] sm:$0xff]
        %v669 = vld [vmem:[%s295 + $0x8c0] sm:$0xff]
        %v670 = vld [vmem:[%s295 + $0x8c8] sm:$0xff]
        %v671 = vld [vmem:[%s295 + $0x8d0] sm:$0xff]
        %v672 = vld [vmem:[%s295 + $0x8d8] sm:$0xff]
        %v673 = vld [vmem:[%s295 + $0x8e0] sm:$0xff]
        %v674 = vld [vmem:[%s295 + $0x8e8] sm:$0xff]
        %v675 = vld [vmem:[%s295 + $0x8f0] sm:$0xff]
        %v676 = vld [vmem:[%s295 + $0x8f8] sm:$0xff]
        %v677 = vld [vmem:[%s295 + $0x900] sm:$0xff]
        %v678 = vld [vmem:[%s295 + $0x908] sm:$0xff]
        %v679 = vld [vmem:[%s295 + $0x910] sm:$0xff]
        %v680 = vld [vmem:[%s295 + $0x918] sm:$0xff]
        %v681 = vld [vmem:[%s295 + $0x920] sm:$0xff]
        %v682 = vld [vmem:[%s295 + $0x928] sm:$0xff]
        %v683 = vld [vmem:[%s295 + $0x930] sm:$0xff]
        %v684 = vld [vmem:[%s295 + $0x938] sm:$0xff]
        %v685 = vld [vmem:[%s295 + $0x940] sm:$0xff]
        %v686 = vld [vmem:[%s295 + $0x948] sm:$0xff]
        %v687 = vld [vmem:[%s295 + $0x950] sm:$0xff]
        %v688 = vld [vmem:[%s295 + $0x958] sm:$0xff]
        %v689 = vld [vmem:[%s295 + $0x960] sm:$0xff]
        %v690 = vld [vmem:[%s295 + $0x968] sm:$0xff]
        %v691 = vld [vmem:[%s295 + $0x970] sm:$0xff]
        %v692 = vld [vmem:[%s295 + $0x978] sm:$0xff]
        %v693 = vld [vmem:[%s295 + $0x980] sm:$0xff]
        %v694 = vld [vmem:[%s295 + $0x988] sm:$0xff]
        %v695 = vld [vmem:[%s295 + $0x990] sm:$0xff]
        %v696 = vld [vmem:[%s295 + $0x998] sm:$0xff]
        %v697 = vld [vmem:[%s295 + $0x9a0] sm:$0xff]
        %v698 = vld [vmem:[%s295 + $0x9a8] sm:$0xff]
        %v699 = vld [vmem:[%s295 + $0x9b0] sm:$0xff]
        %v700 = vld [vmem:[%s295 + $0x9b8] sm:$0xff]
        %v701 = vld [vmem:[%s295 + $0x9c0] sm:$0xff]
        %v702 = vld [vmem:[%s295 + $0x9c8] sm:$0xff]
        %v703 = vld [vmem:[%s295 + $0x9d0] sm:$0xff]
        %v704 = vld [vmem:[%s295 + $0x9d8] sm:$0xff]
        %v705 = vld [vmem:[%s295 + $0x9e0] sm:$0xff]
        %v706 = vld [vmem:[%s295 + $0x9e8] sm:$0xff]
        %v707 = vld [vmem:[%s295 + $0x9f0] sm:$0xff]
        %v708 = vld [vmem:[%s295 + $0x9f8] sm:$0xff]
        %v709 = vld [vmem:[%s295 + $0xa00] sm:$0xff]
        %v710 = vld [vmem:[%s295 + $0xa08] sm:$0xff]
        %v711 = vld [vmem:[%s295 + $0xa10] sm:$0xff]
        %v712 = vld [vmem:[%s295 + $0xa18] sm:$0xff]
        %v713 = vld [vmem:[%s295 + $0xa20] sm:$0xff]
        %v714 = vld [vmem:[%s295 + $0xa28] sm:$0xff]
        %v715 = vld [vmem:[%s295 + $0xa30] sm:$0xff]
        %v716 = vld [vmem:[%s295 + $0xa38] sm:$0xff]
        %v717 = vld [vmem:[%s295 + $0xa40] sm:$0xff]
        %v718 = vld [vmem:[%s295 + $0xa48] sm:$0xff]
        %v719 = vld [vmem:[%s295 + $0xa50] sm:$0xff]
        %v720 = vld [vmem:[%s295 + $0xa58] sm:$0xff]
        %v721 = vld [vmem:[%s295 + $0xa60] sm:$0xff]
        %v722 = vld [vmem:[%s295 + $0xa68] sm:$0xff]
        %v723 = vld [vmem:[%s295 + $0xa70] sm:$0xff]
        %v724 = vld [vmem:[%s295 + $0xa78] sm:$0xff]
        %v725 = vld [vmem:[%s295 + $0xa80] sm:$0xff]
        %v726 = vld [vmem:[%s295 + $0xa88] sm:$0xff]
        %v727 = vld [vmem:[%s295 + $0xa90] sm:$0xff]
        %v728 = vld [vmem:[%s295 + $0xa98] sm:$0xff]
        %v729 = vld [vmem:[%s295 + $0xaa0] sm:$0xff]
        %v730 = vld [vmem:[%s295 + $0xaa8] sm:$0xff]
        %v731 = vld [vmem:[%s295 + $0xab0] sm:$0xff]
        %v732 = vld [vmem:[%s295 + $0xab8] sm:$0xff]
        %v733 = vld [vmem:[%s295 + $0xac0] sm:$0xff]
        %v734 = vld [vmem:[%s295 + $0xac8] sm:$0xff]
        %v735 = vld [vmem:[%s295 + $0xad0] sm:$0xff]
        %v736 = vld [vmem:[%s295 + $0xad8] sm:$0xff]
        %v737 = vld [vmem:[%s295 + $0xae0] sm:$0xff]
        %v738 = vld [vmem:[%s295 + $0xae8] sm:$0xff]
        %v739 = vld [vmem:[%s295 + $0xaf0] sm:$0xff]
        %v740 = vld [vmem:[%s295 + $0xaf8] sm:$0xff]
        %v741 = vld [vmem:[%s295 + $0xb00] sm:$0xff]
        %v742 = vld [vmem:[%s295 + $0xb08] sm:$0xff]
        %v743 = vld [vmem:[%s295 + $0xb10] sm:$0xff]
        %v744 = vld [vmem:[%s295 + $0xb18] sm:$0xff]
        %v745 = vld [vmem:[%s295 + $0xb20] sm:$0xff]
        %v746 = vld [vmem:[%s295 + $0xb28] sm:$0xff]
        %v747 = vld [vmem:[%s295 + $0xb30] sm:$0xff]
        %v748 = vld [vmem:[%s295 + $0xb38] sm:$0xff]
        %v749 = vld [vmem:[%s295 + $0xb40] sm:$0xff]
        %v750 = vld [vmem:[%s295 + $0xb48] sm:$0xff]
        %v751 = vld [vmem:[%s295 + $0xb50] sm:$0xff]
        %v752 = vld [vmem:[%s295 + $0xb58] sm:$0xff]
        %v753 = vld [vmem:[%s295 + $0xb60] sm:$0xff]
        %v754 = vld [vmem:[%s295 + $0xb68] sm:$0xff]
        %v755 = vld [vmem:[%s295 + $0xb70] sm:$0xff]
        %v756 = vld [vmem:[%s295 + $0xb78] sm:$0xff]
        %v757 = vld [vmem:[%s295 + $0xb80] sm:$0xff]
        %v758 = vld [vmem:[%s295 + $0xb88] sm:$0xff]
        %v759 = vld [vmem:[%s295 + $0xb90] sm:$0xff]
        %v760 = vld [vmem:[%s295 + $0xb98] sm:$0xff]
        %v761 = vld [vmem:[%s295 + $0xba0] sm:$0xff]
        %v762 = vld [vmem:[%s295 + $0xba8] sm:$0xff]
        %v763 = vld [vmem:[%s295 + $0xbb0] sm:$0xff]
        %v764 = vld [vmem:[%s295 + $0xbb8] sm:$0xff]
        %v765 = vld [vmem:[%s295 + $0xbc0] sm:$0xff]
        %v766 = vld [vmem:[%s295 + $0xbc8] sm:$0xff]
        %v767 = vld [vmem:[%s295 + $0xbd0] sm:$0xff]
        %v768 = vld [vmem:[%s295 + $0xbd8] sm:$0xff]
        %v769 = vld [vmem:[%s295 + $0xbe0] sm:$0xff]
        %v770 = vld [vmem:[%s295 + $0xbe8] sm:$0xff]
        %v771 = vld [vmem:[%s295 + $0xbf0] sm:$0xff]
        %v772 = vld [vmem:[%s295 + $0xbf8] sm:$0xff]
        %v773 = vld [vmem:[%s295 + $0xc00] sm:$0xff]
        %v774 = vld [vmem:[%s295 + $0xc08] sm:$0xff]
        %v775 = vld [vmem:[%s295 + $0xc10] sm:$0xff]
        %v776 = vld [vmem:[%s295 + $0xc18] sm:$0xff]
        %v777 = vld [vmem:[%s295 + $0xc20] sm:$0xff]
        %v778 = vld [vmem:[%s295 + $0xc28] sm:$0xff]
        %v779 = vld [vmem:[%s295 + $0xc30] sm:$0xff]
        %v780 = vld [vmem:[%s295 + $0xc38] sm:$0xff]
        %v781 = vld [vmem:[%s295 + $0xc40] sm:$0xff]
        %v782 = vld [vmem:[%s295 + $0xc48] sm:$0xff]
        %v783 = vld [vmem:[%s295 + $0xc50] sm:$0xff]
        %v784 = vld [vmem:[%s295 + $0xc58] sm:$0xff]
        %v785 = vld [vmem:[%s295 + $0xc60] sm:$0xff]
        %v786 = vld [vmem:[%s295 + $0xc68] sm:$0xff]
        %v787 = vld [vmem:[%s295 + $0xc70] sm:$0xff]
        %v788 = vld [vmem:[%s295 + $0xc78] sm:$0xff]
        %v789 = vld [vmem:[%s295 + $0xc80] sm:$0xff]
        %v790 = vld [vmem:[%s295 + $0xc88] sm:$0xff]
        %v791 = vld [vmem:[%s295 + $0xc90] sm:$0xff]
        %v792 = vld [vmem:[%s295 + $0xc98] sm:$0xff]
        %v793 = vld [vmem:[%s295 + $0xca0] sm:$0xff]
        %v794 = vld [vmem:[%s295 + $0xca8] sm:$0xff]
        %v795 = vld [vmem:[%s295 + $0xcb0] sm:$0xff]
        %v796 = vld [vmem:[%s295 + $0xcb8] sm:$0xff]
        %v797 = vld [vmem:[%s295 + $0xcc0] sm:$0xff]
        %v798 = vld [vmem:[%s295 + $0xcc8] sm:$0xff]
        %v799 = vld [vmem:[%s295 + $0xcd0] sm:$0xff]
        %v800 = vld [vmem:[%s295 + $0xcd8] sm:$0xff]
        %v801 = vld [vmem:[%s295 + $0xce0] sm:$0xff]
        %v802 = vld [vmem:[%s295 + $0xce8] sm:$0xff]
        %v803 = vld [vmem:[%s295 + $0xcf0] sm:$0xff]
        %v804 = vld [vmem:[%s295 + $0xcf8] sm:$0xff]
        %v805 = vld [vmem:[%s295 + $0xd00] sm:$0xff]
        %v806 = vld [vmem:[%s295 + $0xd08] sm:$0xff]
        %v807 = vld [vmem:[%s295 + $0xd10] sm:$0xff]
        %v808 = vld [vmem:[%s295 + $0xd18] sm:$0xff]
        %v809 = vld [vmem:[%s295 + $0xd20] sm:$0xff]
        %v810 = vld [vmem:[%s295 + $0xd28] sm:$0xff]
        %v811 = vld [vmem:[%s295 + $0xd30] sm:$0xff]
        %v812 = vld [vmem:[%s295 + $0xd38] sm:$0xff]
        %v813 = vld [vmem:[%s295 + $0xd40] sm:$0xff]
        %v814 = vld [vmem:[%s295 + $0xd48] sm:$0xff]
        %v815 = vld [vmem:[%s295 + $0xd50] sm:$0xff]
        %v816 = vld [vmem:[%s295 + $0xd58] sm:$0xff]
        %v817 = vld [vmem:[%s295 + $0xd60] sm:$0xff]
        %v818 = vld [vmem:[%s295 + $0xd68] sm:$0xff]
        %v819 = vld [vmem:[%s295 + $0xd70] sm:$0xff]
        %v820 = vld [vmem:[%s295 + $0xd78] sm:$0xff]
        %v821 = vld [vmem:[%s295 + $0xd80] sm:$0xff]
        %v822 = vld [vmem:[%s295 + $0xd88] sm:$0xff]
        %v823 = vld [vmem:[%s295 + $0xd90] sm:$0xff]
        %v824 = vld [vmem:[%s295 + $0xd98] sm:$0xff]
        %v825 = vld [vmem:[%s295 + $0xda0] sm:$0xff]
        %v826 = vld [vmem:[%s295 + $0xda8] sm:$0xff]
        %v827 = vld [vmem:[%s295 + $0xdb0] sm:$0xff]
        %v828 = vld [vmem:[%s295 + $0xdb8] sm:$0xff]
        %v829 = vld [vmem:[%s295 + $0xdc0] sm:$0xff]
        %v830 = vld [vmem:[%s295 + $0xdc8] sm:$0xff]
        %v831 = vld [vmem:[%s295 + $0xdd0] sm:$0xff]
        %v832 = vld [vmem:[%s295 + $0xdd8] sm:$0xff]
        %v833 = vld [vmem:[%s295 + $0xde0] sm:$0xff]
        %v834 = vld [vmem:[%s295 + $0xde8] sm:$0xff]
        %v835 = vld [vmem:[%s295 + $0xdf0] sm:$0xff]
        %v836 = vld [vmem:[%s295 + $0xdf8] sm:$0xff]
        %v837 = vld [vmem:[%s295 + $0xe00] sm:$0xff]
        %v838 = vld [vmem:[%s295 + $0xe08] sm:$0xff]
        %v839 = vld [vmem:[%s295 + $0xe10] sm:$0xff]
        %v840 = vld [vmem:[%s295 + $0xe18] sm:$0xff]
        %v841 = vld [vmem:[%s295 + $0xe20] sm:$0xff]
        %v842 = vld [vmem:[%s295 + $0xe28] sm:$0xff]
        %v843 = vld [vmem:[%s295 + $0xe30] sm:$0xff]
        %v844 = vld [vmem:[%s295 + $0xe38] sm:$0xff]
        %v845 = vld [vmem:[%s295 + $0xe40] sm:$0xff]
        %v846 = vld [vmem:[%s295 + $0xe48] sm:$0xff]
        %v847 = vld [vmem:[%s295 + $0xe50] sm:$0xff]
        %v848 = vld [vmem:[%s295 + $0xe58] sm:$0xff]
        %v849 = vld [vmem:[%s295 + $0xe60] sm:$0xff]
        %v850 = vld [vmem:[%s295 + $0xe68] sm:$0xff]
        %v851 = vld [vmem:[%s295 + $0xe70] sm:$0xff]
        %v852 = vld [vmem:[%s295 + $0xe78] sm:$0xff]
        %v853 = vld [vmem:[%s295 + $0xe80] sm:$0xff]
        %v854 = vld [vmem:[%s295 + $0xe88] sm:$0xff]
        %v855 = vld [vmem:[%s295 + $0xe90] sm:$0xff]
        %v856 = vld [vmem:[%s295 + $0xe98] sm:$0xff]
        %v857 = vld [vmem:[%s295 + $0xea0] sm:$0xff]
        %v858 = vld [vmem:[%s295 + $0xea8] sm:$0xff]
        %v859 = vld [vmem:[%s295 + $0xeb0] sm:$0xff]
        %v860 = vld [vmem:[%s295 + $0xeb8] sm:$0xff]
        %v861 = vld [vmem:[%s295 + $0xec0] sm:$0xff]
        %v862 = vld [vmem:[%s295 + $0xec8] sm:$0xff]
        %v863 = vld [vmem:[%s295 + $0xed0] sm:$0xff]
        %v864 = vld [vmem:[%s295 + $0xed8] sm:$0xff]
        %v865 = vld [vmem:[%s295 + $0xee0] sm:$0xff]
        %v866 = vld [vmem:[%s295 + $0xee8] sm:$0xff]
        %v867 = vld [vmem:[%s295 + $0xef0] sm:$0xff]
        %v868 = vld [vmem:[%s295 + $0xef8] sm:$0xff]
        %v869 = vld [vmem:[%s295 + $0xf00] sm:$0xff]
        %v870 = vld [vmem:[%s295 + $0xf08] sm:$0xff]
        %v871 = vld [vmem:[%s295 + $0xf10] sm:$0xff]
        %v872 = vld [vmem:[%s295 + $0xf18] sm:$0xff]
        %v873 = vld [vmem:[%s295 + $0xf20] sm:$0xff]
        %v874 = vld [vmem:[%s295 + $0xf28] sm:$0xff]
        %v875 = vld [vmem:[%s295 + $0xf30] sm:$0xff]
        %v876 = vld [vmem:[%s295 + $0xf38] sm:$0xff]
        %v877 = vld [vmem:[%s295 + $0xf40] sm:$0xff]
        %v878 = vld [vmem:[%s295 + $0xf48] sm:$0xff]
        %v879 = vld [vmem:[%s295 + $0xf50] sm:$0xff]
        %v880 = vld [vmem:[%s295 + $0xf58] sm:$0xff]
        %v881 = vld [vmem:[%s295 + $0xf60] sm:$0xff]
        %v882 = vld [vmem:[%s295 + $0xf68] sm:$0xff]
        %v883 = vld [vmem:[%s295 + $0xf70] sm:$0xff]
        %v884 = vld [vmem:[%s295 + $0xf78] sm:$0xff]
        %v885 = vld [vmem:[%s295 + $0xf80] sm:$0xff]
        %v886 = vld [vmem:[%s295 + $0xf88] sm:$0xff]
        %v887 = vld [vmem:[%s295 + $0xf90] sm:$0xff]
        %v888 = vld [vmem:[%s295 + $0xf98] sm:$0xff]
        %v889 = vld [vmem:[%s295 + $0xfa0] sm:$0xff]
        %v890 = vld [vmem:[%s295 + $0xfa8] sm:$0xff]
        %v891 = vld [vmem:[%s295 + $0xfb0] sm:$0xff]
        %v892 = vld [vmem:[%s295 + $0xfb8] sm:$0xff]
        %v893 = vld [vmem:[%s295 + $0xfc0] sm:$0xff]
        %v894 = vld [vmem:[%s295 + $0xfc8] sm:$0xff]
        %v895 = vld [vmem:[%s295 + $0xfd0] sm:$0xff]
        %v896 = vld [vmem:[%s295 + $0xfd8] sm:$0xff]
        %v897 = vld [vmem:[%s295 + $0xfe0] sm:$0xff]
        %v898 = vld [vmem:[%s295 + $0xfe8] sm:$0xff]
        %v899 = vld [vmem:[%s295 + $0xff0] sm:$0xff]
        %v900 = vld [vmem:[%s295 + $0xff8] sm:$0xff]
        %v901 = vld [vmem:[%s305] sm:$0xff]
        %v903 = vperm.slane %v901, 0
        %v904 = vperm.slane %v901, 1
        %v905 = vperm.slane %v901, 2
        %v906 = vperm.slane %v901, 3
        %v907 = vperm.slane %v901, 4
        %v908 = vperm.slane %v901, 5
        %v909 = vperm.slane %v901, 6
        %v910 = vperm.slane %v901, 7
        %v927 = vunpack.c.l.b16 %v381
        %v928 = vunpack.c.h.b16 %v381
        %v929 = vunpack.c.l.b16 %v382
        %v930 = vunpack.c.h.b16 %v382
        %v931 = vunpack.c.l.b16 %v383
        %v932 = vunpack.c.h.b16 %v383
        %v933 = vunpack.c.l.b16 %v384
        %v934 = vunpack.c.h.b16 %v384
        %v935 = vunpack.c.l.b16 %v385
        %v936 = vunpack.c.h.b16 %v385
        %v937 = vunpack.c.l.b16 %v386
        %v938 = vunpack.c.h.b16 %v386
        %v939 = vunpack.c.l.b16 %v387
        %v940 = vunpack.c.h.b16 %v387
        %v941 = vunpack.c.l.b16 %v388
        %v942 = vunpack.c.h.b16 %v388
        %v943 = vpack.c.b16 %v935, %v927
        %v944 = vpack.c.b16 %v936, %v928
        %v945 = vpack.c.b16 %v937, %v929
        %v946 = vpack.c.b16 %v938, %v930
        %v947 = vpack.c.b16 %v939, %v931
        %v948 = vpack.c.b16 %v940, %v932
        %v949 = vpack.c.b16 %v941, %v933
        %v950 = vpack.c.b16 %v942, %v934
        %v1471 = vunpack.c.l.b16 %v389
        %v1472 = vunpack.c.h.b16 %v389
        %v1473 = vunpack.c.l.b16 %v390
        %v1474 = vunpack.c.h.b16 %v390
        %v1475 = vunpack.c.l.b16 %v391
        %v1476 = vunpack.c.h.b16 %v391
        %v1477 = vunpack.c.l.b16 %v392
        %v1478 = vunpack.c.h.b16 %v392
        %v1479 = vunpack.c.l.b16 %v393
        %v1480 = vunpack.c.h.b16 %v393
        %v1481 = vunpack.c.l.b16 %v394
        %v1482 = vunpack.c.h.b16 %v394
        %v1483 = vunpack.c.l.b16 %v395
        %v1484 = vunpack.c.h.b16 %v395
        %v1485 = vunpack.c.l.b16 %v396
        %v1486 = vunpack.c.h.b16 %v396
        %v1487 = vunpack.c.l.b16 %v397
        %v1488 = vunpack.c.h.b16 %v397
        %v1489 = vunpack.c.l.b16 %v398
        %v1490 = vunpack.c.h.b16 %v398
        %v1491 = vunpack.c.l.b16 %v399
        %v1492 = vunpack.c.h.b16 %v399
        %v1493 = vunpack.c.l.b16 %v400
        %v1494 = vunpack.c.h.b16 %v400
        %v1495 = vunpack.c.l.b16 %v401
        %v1496 = vunpack.c.h.b16 %v401
        %v1497 = vunpack.c.l.b16 %v402
        %v1498 = vunpack.c.h.b16 %v402
        %v1499 = vunpack.c.l.b16 %v403
        %v1500 = vunpack.c.h.b16 %v403
        %v1501 = vunpack.c.l.b16 %v404
        %v1502 = vunpack.c.h.b16 %v404
        %v1503 = vunpack.c.l.b16 %v405
        %v1504 = vunpack.c.h.b16 %v405
        %v1505 = vunpack.c.l.b16 %v406
        %v1506 = vunpack.c.h.b16 %v406
        %v1507 = vunpack.c.l.b16 %v407
        %v1508 = vunpack.c.h.b16 %v407
        %v1509 = vunpack.c.l.b16 %v408
        %v1510 = vunpack.c.h.b16 %v408
        %v1511 = vunpack.c.l.b16 %v409
        %v1512 = vunpack.c.h.b16 %v409
        %v1513 = vunpack.c.l.b16 %v410
        %v1514 = vunpack.c.h.b16 %v410
        %v1515 = vunpack.c.l.b16 %v411
        %v1516 = vunpack.c.h.b16 %v411
        %v1517 = vunpack.c.l.b16 %v412
        %v1518 = vunpack.c.h.b16 %v412
        %v1519 = vunpack.c.l.b16 %v413
        %v1520 = vunpack.c.h.b16 %v413
        %v1521 = vunpack.c.l.b16 %v414
        %v1522 = vunpack.c.h.b16 %v414
        %v1523 = vunpack.c.l.b16 %v415
        %v1524 = vunpack.c.h.b16 %v415
        %v1525 = vunpack.c.l.b16 %v416
        %v1526 = vunpack.c.h.b16 %v416
        %v1527 = vunpack.c.l.b16 %v417
        %v1528 = vunpack.c.h.b16 %v417
        %v1529 = vunpack.c.l.b16 %v418
        %v1530 = vunpack.c.h.b16 %v418
        %v1531 = vunpack.c.l.b16 %v419
        %v1532 = vunpack.c.h.b16 %v419
        %v1533 = vunpack.c.l.b16 %v420
        %v1534 = vunpack.c.h.b16 %v420
        %v1535 = vunpack.c.l.b16 %v421
        %v1536 = vunpack.c.h.b16 %v421
        %v1537 = vunpack.c.l.b16 %v422
        %v1538 = vunpack.c.h.b16 %v422
        %v1539 = vunpack.c.l.b16 %v423
        %v1540 = vunpack.c.h.b16 %v423
        %v1541 = vunpack.c.l.b16 %v424
        %v1542 = vunpack.c.h.b16 %v424
        %v1543 = vunpack.c.l.b16 %v425
        %v1544 = vunpack.c.h.b16 %v425
        %v1545 = vunpack.c.l.b16 %v426
        %v1546 = vunpack.c.h.b16 %v426
        %v1547 = vunpack.c.l.b16 %v427
        %v1548 = vunpack.c.h.b16 %v427
        %v1549 = vunpack.c.l.b16 %v428
        %v1550 = vunpack.c.h.b16 %v428
        %v1551 = vunpack.c.l.b16 %v429
        %v1552 = vunpack.c.h.b16 %v429
        %v1553 = vunpack.c.l.b16 %v430
        %v1554 = vunpack.c.h.b16 %v430
        %v1555 = vunpack.c.l.b16 %v431
        %v1556 = vunpack.c.h.b16 %v431
        %v1557 = vunpack.c.l.b16 %v432
        %v1558 = vunpack.c.h.b16 %v432
        %v1559 = vunpack.c.l.b16 %v433
        %v1560 = vunpack.c.h.b16 %v433
        %v1561 = vunpack.c.l.b16 %v434
        %v1562 = vunpack.c.h.b16 %v434
        %v1563 = vunpack.c.l.b16 %v435
        %v1564 = vunpack.c.h.b16 %v435
        %v1565 = vunpack.c.l.b16 %v436
        %v1566 = vunpack.c.h.b16 %v436
        %v1567 = vunpack.c.l.b16 %v437
        %v1568 = vunpack.c.h.b16 %v437
        %v1569 = vunpack.c.l.b16 %v438
        %v1570 = vunpack.c.h.b16 %v438
        %v1571 = vunpack.c.l.b16 %v439
        %v1572 = vunpack.c.h.b16 %v439
        %v1573 = vunpack.c.l.b16 %v440
        %v1574 = vunpack.c.h.b16 %v440
        %v1575 = vunpack.c.l.b16 %v441
        %v1576 = vunpack.c.h.b16 %v441
        %v1577 = vunpack.c.l.b16 %v442
        %v1578 = vunpack.c.h.b16 %v442
        %v1579 = vunpack.c.l.b16 %v443
        %v1580 = vunpack.c.h.b16 %v443
        %v1581 = vunpack.c.l.b16 %v444
        %v1582 = vunpack.c.h.b16 %v444
        %v1583 = vunpack.c.l.b16 %v445
        %v1584 = vunpack.c.h.b16 %v445
        %v1585 = vunpack.c.l.b16 %v446
        %v1586 = vunpack.c.h.b16 %v446
        %v1587 = vunpack.c.l.b16 %v447
        %v1588 = vunpack.c.h.b16 %v447
        %v1589 = vunpack.c.l.b16 %v448
        %v1590 = vunpack.c.h.b16 %v448
        %v1591 = vunpack.c.l.b16 %v449
        %v1592 = vunpack.c.h.b16 %v449
        %v1593 = vunpack.c.l.b16 %v450
        %v1594 = vunpack.c.h.b16 %v450
        %v1595 = vunpack.c.l.b16 %v451
        %v1596 = vunpack.c.h.b16 %v451
        %v1597 = vunpack.c.l.b16 %v452
        %v1598 = vunpack.c.h.b16 %v452
        %v1599 = vunpack.c.l.b16 %v453
        %v1600 = vunpack.c.h.b16 %v453
        %v1601 = vunpack.c.l.b16 %v454
        %v1602 = vunpack.c.h.b16 %v454
        %v1603 = vunpack.c.l.b16 %v455
        %v1604 = vunpack.c.h.b16 %v455
        %v1605 = vunpack.c.l.b16 %v456
        %v1606 = vunpack.c.h.b16 %v456
        %v1607 = vunpack.c.l.b16 %v457
        %v1608 = vunpack.c.h.b16 %v457
        %v1609 = vunpack.c.l.b16 %v458
        %v1610 = vunpack.c.h.b16 %v458
        %v1611 = vunpack.c.l.b16 %v459
        %v1612 = vunpack.c.h.b16 %v459
        %v1613 = vunpack.c.l.b16 %v460
        %v1614 = vunpack.c.h.b16 %v460
        %v1615 = vunpack.c.l.b16 %v461
        %v1616 = vunpack.c.h.b16 %v461
        %v1617 = vunpack.c.l.b16 %v462
        %v1618 = vunpack.c.h.b16 %v462
        %v1619 = vunpack.c.l.b16 %v463
        %v1620 = vunpack.c.h.b16 %v463
        %v1621 = vunpack.c.l.b16 %v464
        %v1622 = vunpack.c.h.b16 %v464
        %v1623 = vunpack.c.l.b16 %v465
        %v1624 = vunpack.c.h.b16 %v465
        %v1625 = vunpack.c.l.b16 %v466
        %v1626 = vunpack.c.h.b16 %v466
        %v1627 = vunpack.c.l.b16 %v467
        %v1628 = vunpack.c.h.b16 %v467
        %v1629 = vunpack.c.l.b16 %v468
        %v1630 = vunpack.c.h.b16 %v468
        %v1631 = vunpack.c.l.b16 %v469
        %v1632 = vunpack.c.h.b16 %v469
        %v1633 = vunpack.c.l.b16 %v470
        %v1634 = vunpack.c.h.b16 %v470
        %v1635 = vunpack.c.l.b16 %v471
        %v1636 = vunpack.c.h.b16 %v471
        %v1637 = vunpack.c.l.b16 %v472
        %v1638 = vunpack.c.h.b16 %v472
        %v1639 = vunpack.c.l.b16 %v473
        %v1640 = vunpack.c.h.b16 %v473
        %v1641 = vunpack.c.l.b16 %v474
        %v1642 = vunpack.c.h.b16 %v474
        %v1643 = vunpack.c.l.b16 %v475
        %v1644 = vunpack.c.h.b16 %v475
        %v1645 = vunpack.c.l.b16 %v476
        %v1646 = vunpack.c.h.b16 %v476
        %v1647 = vunpack.c.l.b16 %v477
        %v1648 = vunpack.c.h.b16 %v477
        %v1649 = vunpack.c.l.b16 %v478
        %v1650 = vunpack.c.h.b16 %v478
        %v1651 = vunpack.c.l.b16 %v479
        %v1652 = vunpack.c.h.b16 %v479
        %v1653 = vunpack.c.l.b16 %v480
        %v1654 = vunpack.c.h.b16 %v480
        %v1655 = vunpack.c.l.b16 %v481
        %v1656 = vunpack.c.h.b16 %v481
        %v1657 = vunpack.c.l.b16 %v482
        %v1658 = vunpack.c.h.b16 %v482
        %v1659 = vunpack.c.l.b16 %v483
        %v1660 = vunpack.c.h.b16 %v483
        %v1661 = vunpack.c.l.b16 %v484
        %v1662 = vunpack.c.h.b16 %v484
        %v1663 = vunpack.c.l.b16 %v485
        %v1664 = vunpack.c.h.b16 %v485
        %v1665 = vunpack.c.l.b16 %v486
        %v1666 = vunpack.c.h.b16 %v486
        %v1667 = vunpack.c.l.b16 %v487
        %v1668 = vunpack.c.h.b16 %v487
        %v1669 = vunpack.c.l.b16 %v488
        %v1670 = vunpack.c.h.b16 %v488
        %v1671 = vunpack.c.l.b16 %v489
        %v1672 = vunpack.c.h.b16 %v489
        %v1673 = vunpack.c.l.b16 %v490
        %v1674 = vunpack.c.h.b16 %v490
        %v1675 = vunpack.c.l.b16 %v491
        %v1676 = vunpack.c.h.b16 %v491
        %v1677 = vunpack.c.l.b16 %v492
        %v1678 = vunpack.c.h.b16 %v492
        %v1679 = vunpack.c.l.b16 %v493
        %v1680 = vunpack.c.h.b16 %v493
        %v1681 = vunpack.c.l.b16 %v494
        %v1682 = vunpack.c.h.b16 %v494
        %v1683 = vunpack.c.l.b16 %v495
        %v1684 = vunpack.c.h.b16 %v495
        %v1685 = vunpack.c.l.b16 %v496
        %v1686 = vunpack.c.h.b16 %v496
        %v1687 = vunpack.c.l.b16 %v497
        %v1688 = vunpack.c.h.b16 %v497
        %v1689 = vunpack.c.l.b16 %v498
        %v1690 = vunpack.c.h.b16 %v498
        %v1691 = vunpack.c.l.b16 %v499
        %v1692 = vunpack.c.h.b16 %v499
        %v1693 = vunpack.c.l.b16 %v500
        %v1694 = vunpack.c.h.b16 %v500
        %v1695 = vunpack.c.l.b16 %v501
        %v1696 = vunpack.c.h.b16 %v501
        %v1697 = vunpack.c.l.b16 %v502
        %v1698 = vunpack.c.h.b16 %v502
        %v1699 = vunpack.c.l.b16 %v503
        %v1700 = vunpack.c.h.b16 %v503
        %v1701 = vunpack.c.l.b16 %v504
        %v1702 = vunpack.c.h.b16 %v504
        %v1703 = vunpack.c.l.b16 %v505
        %v1704 = vunpack.c.h.b16 %v505
        %v1705 = vunpack.c.l.b16 %v506
        %v1706 = vunpack.c.h.b16 %v506
        %v1707 = vunpack.c.l.b16 %v507
        %v1708 = vunpack.c.h.b16 %v507
        %v1709 = vunpack.c.l.b16 %v508
        %v1710 = vunpack.c.h.b16 %v508
        %v1711 = vunpack.c.l.b16 %v509
        %v1712 = vunpack.c.h.b16 %v509
        %v1713 = vunpack.c.l.b16 %v510
        %v1714 = vunpack.c.h.b16 %v510
        %v1715 = vunpack.c.l.b16 %v511
        %v1716 = vunpack.c.h.b16 %v511
        %v1717 = vunpack.c.l.b16 %v512
        %v1718 = vunpack.c.h.b16 %v512
        %v1719 = vunpack.c.l.b16 %v513
        %v1720 = vunpack.c.h.b16 %v513
        %v1721 = vunpack.c.l.b16 %v514
        %v1722 = vunpack.c.h.b16 %v514
        %v1723 = vunpack.c.l.b16 %v515
        %v1724 = vunpack.c.h.b16 %v515
        %v1725 = vunpack.c.l.b16 %v516
        %v1726 = vunpack.c.h.b16 %v516
        %v1727 = vunpack.c.l.b16 %v517
        %v1728 = vunpack.c.h.b16 %v517
        %v1729 = vunpack.c.l.b16 %v518
        %v1730 = vunpack.c.h.b16 %v518
        %v1731 = vunpack.c.l.b16 %v519
        %v1732 = vunpack.c.h.b16 %v519
        %v1733 = vunpack.c.l.b16 %v520
        %v1734 = vunpack.c.h.b16 %v520
        %v1735 = vunpack.c.l.b16 %v521
        %v1736 = vunpack.c.h.b16 %v521
        %v1737 = vunpack.c.l.b16 %v522
        %v1738 = vunpack.c.h.b16 %v522
        %v1739 = vunpack.c.l.b16 %v523
        %v1740 = vunpack.c.h.b16 %v523
        %v1741 = vunpack.c.l.b16 %v524
        %v1742 = vunpack.c.h.b16 %v524
        %v1743 = vunpack.c.l.b16 %v525
        %v1744 = vunpack.c.h.b16 %v525
        %v1745 = vunpack.c.l.b16 %v526
        %v1746 = vunpack.c.h.b16 %v526
        %v1747 = vunpack.c.l.b16 %v527
        %v1748 = vunpack.c.h.b16 %v527
        %v1749 = vunpack.c.l.b16 %v528
        %v1750 = vunpack.c.h.b16 %v528
        %v1751 = vunpack.c.l.b16 %v529
        %v1752 = vunpack.c.h.b16 %v529
        %v1753 = vunpack.c.l.b16 %v530
        %v1754 = vunpack.c.h.b16 %v530
        %v1755 = vunpack.c.l.b16 %v531
        %v1756 = vunpack.c.h.b16 %v531
        %v1757 = vunpack.c.l.b16 %v532
        %v1758 = vunpack.c.h.b16 %v532
        %v1759 = vunpack.c.l.b16 %v533
        %v1760 = vunpack.c.h.b16 %v533
        %v1761 = vunpack.c.l.b16 %v534
        %v1762 = vunpack.c.h.b16 %v534
        %v1763 = vunpack.c.l.b16 %v535
        %v1764 = vunpack.c.h.b16 %v535
        %v1765 = vunpack.c.l.b16 %v536
        %v1766 = vunpack.c.h.b16 %v536
        %v1767 = vunpack.c.l.b16 %v537
        %v1768 = vunpack.c.h.b16 %v537
        %v1769 = vunpack.c.l.b16 %v538
        %v1770 = vunpack.c.h.b16 %v538
        %v1771 = vunpack.c.l.b16 %v539
        %v1772 = vunpack.c.h.b16 %v539
        %v1773 = vunpack.c.l.b16 %v540
        %v1774 = vunpack.c.h.b16 %v540
        %v1775 = vunpack.c.l.b16 %v541
        %v1776 = vunpack.c.h.b16 %v541
        %v1777 = vunpack.c.l.b16 %v542
        %v1778 = vunpack.c.h.b16 %v542
        %v1779 = vunpack.c.l.b16 %v543
        %v1780 = vunpack.c.h.b16 %v543
        %v1781 = vunpack.c.l.b16 %v544
        %v1782 = vunpack.c.h.b16 %v544
        %v1783 = vunpack.c.l.b16 %v545
        %v1784 = vunpack.c.h.b16 %v545
        %v1785 = vunpack.c.l.b16 %v546
        %v1786 = vunpack.c.h.b16 %v546
        %v1787 = vunpack.c.l.b16 %v547
        %v1788 = vunpack.c.h.b16 %v547
        %v1789 = vunpack.c.l.b16 %v548
        %v1790 = vunpack.c.h.b16 %v548
        %v1791 = vunpack.c.l.b16 %v549
        %v1792 = vunpack.c.h.b16 %v549
        %v1793 = vunpack.c.l.b16 %v550
        %v1794 = vunpack.c.h.b16 %v550
        %v1795 = vunpack.c.l.b16 %v551
        %v1796 = vunpack.c.h.b16 %v551
        %v1797 = vunpack.c.l.b16 %v552
        %v1798 = vunpack.c.h.b16 %v552
        %v1799 = vunpack.c.l.b16 %v553
        %v1800 = vunpack.c.h.b16 %v553
        %v1801 = vunpack.c.l.b16 %v554
        %v1802 = vunpack.c.h.b16 %v554
        %v1803 = vunpack.c.l.b16 %v555
        %v1804 = vunpack.c.h.b16 %v555
        %v1805 = vunpack.c.l.b16 %v556
        %v1806 = vunpack.c.h.b16 %v556
        %v1807 = vunpack.c.l.b16 %v557
        %v1808 = vunpack.c.h.b16 %v557
        %v1809 = vunpack.c.l.b16 %v558
        %v1810 = vunpack.c.h.b16 %v558
        %v1811 = vunpack.c.l.b16 %v559
        %v1812 = vunpack.c.h.b16 %v559
        %v1813 = vunpack.c.l.b16 %v560
        %v1814 = vunpack.c.h.b16 %v560
        %v1815 = vunpack.c.l.b16 %v561
        %v1816 = vunpack.c.h.b16 %v561
        %v1817 = vunpack.c.l.b16 %v562
        %v1818 = vunpack.c.h.b16 %v562
        %v1819 = vunpack.c.l.b16 %v563
        %v1820 = vunpack.c.h.b16 %v563
        %v1821 = vunpack.c.l.b16 %v564
        %v1822 = vunpack.c.h.b16 %v564
        %v1823 = vunpack.c.l.b16 %v565
        %v1824 = vunpack.c.h.b16 %v565
        %v1825 = vunpack.c.l.b16 %v566
        %v1826 = vunpack.c.h.b16 %v566
        %v1827 = vunpack.c.l.b16 %v567
        %v1828 = vunpack.c.h.b16 %v567
        %v1829 = vunpack.c.l.b16 %v568
        %v1830 = vunpack.c.h.b16 %v568
        %v1831 = vunpack.c.l.b16 %v569
        %v1832 = vunpack.c.h.b16 %v569
        %v1833 = vunpack.c.l.b16 %v570
        %v1834 = vunpack.c.h.b16 %v570
        %v1835 = vunpack.c.l.b16 %v571
        %v1836 = vunpack.c.h.b16 %v571
        %v1837 = vunpack.c.l.b16 %v572
        %v1838 = vunpack.c.h.b16 %v572
        %v1839 = vunpack.c.l.b16 %v573
        %v1840 = vunpack.c.h.b16 %v573
        %v1841 = vunpack.c.l.b16 %v574
        %v1842 = vunpack.c.h.b16 %v574
        %v1843 = vunpack.c.l.b16 %v575
        %v1844 = vunpack.c.h.b16 %v575
        %v1845 = vunpack.c.l.b16 %v576
        %v1846 = vunpack.c.h.b16 %v576
        %v1847 = vunpack.c.l.b16 %v577
        %v1848 = vunpack.c.h.b16 %v577
        %v1849 = vunpack.c.l.b16 %v578
        %v1850 = vunpack.c.h.b16 %v578
        %v1851 = vunpack.c.l.b16 %v579
        %v1852 = vunpack.c.h.b16 %v579
        %v1853 = vunpack.c.l.b16 %v580
        %v1854 = vunpack.c.h.b16 %v580
        %v1855 = vunpack.c.l.b16 %v581
        %v1856 = vunpack.c.h.b16 %v581
        %v1857 = vunpack.c.l.b16 %v582
        %v1858 = vunpack.c.h.b16 %v582
        %v1859 = vunpack.c.l.b16 %v583
        %v1860 = vunpack.c.h.b16 %v583
        %v1861 = vunpack.c.l.b16 %v584
        %v1862 = vunpack.c.h.b16 %v584
        %v1863 = vunpack.c.l.b16 %v585
        %v1864 = vunpack.c.h.b16 %v585
        %v1865 = vunpack.c.l.b16 %v586
        %v1866 = vunpack.c.h.b16 %v586
        %v1867 = vunpack.c.l.b16 %v587
        %v1868 = vunpack.c.h.b16 %v587
        %v1869 = vunpack.c.l.b16 %v588
        %v1870 = vunpack.c.h.b16 %v588
        %v1871 = vunpack.c.l.b16 %v589
        %v1872 = vunpack.c.h.b16 %v589
        %v1873 = vunpack.c.l.b16 %v590
        %v1874 = vunpack.c.h.b16 %v590
        %v1875 = vunpack.c.l.b16 %v591
        %v1876 = vunpack.c.h.b16 %v591
        %v1877 = vunpack.c.l.b16 %v592
        %v1878 = vunpack.c.h.b16 %v592
        %v1879 = vunpack.c.l.b16 %v593
        %v1880 = vunpack.c.h.b16 %v593
        %v1881 = vunpack.c.l.b16 %v594
        %v1882 = vunpack.c.h.b16 %v594
        %v1883 = vunpack.c.l.b16 %v595
        %v1884 = vunpack.c.h.b16 %v595
        %v1885 = vunpack.c.l.b16 %v596
        %v1886 = vunpack.c.h.b16 %v596
        %v1887 = vunpack.c.l.b16 %v597
        %v1888 = vunpack.c.h.b16 %v597
        %v1889 = vunpack.c.l.b16 %v598
        %v1890 = vunpack.c.h.b16 %v598
        %v1891 = vunpack.c.l.b16 %v599
        %v1892 = vunpack.c.h.b16 %v599
        %v1893 = vunpack.c.l.b16 %v600
        %v1894 = vunpack.c.h.b16 %v600
        %v1895 = vunpack.c.l.b16 %v601
        %v1896 = vunpack.c.h.b16 %v601
        %v1897 = vunpack.c.l.b16 %v602
        %v1898 = vunpack.c.h.b16 %v602
        %v1899 = vunpack.c.l.b16 %v603
        %v1900 = vunpack.c.h.b16 %v603
        %v1901 = vunpack.c.l.b16 %v604
        %v1902 = vunpack.c.h.b16 %v604
        %v1903 = vunpack.c.l.b16 %v605
        %v1904 = vunpack.c.h.b16 %v605
        %v1905 = vunpack.c.l.b16 %v606
        %v1906 = vunpack.c.h.b16 %v606
        %v1907 = vunpack.c.l.b16 %v607
        %v1908 = vunpack.c.h.b16 %v607
        %v1909 = vunpack.c.l.b16 %v608
        %v1910 = vunpack.c.h.b16 %v608
        %v1911 = vunpack.c.l.b16 %v609
        %v1912 = vunpack.c.h.b16 %v609
        %v1913 = vunpack.c.l.b16 %v610
        %v1914 = vunpack.c.h.b16 %v610
        %v1915 = vunpack.c.l.b16 %v611
        %v1916 = vunpack.c.h.b16 %v611
        %v1917 = vunpack.c.l.b16 %v612
        %v1918 = vunpack.c.h.b16 %v612
        %v1919 = vunpack.c.l.b16 %v613
        %v1920 = vunpack.c.h.b16 %v613
        %v1921 = vunpack.c.l.b16 %v614
        %v1922 = vunpack.c.h.b16 %v614
        %v1923 = vunpack.c.l.b16 %v615
        %v1924 = vunpack.c.h.b16 %v615
        %v1925 = vunpack.c.l.b16 %v616
        %v1926 = vunpack.c.h.b16 %v616
        %v1927 = vunpack.c.l.b16 %v617
        %v1928 = vunpack.c.h.b16 %v617
        %v1929 = vunpack.c.l.b16 %v618
        %v1930 = vunpack.c.h.b16 %v618
        %v1931 = vunpack.c.l.b16 %v619
        %v1932 = vunpack.c.h.b16 %v619
        %v1933 = vunpack.c.l.b16 %v620
        %v1934 = vunpack.c.h.b16 %v620
        %v1935 = vunpack.c.l.b16 %v621
        %v1936 = vunpack.c.h.b16 %v621
        %v1937 = vunpack.c.l.b16 %v622
        %v1938 = vunpack.c.h.b16 %v622
        %v1939 = vunpack.c.l.b16 %v623
        %v1940 = vunpack.c.h.b16 %v623
        %v1941 = vunpack.c.l.b16 %v624
        %v1942 = vunpack.c.h.b16 %v624
        %v1943 = vunpack.c.l.b16 %v625
        %v1944 = vunpack.c.h.b16 %v625
        %v1945 = vunpack.c.l.b16 %v626
        %v1946 = vunpack.c.h.b16 %v626
        %v1947 = vunpack.c.l.b16 %v627
        %v1948 = vunpack.c.h.b16 %v627
        %v1949 = vunpack.c.l.b16 %v628
        %v1950 = vunpack.c.h.b16 %v628
        %v1951 = vunpack.c.l.b16 %v629
        %v1952 = vunpack.c.h.b16 %v629
        %v1953 = vunpack.c.l.b16 %v630
        %v1954 = vunpack.c.h.b16 %v630
        %v1955 = vunpack.c.l.b16 %v631
        %v1956 = vunpack.c.h.b16 %v631
        %v1957 = vunpack.c.l.b16 %v632
        %v1958 = vunpack.c.h.b16 %v632
        %v1959 = vunpack.c.l.b16 %v633
        %v1960 = vunpack.c.h.b16 %v633
        %v1961 = vunpack.c.l.b16 %v634
        %v1962 = vunpack.c.h.b16 %v634
        %v1963 = vunpack.c.l.b16 %v635
        %v1964 = vunpack.c.h.b16 %v635
        %v1965 = vunpack.c.l.b16 %v636
        %v1966 = vunpack.c.h.b16 %v636
        %v1967 = vunpack.c.l.b16 %v637
        %v1968 = vunpack.c.h.b16 %v637
        %v1969 = vunpack.c.l.b16 %v638
        %v1970 = vunpack.c.h.b16 %v638
        %v1971 = vunpack.c.l.b16 %v639
        %v1972 = vunpack.c.h.b16 %v639
        %v1973 = vunpack.c.l.b16 %v640
        %v1974 = vunpack.c.h.b16 %v640
        %v1975 = vunpack.c.l.b16 %v641
        %v1976 = vunpack.c.h.b16 %v641
        %v1977 = vunpack.c.l.b16 %v642
        %v1978 = vunpack.c.h.b16 %v642
        %v1979 = vunpack.c.l.b16 %v643
        %v1980 = vunpack.c.h.b16 %v643
        %v1981 = vunpack.c.l.b16 %v644
        %v1982 = vunpack.c.h.b16 %v644
        %v1983 = vunpack.c.l.b16 %v645
        %v1984 = vunpack.c.h.b16 %v645
        %v1985 = vunpack.c.l.b16 %v646
        %v1986 = vunpack.c.h.b16 %v646
        %v1987 = vunpack.c.l.b16 %v647
        %v1988 = vunpack.c.h.b16 %v647
        %v1989 = vunpack.c.l.b16 %v648
        %v1990 = vunpack.c.h.b16 %v648
        %v1991 = vunpack.c.l.b16 %v649
        %v1992 = vunpack.c.h.b16 %v649
        %v1993 = vunpack.c.l.b16 %v650
        %v1994 = vunpack.c.h.b16 %v650
        %v1995 = vunpack.c.l.b16 %v651
        %v1996 = vunpack.c.h.b16 %v651
        %v1997 = vunpack.c.l.b16 %v652
        %v1998 = vunpack.c.h.b16 %v652
        %v1999 = vunpack.c.l.b16 %v653
        %v2000 = vunpack.c.h.b16 %v653
        %v2001 = vunpack.c.l.b16 %v654
        %v2002 = vunpack.c.h.b16 %v654
        %v2003 = vunpack.c.l.b16 %v655
        %v2004 = vunpack.c.h.b16 %v655
        %v2005 = vunpack.c.l.b16 %v656
        %v2006 = vunpack.c.h.b16 %v656
        %v2007 = vunpack.c.l.b16 %v657
        %v2008 = vunpack.c.h.b16 %v657
        %v2009 = vunpack.c.l.b16 %v658
        %v2010 = vunpack.c.h.b16 %v658
        %v2011 = vunpack.c.l.b16 %v659
        %v2012 = vunpack.c.h.b16 %v659
        %v2013 = vunpack.c.l.b16 %v660
        %v2014 = vunpack.c.h.b16 %v660
        %v2015 = vunpack.c.l.b16 %v661
        %v2016 = vunpack.c.h.b16 %v661
        %v2017 = vunpack.c.l.b16 %v662
        %v2018 = vunpack.c.h.b16 %v662
        %v2019 = vunpack.c.l.b16 %v663
        %v2020 = vunpack.c.h.b16 %v663
        %v2021 = vunpack.c.l.b16 %v664
        %v2022 = vunpack.c.h.b16 %v664
        %v2023 = vunpack.c.l.b16 %v665
        %v2024 = vunpack.c.h.b16 %v665
        %v2025 = vunpack.c.l.b16 %v666
        %v2026 = vunpack.c.h.b16 %v666
        %v2027 = vunpack.c.l.b16 %v667
        %v2028 = vunpack.c.h.b16 %v667
        %v2029 = vunpack.c.l.b16 %v668
        %v2030 = vunpack.c.h.b16 %v668
        %v2031 = vunpack.c.l.b16 %v669
        %v2032 = vunpack.c.h.b16 %v669
        %v2033 = vunpack.c.l.b16 %v670
        %v2034 = vunpack.c.h.b16 %v670
        %v2035 = vunpack.c.l.b16 %v671
        %v2036 = vunpack.c.h.b16 %v671
        %v2037 = vunpack.c.l.b16 %v672
        %v2038 = vunpack.c.h.b16 %v672
        %v2039 = vunpack.c.l.b16 %v673
        %v2040 = vunpack.c.h.b16 %v673
        %v2041 = vunpack.c.l.b16 %v674
        %v2042 = vunpack.c.h.b16 %v674
        %v2043 = vunpack.c.l.b16 %v675
        %v2044 = vunpack.c.h.b16 %v675
        %v2045 = vunpack.c.l.b16 %v676
        %v2046 = vunpack.c.h.b16 %v676
        %v2047 = vunpack.c.l.b16 %v677
        %v2048 = vunpack.c.h.b16 %v677
        %v2049 = vunpack.c.l.b16 %v678
        %v2050 = vunpack.c.h.b16 %v678
        %v2051 = vunpack.c.l.b16 %v679
        %v2052 = vunpack.c.h.b16 %v679
        %v2053 = vunpack.c.l.b16 %v680
        %v2054 = vunpack.c.h.b16 %v680
        %v2055 = vunpack.c.l.b16 %v681
        %v2056 = vunpack.c.h.b16 %v681
        %v2057 = vunpack.c.l.b16 %v682
        %v2058 = vunpack.c.h.b16 %v682
        %v2059 = vunpack.c.l.b16 %v683
        %v2060 = vunpack.c.h.b16 %v683
        %v2061 = vunpack.c.l.b16 %v684
        %v2062 = vunpack.c.h.b16 %v684
        %v2063 = vunpack.c.l.b16 %v685
        %v2064 = vunpack.c.h.b16 %v685
        %v2065 = vunpack.c.l.b16 %v686
        %v2066 = vunpack.c.h.b16 %v686
        %v2067 = vunpack.c.l.b16 %v687
        %v2068 = vunpack.c.h.b16 %v687
        %v2069 = vunpack.c.l.b16 %v688
        %v2070 = vunpack.c.h.b16 %v688
        %v2071 = vunpack.c.l.b16 %v689
        %v2072 = vunpack.c.h.b16 %v689
        %v2073 = vunpack.c.l.b16 %v690
        %v2074 = vunpack.c.h.b16 %v690
        %v2075 = vunpack.c.l.b16 %v691
        %v2076 = vunpack.c.h.b16 %v691
        %v2077 = vunpack.c.l.b16 %v692
        %v2078 = vunpack.c.h.b16 %v692
        %v2079 = vunpack.c.l.b16 %v693
        %v2080 = vunpack.c.h.b16 %v693
        %v2081 = vunpack.c.l.b16 %v694
        %v2082 = vunpack.c.h.b16 %v694
        %v2083 = vunpack.c.l.b16 %v695
        %v2084 = vunpack.c.h.b16 %v695
        %v2085 = vunpack.c.l.b16 %v696
        %v2086 = vunpack.c.h.b16 %v696
        %v2087 = vunpack.c.l.b16 %v697
        %v2088 = vunpack.c.h.b16 %v697
        %v2089 = vunpack.c.l.b16 %v698
        %v2090 = vunpack.c.h.b16 %v698
        %v2091 = vunpack.c.l.b16 %v699
        %v2092 = vunpack.c.h.b16 %v699
        %v2093 = vunpack.c.l.b16 %v700
        %v2094 = vunpack.c.h.b16 %v700
        %v2095 = vunpack.c.l.b16 %v701
        %v2096 = vunpack.c.h.b16 %v701
        %v2097 = vunpack.c.l.b16 %v702
        %v2098 = vunpack.c.h.b16 %v702
        %v2099 = vunpack.c.l.b16 %v703
        %v2100 = vunpack.c.h.b16 %v703
        %v2101 = vunpack.c.l.b16 %v704
        %v2102 = vunpack.c.h.b16 %v704
        %v2103 = vunpack.c.l.b16 %v705
        %v2104 = vunpack.c.h.b16 %v705
        %v2105 = vunpack.c.l.b16 %v706
        %v2106 = vunpack.c.h.b16 %v706
        %v2107 = vunpack.c.l.b16 %v707
        %v2108 = vunpack.c.h.b16 %v707
        %v2109 = vunpack.c.l.b16 %v708
        %v2110 = vunpack.c.h.b16 %v708
        %v2111 = vunpack.c.l.b16 %v709
        %v2112 = vunpack.c.h.b16 %v709
        %v2113 = vunpack.c.l.b16 %v710
        %v2114 = vunpack.c.h.b16 %v710
        %v2115 = vunpack.c.l.b16 %v711
        %v2116 = vunpack.c.h.b16 %v711
        %v2117 = vunpack.c.l.b16 %v712
        %v2118 = vunpack.c.h.b16 %v712
        %v2119 = vunpack.c.l.b16 %v713
        %v2120 = vunpack.c.h.b16 %v713
        %v2121 = vunpack.c.l.b16 %v714
        %v2122 = vunpack.c.h.b16 %v714
        %v2123 = vunpack.c.l.b16 %v715
        %v2124 = vunpack.c.h.b16 %v715
        %v2125 = vunpack.c.l.b16 %v716
        %v2126 = vunpack.c.h.b16 %v716
        %v2127 = vunpack.c.l.b16 %v717
        %v2128 = vunpack.c.h.b16 %v717
        %v2129 = vunpack.c.l.b16 %v718
        %v2130 = vunpack.c.h.b16 %v718
        %v2131 = vunpack.c.l.b16 %v719
        %v2132 = vunpack.c.h.b16 %v719
        %v2133 = vunpack.c.l.b16 %v720
        %v2134 = vunpack.c.h.b16 %v720
        %v2135 = vunpack.c.l.b16 %v721
        %v2136 = vunpack.c.h.b16 %v721
        %v2137 = vunpack.c.l.b16 %v722
        %v2138 = vunpack.c.h.b16 %v722
        %v2139 = vunpack.c.l.b16 %v723
        %v2140 = vunpack.c.h.b16 %v723
        %v2141 = vunpack.c.l.b16 %v724
        %v2142 = vunpack.c.h.b16 %v724
        %v2143 = vunpack.c.l.b16 %v725
        %v2144 = vunpack.c.h.b16 %v725
        %v2145 = vunpack.c.l.b16 %v726
        %v2146 = vunpack.c.h.b16 %v726
        %v2147 = vunpack.c.l.b16 %v727
        %v2148 = vunpack.c.h.b16 %v727
        %v2149 = vunpack.c.l.b16 %v728
        %v2150 = vunpack.c.h.b16 %v728
        %v2151 = vunpack.c.l.b16 %v729
        %v2152 = vunpack.c.h.b16 %v729
        %v2153 = vunpack.c.l.b16 %v730
        %v2154 = vunpack.c.h.b16 %v730
        %v2155 = vunpack.c.l.b16 %v731
        %v2156 = vunpack.c.h.b16 %v731
        %v2157 = vunpack.c.l.b16 %v732
        %v2158 = vunpack.c.h.b16 %v732
        %v2159 = vunpack.c.l.b16 %v733
        %v2160 = vunpack.c.h.b16 %v733
        %v2161 = vunpack.c.l.b16 %v734
        %v2162 = vunpack.c.h.b16 %v734
        %v2163 = vunpack.c.l.b16 %v735
        %v2164 = vunpack.c.h.b16 %v735
        %v2165 = vunpack.c.l.b16 %v736
        %v2166 = vunpack.c.h.b16 %v736
        %v2167 = vunpack.c.l.b16 %v737
        %v2168 = vunpack.c.h.b16 %v737
        %v2169 = vunpack.c.l.b16 %v738
        %v2170 = vunpack.c.h.b16 %v738
        %v2171 = vunpack.c.l.b16 %v739
        %v2172 = vunpack.c.h.b16 %v739
        %v2173 = vunpack.c.l.b16 %v740
        %v2174 = vunpack.c.h.b16 %v740
        %v2175 = vunpack.c.l.b16 %v741
        %v2176 = vunpack.c.h.b16 %v741
        %v2177 = vunpack.c.l.b16 %v742
        %v2178 = vunpack.c.h.b16 %v742
        %v2179 = vunpack.c.l.b16 %v743
        %v2180 = vunpack.c.h.b16 %v743
        %v2181 = vunpack.c.l.b16 %v744
        %v2182 = vunpack.c.h.b16 %v744
        %v2183 = vunpack.c.l.b16 %v745
        %v2184 = vunpack.c.h.b16 %v745
        %v2185 = vunpack.c.l.b16 %v746
        %v2186 = vunpack.c.h.b16 %v746
        %v2187 = vunpack.c.l.b16 %v747
        %v2188 = vunpack.c.h.b16 %v747
        %v2189 = vunpack.c.l.b16 %v748
        %v2190 = vunpack.c.h.b16 %v748
        %v2191 = vunpack.c.l.b16 %v749
        %v2192 = vunpack.c.h.b16 %v749
        %v2193 = vunpack.c.l.b16 %v750
        %v2194 = vunpack.c.h.b16 %v750
        %v2195 = vunpack.c.l.b16 %v751
        %v2196 = vunpack.c.h.b16 %v751
        %v2197 = vunpack.c.l.b16 %v752
        %v2198 = vunpack.c.h.b16 %v752
        %v2199 = vunpack.c.l.b16 %v753
        %v2200 = vunpack.c.h.b16 %v753
        %v2201 = vunpack.c.l.b16 %v754
        %v2202 = vunpack.c.h.b16 %v754
        %v2203 = vunpack.c.l.b16 %v755
        %v2204 = vunpack.c.h.b16 %v755
        %v2205 = vunpack.c.l.b16 %v756
        %v2206 = vunpack.c.h.b16 %v756
        %v2207 = vunpack.c.l.b16 %v757
        %v2208 = vunpack.c.h.b16 %v757
        %v2209 = vunpack.c.l.b16 %v758
        %v2210 = vunpack.c.h.b16 %v758
        %v2211 = vunpack.c.l.b16 %v759
        %v2212 = vunpack.c.h.b16 %v759
        %v2213 = vunpack.c.l.b16 %v760
        %v2214 = vunpack.c.h.b16 %v760
        %v2215 = vunpack.c.l.b16 %v761
        %v2216 = vunpack.c.h.b16 %v761
        %v2217 = vunpack.c.l.b16 %v762
        %v2218 = vunpack.c.h.b16 %v762
        %v2219 = vunpack.c.l.b16 %v763
        %v2220 = vunpack.c.h.b16 %v763
        %v2221 = vunpack.c.l.b16 %v764
        %v2222 = vunpack.c.h.b16 %v764
        %v2223 = vunpack.c.l.b16 %v765
        %v2224 = vunpack.c.h.b16 %v765
        %v2225 = vunpack.c.l.b16 %v766
        %v2226 = vunpack.c.h.b16 %v766
        %v2227 = vunpack.c.l.b16 %v767
        %v2228 = vunpack.c.h.b16 %v767
        %v2229 = vunpack.c.l.b16 %v768
        %v2230 = vunpack.c.h.b16 %v768
        %v2231 = vunpack.c.l.b16 %v769
        %v2232 = vunpack.c.h.b16 %v769
        %v2233 = vunpack.c.l.b16 %v770
        %v2234 = vunpack.c.h.b16 %v770
        %v2235 = vunpack.c.l.b16 %v771
        %v2236 = vunpack.c.h.b16 %v771
        %v2237 = vunpack.c.l.b16 %v772
        %v2238 = vunpack.c.h.b16 %v772
        %v2239 = vunpack.c.l.b16 %v773
        %v2240 = vunpack.c.h.b16 %v773
        %v2241 = vunpack.c.l.b16 %v774
        %v2242 = vunpack.c.h.b16 %v774
        %v2243 = vunpack.c.l.b16 %v775
        %v2244 = vunpack.c.h.b16 %v775
        %v2245 = vunpack.c.l.b16 %v776
        %v2246 = vunpack.c.h.b16 %v776
        %v2247 = vunpack.c.l.b16 %v777
        %v2248 = vunpack.c.h.b16 %v777
        %v2249 = vunpack.c.l.b16 %v778
        %v2250 = vunpack.c.h.b16 %v778
        %v2251 = vunpack.c.l.b16 %v779
        %v2252 = vunpack.c.h.b16 %v779
        %v2253 = vunpack.c.l.b16 %v780
        %v2254 = vunpack.c.h.b16 %v780
        %v2255 = vunpack.c.l.b16 %v781
        %v2256 = vunpack.c.h.b16 %v781
        %v2257 = vunpack.c.l.b16 %v782
        %v2258 = vunpack.c.h.b16 %v782
        %v2259 = vunpack.c.l.b16 %v783
        %v2260 = vunpack.c.h.b16 %v783
        %v2261 = vunpack.c.l.b16 %v784
        %v2262 = vunpack.c.h.b16 %v784
        %v2263 = vunpack.c.l.b16 %v785
        %v2264 = vunpack.c.h.b16 %v785
        %v2265 = vunpack.c.l.b16 %v786
        %v2266 = vunpack.c.h.b16 %v786
        %v2267 = vunpack.c.l.b16 %v787
        %v2268 = vunpack.c.h.b16 %v787
        %v2269 = vunpack.c.l.b16 %v788
        %v2270 = vunpack.c.h.b16 %v788
        %v2271 = vunpack.c.l.b16 %v789
        %v2272 = vunpack.c.h.b16 %v789
        %v2273 = vunpack.c.l.b16 %v790
        %v2274 = vunpack.c.h.b16 %v790
        %v2275 = vunpack.c.l.b16 %v791
        %v2276 = vunpack.c.h.b16 %v791
        %v2277 = vunpack.c.l.b16 %v792
        %v2278 = vunpack.c.h.b16 %v792
        %v2279 = vunpack.c.l.b16 %v793
        %v2280 = vunpack.c.h.b16 %v793
        %v2281 = vunpack.c.l.b16 %v794
        %v2282 = vunpack.c.h.b16 %v794
        %v2283 = vunpack.c.l.b16 %v795
        %v2284 = vunpack.c.h.b16 %v795
        %v2285 = vunpack.c.l.b16 %v796
        %v2286 = vunpack.c.h.b16 %v796
        %v2287 = vunpack.c.l.b16 %v797
        %v2288 = vunpack.c.h.b16 %v797
        %v2289 = vunpack.c.l.b16 %v798
        %v2290 = vunpack.c.h.b16 %v798
        %v2291 = vunpack.c.l.b16 %v799
        %v2292 = vunpack.c.h.b16 %v799
        %v2293 = vunpack.c.l.b16 %v800
        %v2294 = vunpack.c.h.b16 %v800
        %v2295 = vunpack.c.l.b16 %v801
        %v2296 = vunpack.c.h.b16 %v801
        %v2297 = vunpack.c.l.b16 %v802
        %v2298 = vunpack.c.h.b16 %v802
        %v2299 = vunpack.c.l.b16 %v803
        %v2300 = vunpack.c.h.b16 %v803
        %v2301 = vunpack.c.l.b16 %v804
        %v2302 = vunpack.c.h.b16 %v804
        %v2303 = vunpack.c.l.b16 %v805
        %v2304 = vunpack.c.h.b16 %v805
        %v2305 = vunpack.c.l.b16 %v806
        %v2306 = vunpack.c.h.b16 %v806
        %v2307 = vunpack.c.l.b16 %v807
        %v2308 = vunpack.c.h.b16 %v807
        %v2309 = vunpack.c.l.b16 %v808
        %v2310 = vunpack.c.h.b16 %v808
        %v2311 = vunpack.c.l.b16 %v809
        %v2312 = vunpack.c.h.b16 %v809
        %v2313 = vunpack.c.l.b16 %v810
        %v2314 = vunpack.c.h.b16 %v810
        %v2315 = vunpack.c.l.b16 %v811
        %v2316 = vunpack.c.h.b16 %v811
        %v2317 = vunpack.c.l.b16 %v812
        %v2318 = vunpack.c.h.b16 %v812
        %v2319 = vunpack.c.l.b16 %v813
        %v2320 = vunpack.c.h.b16 %v813
        %v2321 = vunpack.c.l.b16 %v814
        %v2322 = vunpack.c.h.b16 %v814
        %v2323 = vunpack.c.l.b16 %v815
        %v2324 = vunpack.c.h.b16 %v815
        %v2325 = vunpack.c.l.b16 %v816
        %v2326 = vunpack.c.h.b16 %v816
        %v2327 = vunpack.c.l.b16 %v817
        %v2328 = vunpack.c.h.b16 %v817
        %v2329 = vunpack.c.l.b16 %v818
        %v2330 = vunpack.c.h.b16 %v818
        %v2331 = vunpack.c.l.b16 %v819
        %v2332 = vunpack.c.h.b16 %v819
        %v2333 = vunpack.c.l.b16 %v820
        %v2334 = vunpack.c.h.b16 %v820
        %v2335 = vunpack.c.l.b16 %v821
        %v2336 = vunpack.c.h.b16 %v821
        %v2337 = vunpack.c.l.b16 %v822
        %v2338 = vunpack.c.h.b16 %v822
        %v2339 = vunpack.c.l.b16 %v823
        %v2340 = vunpack.c.h.b16 %v823
        %v2341 = vunpack.c.l.b16 %v824
        %v2342 = vunpack.c.h.b16 %v824
        %v2343 = vunpack.c.l.b16 %v825
        %v2344 = vunpack.c.h.b16 %v825
        %v2345 = vunpack.c.l.b16 %v826
        %v2346 = vunpack.c.h.b16 %v826
        %v2347 = vunpack.c.l.b16 %v827
        %v2348 = vunpack.c.h.b16 %v827
        %v2349 = vunpack.c.l.b16 %v828
        %v2350 = vunpack.c.h.b16 %v828
        %v2351 = vunpack.c.l.b16 %v829
        %v2352 = vunpack.c.h.b16 %v829
        %v2353 = vunpack.c.l.b16 %v830
        %v2354 = vunpack.c.h.b16 %v830
        %v2355 = vunpack.c.l.b16 %v831
        %v2356 = vunpack.c.h.b16 %v831
        %v2357 = vunpack.c.l.b16 %v832
        %v2358 = vunpack.c.h.b16 %v832
        %v2359 = vunpack.c.l.b16 %v833
        %v2360 = vunpack.c.h.b16 %v833
        %v2361 = vunpack.c.l.b16 %v834
        %v2362 = vunpack.c.h.b16 %v834
        %v2363 = vunpack.c.l.b16 %v835
        %v2364 = vunpack.c.h.b16 %v835
        %v2365 = vunpack.c.l.b16 %v836
        %v2366 = vunpack.c.h.b16 %v836
        %v2367 = vunpack.c.l.b16 %v837
        %v2368 = vunpack.c.h.b16 %v837
        %v2369 = vunpack.c.l.b16 %v838
        %v2370 = vunpack.c.h.b16 %v838
        %v2371 = vunpack.c.l.b16 %v839
        %v2372 = vunpack.c.h.b16 %v839
        %v2373 = vunpack.c.l.b16 %v840
        %v2374 = vunpack.c.h.b16 %v840
        %v2375 = vunpack.c.l.b16 %v841
        %v2376 = vunpack.c.h.b16 %v841
        %v2377 = vunpack.c.l.b16 %v842
        %v2378 = vunpack.c.h.b16 %v842
        %v2379 = vunpack.c.l.b16 %v843
        %v2380 = vunpack.c.h.b16 %v843
        %v2381 = vunpack.c.l.b16 %v844
        %v2382 = vunpack.c.h.b16 %v844
        %v2383 = vunpack.c.l.b16 %v845
        %v2384 = vunpack.c.h.b16 %v845
        %v2385 = vunpack.c.l.b16 %v846
        %v2386 = vunpack.c.h.b16 %v846
        %v2387 = vunpack.c.l.b16 %v847
        %v2388 = vunpack.c.h.b16 %v847
        %v2389 = vunpack.c.l.b16 %v848
        %v2390 = vunpack.c.h.b16 %v848
        %v2391 = vunpack.c.l.b16 %v849
        %v2392 = vunpack.c.h.b16 %v849
        %v2393 = vunpack.c.l.b16 %v850
        %v2394 = vunpack.c.h.b16 %v850
        %v2395 = vunpack.c.l.b16 %v851
        %v2396 = vunpack.c.h.b16 %v851
        %v2397 = vunpack.c.l.b16 %v852
        %v2398 = vunpack.c.h.b16 %v852
        %v2399 = vunpack.c.l.b16 %v853
        %v2400 = vunpack.c.h.b16 %v853
        %v2401 = vunpack.c.l.b16 %v854
        %v2402 = vunpack.c.h.b16 %v854
        %v2403 = vunpack.c.l.b16 %v855
        %v2404 = vunpack.c.h.b16 %v855
        %v2405 = vunpack.c.l.b16 %v856
        %v2406 = vunpack.c.h.b16 %v856
        %v2407 = vunpack.c.l.b16 %v857
        %v2408 = vunpack.c.h.b16 %v857
        %v2409 = vunpack.c.l.b16 %v858
        %v2410 = vunpack.c.h.b16 %v858
        %v2411 = vunpack.c.l.b16 %v859
        %v2412 = vunpack.c.h.b16 %v859
        %v2413 = vunpack.c.l.b16 %v860
        %v2414 = vunpack.c.h.b16 %v860
        %v2415 = vunpack.c.l.b16 %v861
        %v2416 = vunpack.c.h.b16 %v861
        %v2417 = vunpack.c.l.b16 %v862
        %v2418 = vunpack.c.h.b16 %v862
        %v2419 = vunpack.c.l.b16 %v863
        %v2420 = vunpack.c.h.b16 %v863
        %v2421 = vunpack.c.l.b16 %v864
        %v2422 = vunpack.c.h.b16 %v864
        %v2423 = vunpack.c.l.b16 %v865
        %v2424 = vunpack.c.h.b16 %v865
        %v2425 = vunpack.c.l.b16 %v866
        %v2426 = vunpack.c.h.b16 %v866
        %v2427 = vunpack.c.l.b16 %v867
        %v2428 = vunpack.c.h.b16 %v867
        %v2429 = vunpack.c.l.b16 %v868
        %v2430 = vunpack.c.h.b16 %v868
        %v2431 = vunpack.c.l.b16 %v869
        %v2432 = vunpack.c.h.b16 %v869
        %v2433 = vunpack.c.l.b16 %v870
        %v2434 = vunpack.c.h.b16 %v870
        %v2435 = vunpack.c.l.b16 %v871
        %v2436 = vunpack.c.h.b16 %v871
        %v2437 = vunpack.c.l.b16 %v872
        %v2438 = vunpack.c.h.b16 %v872
        %v2439 = vunpack.c.l.b16 %v873
        %v2440 = vunpack.c.h.b16 %v873
        %v2441 = vunpack.c.l.b16 %v874
        %v2442 = vunpack.c.h.b16 %v874
        %v2443 = vunpack.c.l.b16 %v875
        %v2444 = vunpack.c.h.b16 %v875
        %v2445 = vunpack.c.l.b16 %v876
        %v2446 = vunpack.c.h.b16 %v876
        %v2447 = vunpack.c.l.b16 %v877
        %v2448 = vunpack.c.h.b16 %v877
        %v2449 = vunpack.c.l.b16 %v878
        %v2450 = vunpack.c.h.b16 %v878
        %v2451 = vunpack.c.l.b16 %v879
        %v2452 = vunpack.c.h.b16 %v879
        %v2453 = vunpack.c.l.b16 %v880
        %v2454 = vunpack.c.h.b16 %v880
        %v2455 = vunpack.c.l.b16 %v881
        %v2456 = vunpack.c.h.b16 %v881
        %v2457 = vunpack.c.l.b16 %v882
        %v2458 = vunpack.c.h.b16 %v882
        %v2459 = vunpack.c.l.b16 %v883
        %v2460 = vunpack.c.h.b16 %v883
        %v2461 = vunpack.c.l.b16 %v884
        %v2462 = vunpack.c.h.b16 %v884
        %v2463 = vunpack.c.l.b16 %v885
        %v2464 = vunpack.c.h.b16 %v885
        %v2465 = vunpack.c.l.b16 %v886
        %v2466 = vunpack.c.h.b16 %v886
        %v2467 = vunpack.c.l.b16 %v887
        %v2468 = vunpack.c.h.b16 %v887
        %v2469 = vunpack.c.l.b16 %v888
        %v2470 = vunpack.c.h.b16 %v888
        %v2471 = vunpack.c.l.b16 %v889
        %v2472 = vunpack.c.h.b16 %v889
        %v2473 = vunpack.c.l.b16 %v890
        %v2474 = vunpack.c.h.b16 %v890
        %v2475 = vunpack.c.l.b16 %v891
        %v2476 = vunpack.c.h.b16 %v891
        %v2477 = vunpack.c.l.b16 %v892
        %v2478 = vunpack.c.h.b16 %v892
        %v2479 = vunpack.c.l.b16 %v893
        %v2480 = vunpack.c.h.b16 %v893
        %v2481 = vunpack.c.l.b16 %v894
        %v2482 = vunpack.c.h.b16 %v894
        %v2483 = vunpack.c.l.b16 %v895
        %v2484 = vunpack.c.h.b16 %v895
        %v2485 = vunpack.c.l.b16 %v896
        %v2486 = vunpack.c.h.b16 %v896
        %v2487 = vunpack.c.l.b16 %v897
        %v2488 = vunpack.c.h.b16 %v897
        %v2489 = vunpack.c.l.b16 %v898
        %v2490 = vunpack.c.h.b16 %v898
        %v2491 = vunpack.c.l.b16 %v899
        %v2492 = vunpack.c.h.b16 %v899
        %v2493 = vunpack.c.l.b16 %v900
        %v2494 = vunpack.c.h.b16 %v900
        %v2495 = vpack.c.b16 %v1479, %v1471
        %v2496 = vpack.c.b16 %v1480, %v1472
        %v2497 = vpack.c.b16 %v1481, %v1473
        %v2498 = vpack.c.b16 %v1482, %v1474
        %v2499 = vpack.c.b16 %v1483, %v1475
        %v2500 = vpack.c.b16 %v1484, %v1476
        %v2501 = vpack.c.b16 %v1485, %v1477
        %v2502 = vpack.c.b16 %v1486, %v1478
        %v2503 = vpack.c.b16 %v1495, %v1487
        %v2504 = vpack.c.b16 %v1496, %v1488
        %v2505 = vpack.c.b16 %v1497, %v1489
        %v2506 = vpack.c.b16 %v1498, %v1490
        %v2507 = vpack.c.b16 %v1499, %v1491
        %v2508 = vpack.c.b16 %v1500, %v1492
        %v2509 = vpack.c.b16 %v1501, %v1493
        %v2510 = vpack.c.b16 %v1502, %v1494
        %v2511 = vpack.c.b16 %v1511, %v1503
        %v2512 = vpack.c.b16 %v1512, %v1504
        %v2513 = vpack.c.b16 %v1513, %v1505
        %v2514 = vpack.c.b16 %v1514, %v1506
        %v2515 = vpack.c.b16 %v1515, %v1507
        %v2516 = vpack.c.b16 %v1516, %v1508
        %v2517 = vpack.c.b16 %v1517, %v1509
        %v2518 = vpack.c.b16 %v1518, %v1510
        %v2519 = vpack.c.b16 %v1527, %v1519
        %v2520 = vpack.c.b16 %v1528, %v1520
        %v2521 = vpack.c.b16 %v1529, %v1521
        %v2522 = vpack.c.b16 %v1530, %v1522
        %v2523 = vpack.c.b16 %v1531, %v1523
        %v2524 = vpack.c.b16 %v1532, %v1524
        %v2525 = vpack.c.b16 %v1533, %v1525
        %v2526 = vpack.c.b16 %v1534, %v1526
        %v2527 = vpack.c.b16 %v1543, %v1535
        %v2528 = vpack.c.b16 %v1544, %v1536
        %v2529 = vpack.c.b16 %v1545, %v1537
        %v2530 = vpack.c.b16 %v1546, %v1538
        %v2531 = vpack.c.b16 %v1547, %v1539
        %v2532 = vpack.c.b16 %v1548, %v1540
        %v2533 = vpack.c.b16 %v1549, %v1541
        %v2534 = vpack.c.b16 %v1550, %v1542
        %v2535 = vpack.c.b16 %v1559, %v1551
        %v2536 = vpack.c.b16 %v1560, %v1552
        %v2537 = vpack.c.b16 %v1561, %v1553
        %v2538 = vpack.c.b16 %v1562, %v1554
        %v2539 = vpack.c.b16 %v1563, %v1555
        %v2540 = vpack.c.b16 %v1564, %v1556
        %v2541 = vpack.c.b16 %v1565, %v1557
        %v2542 = vpack.c.b16 %v1566, %v1558
        %v2543 = vpack.c.b16 %v1575, %v1567
        %v2544 = vpack.c.b16 %v1576, %v1568
        %v2545 = vpack.c.b16 %v1577, %v1569
        %v2546 = vpack.c.b16 %v1578, %v1570
        %v2547 = vpack.c.b16 %v1579, %v1571
        %v2548 = vpack.c.b16 %v1580, %v1572
        %v2549 = vpack.c.b16 %v1581, %v1573
        %v2550 = vpack.c.b16 %v1582, %v1574
        %v2551 = vpack.c.b16 %v1591, %v1583
        %v2552 = vpack.c.b16 %v1592, %v1584
        %v2553 = vpack.c.b16 %v1593, %v1585
        %v2554 = vpack.c.b16 %v1594, %v1586
        %v2555 = vpack.c.b16 %v1595, %v1587
        %v2556 = vpack.c.b16 %v1596, %v1588
        %v2557 = vpack.c.b16 %v1597, %v1589
        %v2558 = vpack.c.b16 %v1598, %v1590
        %v2559 = vpack.c.b16 %v1607, %v1599
        %v2560 = vpack.c.b16 %v1608, %v1600
        %v2561 = vpack.c.b16 %v1609, %v1601
        %v2562 = vpack.c.b16 %v1610, %v1602
        %v2563 = vpack.c.b16 %v1611, %v1603
        %v2564 = vpack.c.b16 %v1612, %v1604
        %v2565 = vpack.c.b16 %v1613, %v1605
        %v2566 = vpack.c.b16 %v1614, %v1606
        %v2567 = vpack.c.b16 %v1623, %v1615
        %v2568 = vpack.c.b16 %v1624, %v1616
        %v2569 = vpack.c.b16 %v1625, %v1617
        %v2570 = vpack.c.b16 %v1626, %v1618
        %v2571 = vpack.c.b16 %v1627, %v1619
        %v2572 = vpack.c.b16 %v1628, %v1620
        %v2573 = vpack.c.b16 %v1629, %v1621
        %v2574 = vpack.c.b16 %v1630, %v1622
        %v2575 = vpack.c.b16 %v1639, %v1631
        %v2576 = vpack.c.b16 %v1640, %v1632
        %v2577 = vpack.c.b16 %v1641, %v1633
        %v2578 = vpack.c.b16 %v1642, %v1634
        %v2579 = vpack.c.b16 %v1643, %v1635
        %v2580 = vpack.c.b16 %v1644, %v1636
        %v2581 = vpack.c.b16 %v1645, %v1637
        %v2582 = vpack.c.b16 %v1646, %v1638
        %v2583 = vpack.c.b16 %v1655, %v1647
        %v2584 = vpack.c.b16 %v1656, %v1648
        %v2585 = vpack.c.b16 %v1657, %v1649
        %v2586 = vpack.c.b16 %v1658, %v1650
        %v2587 = vpack.c.b16 %v1659, %v1651
        %v2588 = vpack.c.b16 %v1660, %v1652
        %v2589 = vpack.c.b16 %v1661, %v1653
        %v2590 = vpack.c.b16 %v1662, %v1654
        %v2591 = vpack.c.b16 %v1671, %v1663
        %v2592 = vpack.c.b16 %v1672, %v1664
        %v2593 = vpack.c.b16 %v1673, %v1665
        %v2594 = vpack.c.b16 %v1674, %v1666
        %v2595 = vpack.c.b16 %v1675, %v1667
        %v2596 = vpack.c.b16 %v1676, %v1668
        %v2597 = vpack.c.b16 %v1677, %v1669
        %v2598 = vpack.c.b16 %v1678, %v1670
        %v2599 = vpack.c.b16 %v1687, %v1679
        %v2600 = vpack.c.b16 %v1688, %v1680
        %v2601 = vpack.c.b16 %v1689, %v1681
        %v2602 = vpack.c.b16 %v1690, %v1682
        %v2603 = vpack.c.b16 %v1691, %v1683
        %v2604 = vpack.c.b16 %v1692, %v1684
        %v2605 = vpack.c.b16 %v1693, %v1685
        %v2606 = vpack.c.b16 %v1694, %v1686
        %v2607 = vpack.c.b16 %v1703, %v1695
        %v2608 = vpack.c.b16 %v1704, %v1696
        %v2609 = vpack.c.b16 %v1705, %v1697
        %v2610 = vpack.c.b16 %v1706, %v1698
        %v2611 = vpack.c.b16 %v1707, %v1699
        %v2612 = vpack.c.b16 %v1708, %v1700
        %v2613 = vpack.c.b16 %v1709, %v1701
        %v2614 = vpack.c.b16 %v1710, %v1702
        %v2615 = vpack.c.b16 %v1719, %v1711
        %v2616 = vpack.c.b16 %v1720, %v1712
        %v2617 = vpack.c.b16 %v1721, %v1713
        %v2618 = vpack.c.b16 %v1722, %v1714
        %v2619 = vpack.c.b16 %v1723, %v1715
        %v2620 = vpack.c.b16 %v1724, %v1716
        %v2621 = vpack.c.b16 %v1725, %v1717
        %v2622 = vpack.c.b16 %v1726, %v1718
        %v2623 = vpack.c.b16 %v1735, %v1727
        %v2624 = vpack.c.b16 %v1736, %v1728
        %v2625 = vpack.c.b16 %v1737, %v1729
        %v2626 = vpack.c.b16 %v1738, %v1730
        %v2627 = vpack.c.b16 %v1739, %v1731
        %v2628 = vpack.c.b16 %v1740, %v1732
        %v2629 = vpack.c.b16 %v1741, %v1733
        %v2630 = vpack.c.b16 %v1742, %v1734
        %v2631 = vpack.c.b16 %v1751, %v1743
        %v2632 = vpack.c.b16 %v1752, %v1744
        %v2633 = vpack.c.b16 %v1753, %v1745
        %v2634 = vpack.c.b16 %v1754, %v1746
        %v2635 = vpack.c.b16 %v1755, %v1747
        %v2636 = vpack.c.b16 %v1756, %v1748
        %v2637 = vpack.c.b16 %v1757, %v1749
        %v2638 = vpack.c.b16 %v1758, %v1750
        %v2639 = vpack.c.b16 %v1767, %v1759
        %v2640 = vpack.c.b16 %v1768, %v1760
        %v2641 = vpack.c.b16 %v1769, %v1761
        %v2642 = vpack.c.b16 %v1770, %v1762
        %v2643 = vpack.c.b16 %v1771, %v1763
        %v2644 = vpack.c.b16 %v1772, %v1764
        %v2645 = vpack.c.b16 %v1773, %v1765
        %v2646 = vpack.c.b16 %v1774, %v1766
        %v2647 = vpack.c.b16 %v1783, %v1775
        %v2648 = vpack.c.b16 %v1784, %v1776
        %v2649 = vpack.c.b16 %v1785, %v1777
        %v2650 = vpack.c.b16 %v1786, %v1778
        %v2651 = vpack.c.b16 %v1787, %v1779
        %v2652 = vpack.c.b16 %v1788, %v1780
        %v2653 = vpack.c.b16 %v1789, %v1781
        %v2654 = vpack.c.b16 %v1790, %v1782
        %v2655 = vpack.c.b16 %v1799, %v1791
        %v2656 = vpack.c.b16 %v1800, %v1792
        %v2657 = vpack.c.b16 %v1801, %v1793
        %v2658 = vpack.c.b16 %v1802, %v1794
        %v2659 = vpack.c.b16 %v1803, %v1795
        %v2660 = vpack.c.b16 %v1804, %v1796
        %v2661 = vpack.c.b16 %v1805, %v1797
        %v2662 = vpack.c.b16 %v1806, %v1798
        %v2663 = vpack.c.b16 %v1815, %v1807
        %v2664 = vpack.c.b16 %v1816, %v1808
        %v2665 = vpack.c.b16 %v1817, %v1809
        %v2666 = vpack.c.b16 %v1818, %v1810
        %v2667 = vpack.c.b16 %v1819, %v1811
        %v2668 = vpack.c.b16 %v1820, %v1812
        %v2669 = vpack.c.b16 %v1821, %v1813
        %v2670 = vpack.c.b16 %v1822, %v1814
        %v2671 = vpack.c.b16 %v1831, %v1823
        %v2672 = vpack.c.b16 %v1832, %v1824
        %v2673 = vpack.c.b16 %v1833, %v1825
        %v2674 = vpack.c.b16 %v1834, %v1826
        %v2675 = vpack.c.b16 %v1835, %v1827
        %v2676 = vpack.c.b16 %v1836, %v1828
        %v2677 = vpack.c.b16 %v1837, %v1829
        %v2678 = vpack.c.b16 %v1838, %v1830
        %v2679 = vpack.c.b16 %v1847, %v1839
        %v2680 = vpack.c.b16 %v1848, %v1840
        %v2681 = vpack.c.b16 %v1849, %v1841
        %v2682 = vpack.c.b16 %v1850, %v1842
        %v2683 = vpack.c.b16 %v1851, %v1843
        %v2684 = vpack.c.b16 %v1852, %v1844
        %v2685 = vpack.c.b16 %v1853, %v1845
        %v2686 = vpack.c.b16 %v1854, %v1846
        %v2687 = vpack.c.b16 %v1863, %v1855
        %v2688 = vpack.c.b16 %v1864, %v1856
        %v2689 = vpack.c.b16 %v1865, %v1857
        %v2690 = vpack.c.b16 %v1866, %v1858
        %v2691 = vpack.c.b16 %v1867, %v1859
        %v2692 = vpack.c.b16 %v1868, %v1860
        %v2693 = vpack.c.b16 %v1869, %v1861
        %v2694 = vpack.c.b16 %v1870, %v1862
        %v2695 = vpack.c.b16 %v1879, %v1871
        %v2696 = vpack.c.b16 %v1880, %v1872
        %v2697 = vpack.c.b16 %v1881, %v1873
        %v2698 = vpack.c.b16 %v1882, %v1874
        %v2699 = vpack.c.b16 %v1883, %v1875
        %v2700 = vpack.c.b16 %v1884, %v1876
        %v2701 = vpack.c.b16 %v1885, %v1877
        %v2702 = vpack.c.b16 %v1886, %v1878
        %v2703 = vpack.c.b16 %v1895, %v1887
        %v2704 = vpack.c.b16 %v1896, %v1888
        %v2705 = vpack.c.b16 %v1897, %v1889
        %v2706 = vpack.c.b16 %v1898, %v1890
        %v2707 = vpack.c.b16 %v1899, %v1891
        %v2708 = vpack.c.b16 %v1900, %v1892
        %v2709 = vpack.c.b16 %v1901, %v1893
        %v2710 = vpack.c.b16 %v1902, %v1894
        %v2711 = vpack.c.b16 %v1911, %v1903
        %v2712 = vpack.c.b16 %v1912, %v1904
        %v2713 = vpack.c.b16 %v1913, %v1905
        %v2714 = vpack.c.b16 %v1914, %v1906
        %v2715 = vpack.c.b16 %v1915, %v1907
        %v2716 = vpack.c.b16 %v1916, %v1908
        %v2717 = vpack.c.b16 %v1917, %v1909
        %v2718 = vpack.c.b16 %v1918, %v1910
        %v2719 = vpack.c.b16 %v1927, %v1919
        %v2720 = vpack.c.b16 %v1928, %v1920
        %v2721 = vpack.c.b16 %v1929, %v1921
        %v2722 = vpack.c.b16 %v1930, %v1922
        %v2723 = vpack.c.b16 %v1931, %v1923
        %v2724 = vpack.c.b16 %v1932, %v1924
        %v2725 = vpack.c.b16 %v1933, %v1925
        %v2726 = vpack.c.b16 %v1934, %v1926
        %v2727 = vpack.c.b16 %v1943, %v1935
        %v2728 = vpack.c.b16 %v1944, %v1936
        %v2729 = vpack.c.b16 %v1945, %v1937
        %v2730 = vpack.c.b16 %v1946, %v1938
        %v2731 = vpack.c.b16 %v1947, %v1939
        %v2732 = vpack.c.b16 %v1948, %v1940
        %v2733 = vpack.c.b16 %v1949, %v1941
        %v2734 = vpack.c.b16 %v1950, %v1942
        %v2735 = vpack.c.b16 %v1959, %v1951
        %v2736 = vpack.c.b16 %v1960, %v1952
        %v2737 = vpack.c.b16 %v1961, %v1953
        %v2738 = vpack.c.b16 %v1962, %v1954
        %v2739 = vpack.c.b16 %v1963, %v1955
        %v2740 = vpack.c.b16 %v1964, %v1956
        %v2741 = vpack.c.b16 %v1965, %v1957
        %v2742 = vpack.c.b16 %v1966, %v1958
        %v2743 = vpack.c.b16 %v1975, %v1967
        %v2744 = vpack.c.b16 %v1976, %v1968
        %v2745 = vpack.c.b16 %v1977, %v1969
        %v2746 = vpack.c.b16 %v1978, %v1970
        %v2747 = vpack.c.b16 %v1979, %v1971
        %v2748 = vpack.c.b16 %v1980, %v1972
        %v2749 = vpack.c.b16 %v1981, %v1973
        %v2750 = vpack.c.b16 %v1982, %v1974
        %v2751 = vpack.c.b16 %v1991, %v1983
        %v2752 = vpack.c.b16 %v1992, %v1984
        %v2753 = vpack.c.b16 %v1993, %v1985
        %v2754 = vpack.c.b16 %v1994, %v1986
        %v2755 = vpack.c.b16 %v1995, %v1987
        %v2756 = vpack.c.b16 %v1996, %v1988
        %v2757 = vpack.c.b16 %v1997, %v1989
        %v2758 = vpack.c.b16 %v1998, %v1990
        %v2759 = vpack.c.b16 %v2007, %v1999
        %v2760 = vpack.c.b16 %v2008, %v2000
        %v2761 = vpack.c.b16 %v2009, %v2001
        %v2762 = vpack.c.b16 %v2010, %v2002
        %v2763 = vpack.c.b16 %v2011, %v2003
        %v2764 = vpack.c.b16 %v2012, %v2004
        %v2765 = vpack.c.b16 %v2013, %v2005
        %v2766 = vpack.c.b16 %v2014, %v2006
        %v2767 = vpack.c.b16 %v2023, %v2015
        %v2768 = vpack.c.b16 %v2024, %v2016
        %v2769 = vpack.c.b16 %v2025, %v2017
        %v2770 = vpack.c.b16 %v2026, %v2018
        %v2771 = vpack.c.b16 %v2027, %v2019
        %v2772 = vpack.c.b16 %v2028, %v2020
        %v2773 = vpack.c.b16 %v2029, %v2021
        %v2774 = vpack.c.b16 %v2030, %v2022
        %v2775 = vpack.c.b16 %v2039, %v2031
        %v2776 = vpack.c.b16 %v2040, %v2032
        %v2777 = vpack.c.b16 %v2041, %v2033
        %v2778 = vpack.c.b16 %v2042, %v2034
        %v2779 = vpack.c.b16 %v2043, %v2035
        %v2780 = vpack.c.b16 %v2044, %v2036
        %v2781 = vpack.c.b16 %v2045, %v2037
        %v2782 = vpack.c.b16 %v2046, %v2038
        %v2783 = vpack.c.b16 %v2055, %v2047
        %v2784 = vpack.c.b16 %v2056, %v2048
        %v2785 = vpack.c.b16 %v2057, %v2049
        %v2786 = vpack.c.b16 %v2058, %v2050
        %v2787 = vpack.c.b16 %v2059, %v2051
        %v2788 = vpack.c.b16 %v2060, %v2052
        %v2789 = vpack.c.b16 %v2061, %v2053
        %v2790 = vpack.c.b16 %v2062, %v2054
        %v2791 = vpack.c.b16 %v2071, %v2063
        %v2792 = vpack.c.b16 %v2072, %v2064
        %v2793 = vpack.c.b16 %v2073, %v2065
        %v2794 = vpack.c.b16 %v2074, %v2066
        %v2795 = vpack.c.b16 %v2075, %v2067
        %v2796 = vpack.c.b16 %v2076, %v2068
        %v2797 = vpack.c.b16 %v2077, %v2069
        %v2798 = vpack.c.b16 %v2078, %v2070
        %v2799 = vpack.c.b16 %v2087, %v2079
        %v2800 = vpack.c.b16 %v2088, %v2080
        %v2801 = vpack.c.b16 %v2089, %v2081
        %v2802 = vpack.c.b16 %v2090, %v2082
        %v2803 = vpack.c.b16 %v2091, %v2083
        %v2804 = vpack.c.b16 %v2092, %v2084
        %v2805 = vpack.c.b16 %v2093, %v2085
        %v2806 = vpack.c.b16 %v2094, %v2086
        %v2807 = vpack.c.b16 %v2103, %v2095
        %v2808 = vpack.c.b16 %v2104, %v2096
        %v2809 = vpack.c.b16 %v2105, %v2097
        %v2810 = vpack.c.b16 %v2106, %v2098
        %v2811 = vpack.c.b16 %v2107, %v2099
        %v2812 = vpack.c.b16 %v2108, %v2100
        %v2813 = vpack.c.b16 %v2109, %v2101
        %v2814 = vpack.c.b16 %v2110, %v2102
        %v2815 = vpack.c.b16 %v2119, %v2111
        %v2816 = vpack.c.b16 %v2120, %v2112
        %v2817 = vpack.c.b16 %v2121, %v2113
        %v2818 = vpack.c.b16 %v2122, %v2114
        %v2819 = vpack.c.b16 %v2123, %v2115
        %v2820 = vpack.c.b16 %v2124, %v2116
        %v2821 = vpack.c.b16 %v2125, %v2117
        %v2822 = vpack.c.b16 %v2126, %v2118
        %v2823 = vpack.c.b16 %v2135, %v2127
        %v2824 = vpack.c.b16 %v2136, %v2128
        %v2825 = vpack.c.b16 %v2137, %v2129
        %v2826 = vpack.c.b16 %v2138, %v2130
        %v2827 = vpack.c.b16 %v2139, %v2131
        %v2828 = vpack.c.b16 %v2140, %v2132
        %v2829 = vpack.c.b16 %v2141, %v2133
        %v2830 = vpack.c.b16 %v2142, %v2134
        %v2831 = vpack.c.b16 %v2151, %v2143
        %v2832 = vpack.c.b16 %v2152, %v2144
        %v2833 = vpack.c.b16 %v2153, %v2145
        %v2834 = vpack.c.b16 %v2154, %v2146
        %v2835 = vpack.c.b16 %v2155, %v2147
        %v2836 = vpack.c.b16 %v2156, %v2148
        %v2837 = vpack.c.b16 %v2157, %v2149
        %v2838 = vpack.c.b16 %v2158, %v2150
        %v2839 = vpack.c.b16 %v2167, %v2159
        %v2840 = vpack.c.b16 %v2168, %v2160
        %v2841 = vpack.c.b16 %v2169, %v2161
        %v2842 = vpack.c.b16 %v2170, %v2162
        %v2843 = vpack.c.b16 %v2171, %v2163
        %v2844 = vpack.c.b16 %v2172, %v2164
        %v2845 = vpack.c.b16 %v2173, %v2165
        %v2846 = vpack.c.b16 %v2174, %v2166
        %v2847 = vpack.c.b16 %v2183, %v2175
        %v2848 = vpack.c.b16 %v2184, %v2176
        %v2849 = vpack.c.b16 %v2185, %v2177
        %v2850 = vpack.c.b16 %v2186, %v2178
        %v2851 = vpack.c.b16 %v2187, %v2179
        %v2852 = vpack.c.b16 %v2188, %v2180
        %v2853 = vpack.c.b16 %v2189, %v2181
        %v2854 = vpack.c.b16 %v2190, %v2182
        %v2855 = vpack.c.b16 %v2199, %v2191
        %v2856 = vpack.c.b16 %v2200, %v2192
        %v2857 = vpack.c.b16 %v2201, %v2193
        %v2858 = vpack.c.b16 %v2202, %v2194
        %v2859 = vpack.c.b16 %v2203, %v2195
        %v2860 = vpack.c.b16 %v2204, %v2196
        %v2861 = vpack.c.b16 %v2205, %v2197
        %v2862 = vpack.c.b16 %v2206, %v2198
        %v2863 = vpack.c.b16 %v2215, %v2207
        %v2864 = vpack.c.b16 %v2216, %v2208
        %v2865 = vpack.c.b16 %v2217, %v2209
        %v2866 = vpack.c.b16 %v2218, %v2210
        %v2867 = vpack.c.b16 %v2219, %v2211
        %v2868 = vpack.c.b16 %v2220, %v2212
        %v2869 = vpack.c.b16 %v2221, %v2213
        %v2870 = vpack.c.b16 %v2222, %v2214
        %v2871 = vpack.c.b16 %v2231, %v2223
        %v2872 = vpack.c.b16 %v2232, %v2224
        %v2873 = vpack.c.b16 %v2233, %v2225
        %v2874 = vpack.c.b16 %v2234, %v2226
        %v2875 = vpack.c.b16 %v2235, %v2227
        %v2876 = vpack.c.b16 %v2236, %v2228
        %v2877 = vpack.c.b16 %v2237, %v2229
        %v2878 = vpack.c.b16 %v2238, %v2230
        %v2879 = vpack.c.b16 %v2247, %v2239
        %v2880 = vpack.c.b16 %v2248, %v2240
        %v2881 = vpack.c.b16 %v2249, %v2241
        %v2882 = vpack.c.b16 %v2250, %v2242
        %v2883 = vpack.c.b16 %v2251, %v2243
        %v2884 = vpack.c.b16 %v2252, %v2244
        %v2885 = vpack.c.b16 %v2253, %v2245
        %v2886 = vpack.c.b16 %v2254, %v2246
        %v2887 = vpack.c.b16 %v2263, %v2255
        %v2888 = vpack.c.b16 %v2264, %v2256
        %v2889 = vpack.c.b16 %v2265, %v2257
        %v2890 = vpack.c.b16 %v2266, %v2258
        %v2891 = vpack.c.b16 %v2267, %v2259
        %v2892 = vpack.c.b16 %v2268, %v2260
        %v2893 = vpack.c.b16 %v2269, %v2261
        %v2894 = vpack.c.b16 %v2270, %v2262
        %v2895 = vpack.c.b16 %v2279, %v2271
        %v2896 = vpack.c.b16 %v2280, %v2272
        %v2897 = vpack.c.b16 %v2281, %v2273
        %v2898 = vpack.c.b16 %v2282, %v2274
        %v2899 = vpack.c.b16 %v2283, %v2275
        %v2900 = vpack.c.b16 %v2284, %v2276
        %v2901 = vpack.c.b16 %v2285, %v2277
        %v2902 = vpack.c.b16 %v2286, %v2278
        %v2903 = vpack.c.b16 %v2295, %v2287
        %v2904 = vpack.c.b16 %v2296, %v2288
        %v2905 = vpack.c.b16 %v2297, %v2289
        %v2906 = vpack.c.b16 %v2298, %v2290
        %v2907 = vpack.c.b16 %v2299, %v2291
        %v2908 = vpack.c.b16 %v2300, %v2292
        %v2909 = vpack.c.b16 %v2301, %v2293
        %v2910 = vpack.c.b16 %v2302, %v2294
        %v2911 = vpack.c.b16 %v2311, %v2303
        %v2912 = vpack.c.b16 %v2312, %v2304
        %v2913 = vpack.c.b16 %v2313, %v2305
        %v2914 = vpack.c.b16 %v2314, %v2306
        %v2915 = vpack.c.b16 %v2315, %v2307
        %v2916 = vpack.c.b16 %v2316, %v2308
        %v2917 = vpack.c.b16 %v2317, %v2309
        %v2918 = vpack.c.b16 %v2318, %v2310
        %v2919 = vpack.c.b16 %v2327, %v2319
        %v2920 = vpack.c.b16 %v2328, %v2320
        %v2921 = vpack.c.b16 %v2329, %v2321
        %v2922 = vpack.c.b16 %v2330, %v2322
        %v2923 = vpack.c.b16 %v2331, %v2323
        %v2924 = vpack.c.b16 %v2332, %v2324
        %v2925 = vpack.c.b16 %v2333, %v2325
        %v2926 = vpack.c.b16 %v2334, %v2326
        %v2927 = vpack.c.b16 %v2343, %v2335
        %v2928 = vpack.c.b16 %v2344, %v2336
        %v2929 = vpack.c.b16 %v2345, %v2337
        %v2930 = vpack.c.b16 %v2346, %v2338
        %v2931 = vpack.c.b16 %v2347, %v2339
        %v2932 = vpack.c.b16 %v2348, %v2340
        %v2933 = vpack.c.b16 %v2349, %v2341
        %v2934 = vpack.c.b16 %v2350, %v2342
        %v2935 = vpack.c.b16 %v2359, %v2351
        %v2936 = vpack.c.b16 %v2360, %v2352
        %v2937 = vpack.c.b16 %v2361, %v2353
        %v2938 = vpack.c.b16 %v2362, %v2354
        %v2939 = vpack.c.b16 %v2363, %v2355
        %v2940 = vpack.c.b16 %v2364, %v2356
        %v2941 = vpack.c.b16 %v2365, %v2357
        %v2942 = vpack.c.b16 %v2366, %v2358
        %v2943 = vpack.c.b16 %v2375, %v2367
        %v2944 = vpack.c.b16 %v2376, %v2368
        %v2945 = vpack.c.b16 %v2377, %v2369
        %v2946 = vpack.c.b16 %v2378, %v2370
        %v2947 = vpack.c.b16 %v2379, %v2371
        %v2948 = vpack.c.b16 %v2380, %v2372
        %v2949 = vpack.c.b16 %v2381, %v2373
        %v2950 = vpack.c.b16 %v2382, %v2374
        %v2951 = vpack.c.b16 %v2391, %v2383
        %v2952 = vpack.c.b16 %v2392, %v2384
        %v2953 = vpack.c.b16 %v2393, %v2385
        %v2954 = vpack.c.b16 %v2394, %v2386
        %v2955 = vpack.c.b16 %v2395, %v2387
        %v2956 = vpack.c.b16 %v2396, %v2388
        %v2957 = vpack.c.b16 %v2397, %v2389
        %v2958 = vpack.c.b16 %v2398, %v2390
        %v2959 = vpack.c.b16 %v2407, %v2399
        %v2960 = vpack.c.b16 %v2408, %v2400
        %v2961 = vpack.c.b16 %v2409, %v2401
        %v2962 = vpack.c.b16 %v2410, %v2402
        %v2963 = vpack.c.b16 %v2411, %v2403
        %v2964 = vpack.c.b16 %v2412, %v2404
        %v2965 = vpack.c.b16 %v2413, %v2405
        %v2966 = vpack.c.b16 %v2414, %v2406
        %v2967 = vpack.c.b16 %v2423, %v2415
        %v2968 = vpack.c.b16 %v2424, %v2416
        %v2969 = vpack.c.b16 %v2425, %v2417
        %v2970 = vpack.c.b16 %v2426, %v2418
        %v2971 = vpack.c.b16 %v2427, %v2419
        %v2972 = vpack.c.b16 %v2428, %v2420
        %v2973 = vpack.c.b16 %v2429, %v2421
        %v2974 = vpack.c.b16 %v2430, %v2422
        %v2975 = vpack.c.b16 %v2439, %v2431
        %v2976 = vpack.c.b16 %v2440, %v2432
        %v2977 = vpack.c.b16 %v2441, %v2433
        %v2978 = vpack.c.b16 %v2442, %v2434
        %v2979 = vpack.c.b16 %v2443, %v2435
        %v2980 = vpack.c.b16 %v2444, %v2436
        %v2981 = vpack.c.b16 %v2445, %v2437
        %v2982 = vpack.c.b16 %v2446, %v2438
        %v2983 = vpack.c.b16 %v2455, %v2447
        %v2984 = vpack.c.b16 %v2456, %v2448
        %v2985 = vpack.c.b16 %v2457, %v2449
        %v2986 = vpack.c.b16 %v2458, %v2450
        %v2987 = vpack.c.b16 %v2459, %v2451
        %v2988 = vpack.c.b16 %v2460, %v2452
        %v2989 = vpack.c.b16 %v2461, %v2453
        %v2990 = vpack.c.b16 %v2462, %v2454
        %v2991 = vpack.c.b16 %v2471, %v2463
        %v2992 = vpack.c.b16 %v2472, %v2464
        %v2993 = vpack.c.b16 %v2473, %v2465
        %v2994 = vpack.c.b16 %v2474, %v2466
        %v2995 = vpack.c.b16 %v2475, %v2467
        %v2996 = vpack.c.b16 %v2476, %v2468
        %v2997 = vpack.c.b16 %v2477, %v2469
        %v2998 = vpack.c.b16 %v2478, %v2470
        %v2999 = vpack.c.b16 %v2487, %v2479
        %v3000 = vpack.c.b16 %v2488, %v2480
        %v3001 = vpack.c.b16 %v2489, %v2481
        %v3002 = vpack.c.b16 %v2490, %v2482
        %v3003 = vpack.c.b16 %v2491, %v2483
        %v3004 = vpack.c.b16 %v2492, %v2484
        %v3005 = vpack.c.b16 %v2493, %v2485
        %v3006 = vpack.c.b16 %v2494, %v2486
        %3519 = vmatpush.bf16.msra.mxu0 %v2551
        %3520 = vmatpush.bf16.msra.mxu0 %v2543
        %3521 = vmatpush.bf16.msra.mxu0 %v2535
        %3522 = vmatpush.bf16.msra.mxu0 %v2527
        %3523 = vmatpush.bf16.msra.mxu0 %v2519
        %3524 = vmatpush.bf16.msra.mxu0 %v2511
        %3525 = vmatpush.bf16.msra.mxu0 %v2503
        %3526 = vmatpush.bf16.msra.mxu0 %v2495
        %3527 = vmatmul.bf16.gmra.mxu0 %v943
        %v3528 = vpop.f32.mrf.mxu0
        %v3529 = vadd.f32 %v903, %v3528
        %v3530 = vpop.f32.mrf.mxu0
        %v3531 = vadd.f32 %v903, %v3530
        %3532 = vdwg.mxu0
        %3533 = vmatpush.bf16.msra.mxu0 %v2615
        %3534 = vmatpush.bf16.msra.mxu0 %v2607
        %3535 = vmatpush.bf16.msra.mxu0 %v2599
        %3536 = vmatpush.bf16.msra.mxu0 %v2591
        %3537 = vmatpush.bf16.msra.mxu0 %v2583
        %3538 = vmatpush.bf16.msra.mxu0 %v2575
        %3539 = vmatpush.bf16.msra.mxu0 %v2567
        %3540 = vmatpush.bf16.msra.mxu0 %v2559
        %3541 = vmatmul.bf16.gmra.mxu0 %v944
        %v3542 = vpop.f32.mrf.mxu0
        %v3543 = vadd.f32 %v3529, %v3542
        %v3544 = vpop.f32.mrf.mxu0
        %v3545 = vadd.f32 %v3531, %v3544
        %3546 = vdwg.mxu0
        %3547 = vmatpush.bf16.msra.mxu0 %v2679
        %3548 = vmatpush.bf16.msra.mxu0 %v2671
        %3549 = vmatpush.bf16.msra.mxu0 %v2663
        %3550 = vmatpush.bf16.msra.mxu0 %v2655
        %3551 = vmatpush.bf16.msra.mxu0 %v2647
        %3552 = vmatpush.bf16.msra.mxu0 %v2639
        %3553 = vmatpush.bf16.msra.mxu0 %v2631
        %3554 = vmatpush.bf16.msra.mxu0 %v2623
        %3555 = vmatmul.bf16.gmra.mxu0 %v945
        %v3556 = vpop.f32.mrf.mxu0
        %v3557 = vadd.f32 %v3543, %v3556
        %v3558 = vpop.f32.mrf.mxu0
        %v3559 = vadd.f32 %v3545, %v3558
        %3560 = vdwg.mxu0
        %3561 = vmatpush.bf16.msra.mxu0 %v2743
        %3562 = vmatpush.bf16.msra.mxu0 %v2735
        %3563 = vmatpush.bf16.msra.mxu0 %v2727
        %3564 = vmatpush.bf16.msra.mxu0 %v2719
        %3565 = vmatpush.bf16.msra.mxu0 %v2711
        %3566 = vmatpush.bf16.msra.mxu0 %v2703
        %3567 = vmatpush.bf16.msra.mxu0 %v2695
        %3568 = vmatpush.bf16.msra.mxu0 %v2687
        %3569 = vmatmul.bf16.gmra.mxu0 %v946
        %v3570 = vpop.f32.mrf.mxu0
        %v3571 = vadd.f32 %v3557, %v3570
        %v3572 = vpop.f32.mrf.mxu0
        %v3573 = vadd.f32 %v3559, %v3572
        %3574 = vdwg.mxu0
        %3575 = vmatpush.bf16.msra.mxu0 %v2807
        %3576 = vmatpush.bf16.msra.mxu0 %v2799
        %3577 = vmatpush.bf16.msra.mxu0 %v2791
        %3578 = vmatpush.bf16.msra.mxu0 %v2783
        %3579 = vmatpush.bf16.msra.mxu0 %v2775
        %3580 = vmatpush.bf16.msra.mxu0 %v2767
        %3581 = vmatpush.bf16.msra.mxu0 %v2759
        %3582 = vmatpush.bf16.msra.mxu0 %v2751
        %3583 = vmatmul.bf16.gmra.mxu0 %v947
        %v3584 = vpop.f32.mrf.mxu0
        %v3585 = vadd.f32 %v3571, %v3584
        %v3586 = vpop.f32.mrf.mxu0
        %v3587 = vadd.f32 %v3573, %v3586
        %3588 = vdwg.mxu0
        %3589 = vmatpush.bf16.msra.mxu0 %v2871
        %3590 = vmatpush.bf16.msra.mxu0 %v2863
        %3591 = vmatpush.bf16.msra.mxu0 %v2855
        %3592 = vmatpush.bf16.msra.mxu0 %v2847
        %3593 = vmatpush.bf16.msra.mxu0 %v2839
        %3594 = vmatpush.bf16.msra.mxu0 %v2831
        %3595 = vmatpush.bf16.msra.mxu0 %v2823
        %3596 = vmatpush.bf16.msra.mxu0 %v2815
        %3597 = vmatmul.bf16.gmra.mxu0 %v948
        %v3598 = vpop.f32.mrf.mxu0
        %v3599 = vadd.f32 %v3585, %v3598
        %v3600 = vpop.f32.mrf.mxu0
        %v3601 = vadd.f32 %v3587, %v3600
        %3602 = vdwg.mxu0
        %3603 = vmatpush.bf16.msra.mxu0 %v2935
        %3604 = vmatpush.bf16.msra.mxu0 %v2927
        %3605 = vmatpush.bf16.msra.mxu0 %v2919
        %3606 = vmatpush.bf16.msra.mxu0 %v2911
        %3607 = vmatpush.bf16.msra.mxu0 %v2903
        %3608 = vmatpush.bf16.msra.mxu0 %v2895
        %3609 = vmatpush.bf16.msra.mxu0 %v2887
        %3610 = vmatpush.bf16.msra.mxu0 %v2879
        %3611 = vmatmul.bf16.gmra.mxu0 %v949
        %v3612 = vpop.f32.mrf.mxu0
        %v3613 = vadd.f32 %v3599, %v3612
        %v3614 = vpop.f32.mrf.mxu0
        %v3615 = vadd.f32 %v3601, %v3614
        %3616 = vdwg.mxu0
        %3617 = vmatpush.bf16.msra.mxu0 %v2999
        %3618 = vmatpush.bf16.msra.mxu0 %v2991
        %3619 = vmatpush.bf16.msra.mxu0 %v2983
        %3620 = vmatpush.bf16.msra.mxu0 %v2975
        %3621 = vmatpush.bf16.msra.mxu0 %v2967
        %3622 = vmatpush.bf16.msra.mxu0 %v2959
        %3623 = vmatpush.bf16.msra.mxu0 %v2951
        %3624 = vmatpush.bf16.msra.mxu0 %v2943
        %3625 = vmatmul.bf16.gmra.mxu0 %v950
        %v3626 = vpop.f32.mrf.mxu0
        %v3627 = vadd.f32 %v3613, %v3626
        %v3628 = vpop.f32.mrf.mxu0
        %v3629 = vadd.f32 %v3615, %v3628
        %3630 = vdwg.mxu0
        %3631 = vmatpush.bf16.msra.mxu0 %v2552
        %3632 = vmatpush.bf16.msra.mxu0 %v2544
        %3633 = vmatpush.bf16.msra.mxu0 %v2536
        %3634 = vmatpush.bf16.msra.mxu0 %v2528
        %3635 = vmatpush.bf16.msra.mxu0 %v2520
        %3636 = vmatpush.bf16.msra.mxu0 %v2512
        %3637 = vmatpush.bf16.msra.mxu0 %v2504
        %3638 = vmatpush.bf16.msra.mxu0 %v2496
        %3639 = vmatmul.bf16.gmra.mxu0 %v943
        %v3640 = vpop.f32.mrf.mxu0
        %v3641 = vadd.f32 %v904, %v3640
        %v3642 = vpop.f32.mrf.mxu0
        %v3643 = vadd.f32 %v904, %v3642
        %3644 = vdwg.mxu0
        %3645 = vmatpush.bf16.msra.mxu0 %v2616
        %3646 = vmatpush.bf16.msra.mxu0 %v2608
        %3647 = vmatpush.bf16.msra.mxu0 %v2600
        %3648 = vmatpush.bf16.msra.mxu0 %v2592
        %3649 = vmatpush.bf16.msra.mxu0 %v2584
        %3650 = vmatpush.bf16.msra.mxu0 %v2576
        %3651 = vmatpush.bf16.msra.mxu0 %v2568
        %3652 = vmatpush.bf16.msra.mxu0 %v2560
        %3653 = vmatmul.bf16.gmra.mxu0 %v944
        %v3654 = vpop.f32.mrf.mxu0
        %v3655 = vadd.f32 %v3641, %v3654
        %v3656 = vpop.f32.mrf.mxu0
        %v3657 = vadd.f32 %v3643, %v3656
        %3658 = vdwg.mxu0
        %3659 = vmatpush.bf16.msra.mxu0 %v2680
        %3660 = vmatpush.bf16.msra.mxu0 %v2672
        %3661 = vmatpush.bf16.msra.mxu0 %v2664
        %3662 = vmatpush.bf16.msra.mxu0 %v2656
        %3663 = vmatpush.bf16.msra.mxu0 %v2648
        %3664 = vmatpush.bf16.msra.mxu0 %v2640
        %3665 = vmatpush.bf16.msra.mxu0 %v2632
        %3666 = vmatpush.bf16.msra.mxu0 %v2624
        %3667 = vmatmul.bf16.gmra.mxu0 %v945
        %v3668 = vpop.f32.mrf.mxu0
        %v3669 = vadd.f32 %v3655, %v3668
        %v3670 = vpop.f32.mrf.mxu0
        %v3671 = vadd.f32 %v3657, %v3670
        %3672 = vdwg.mxu0
        %3673 = vmatpush.bf16.msra.mxu0 %v2744
        %3674 = vmatpush.bf16.msra.mxu0 %v2736
        %3675 = vmatpush.bf16.msra.mxu0 %v2728
        %3676 = vmatpush.bf16.msra.mxu0 %v2720
        %3677 = vmatpush.bf16.msra.mxu0 %v2712
        %3678 = vmatpush.bf16.msra.mxu0 %v2704
        %3679 = vmatpush.bf16.msra.mxu0 %v2696
        %3680 = vmatpush.bf16.msra.mxu0 %v2688
        %3681 = vmatmul.bf16.gmra.mxu0 %v946
        %v3682 = vpop.f32.mrf.mxu0
        %v3683 = vadd.f32 %v3669, %v3682
        %v3684 = vpop.f32.mrf.mxu0
        %v3685 = vadd.f32 %v3671, %v3684
        %3686 = vdwg.mxu0
        %3687 = vmatpush.bf16.msra.mxu0 %v2808
        %3688 = vmatpush.bf16.msra.mxu0 %v2800
        %3689 = vmatpush.bf16.msra.mxu0 %v2792
        %3690 = vmatpush.bf16.msra.mxu0 %v2784
        %3691 = vmatpush.bf16.msra.mxu0 %v2776
        %3692 = vmatpush.bf16.msra.mxu0 %v2768
        %3693 = vmatpush.bf16.msra.mxu0 %v2760
        %3694 = vmatpush.bf16.msra.mxu0 %v2752
        %3695 = vmatmul.bf16.gmra.mxu0 %v947
        %v3696 = vpop.f32.mrf.mxu0
        %v3697 = vadd.f32 %v3683, %v3696
        %v3698 = vpop.f32.mrf.mxu0
        %v3699 = vadd.f32 %v3685, %v3698
        %3700 = vdwg.mxu0
        %3701 = vmatpush.bf16.msra.mxu0 %v2872
        %3702 = vmatpush.bf16.msra.mxu0 %v2864
        %3703 = vmatpush.bf16.msra.mxu0 %v2856
        %3704 = vmatpush.bf16.msra.mxu0 %v2848
        %3705 = vmatpush.bf16.msra.mxu0 %v2840
        %3706 = vmatpush.bf16.msra.mxu0 %v2832
        %3707 = vmatpush.bf16.msra.mxu0 %v2824
        %3708 = vmatpush.bf16.msra.mxu0 %v2816
        %3709 = vmatmul.bf16.gmra.mxu0 %v948
        %v3710 = vpop.f32.mrf.mxu0
        %v3711 = vadd.f32 %v3697, %v3710
        %v3712 = vpop.f32.mrf.mxu0
        %v3713 = vadd.f32 %v3699, %v3712
        %3714 = vdwg.mxu0
        %3715 = vmatpush.bf16.msra.mxu0 %v2936
        %3716 = vmatpush.bf16.msra.mxu0 %v2928
        %3717 = vmatpush.bf16.msra.mxu0 %v2920
        %3718 = vmatpush.bf16.msra.mxu0 %v2912
        %3719 = vmatpush.bf16.msra.mxu0 %v2904
        %3720 = vmatpush.bf16.msra.mxu0 %v2896
        %3721 = vmatpush.bf16.msra.mxu0 %v2888
        %3722 = vmatpush.bf16.msra.mxu0 %v2880
        %3723 = vmatmul.bf16.gmra.mxu0 %v949
        %v3724 = vpop.f32.mrf.mxu0
        %v3725 = vadd.f32 %v3711, %v3724
        %v3726 = vpop.f32.mrf.mxu0
        %v3727 = vadd.f32 %v3713, %v3726
        %3728 = vdwg.mxu0
        %3729 = vmatpush.bf16.msra.mxu0 %v3000
        %3730 = vmatpush.bf16.msra.mxu0 %v2992
        %3731 = vmatpush.bf16.msra.mxu0 %v2984
        %3732 = vmatpush.bf16.msra.mxu0 %v2976
        %3733 = vmatpush.bf16.msra.mxu0 %v2968
        %3734 = vmatpush.bf16.msra.mxu0 %v2960
        %3735 = vmatpush.bf16.msra.mxu0 %v2952
        %3736 = vmatpush.bf16.msra.mxu0 %v2944
        %3737 = vmatmul.bf16.gmra.mxu0 %v950
        %v3738 = vpop.f32.mrf.mxu0
        %v3739 = vadd.f32 %v3725, %v3738
        %v3740 = vpop.f32.mrf.mxu0
        %v3741 = vadd.f32 %v3727, %v3740
        %3742 = vdwg.mxu0
        %3743 = vmatpush.bf16.msra.mxu0 %v2553
        %3744 = vmatpush.bf16.msra.mxu0 %v2545
        %3745 = vmatpush.bf16.msra.mxu0 %v2537
        %3746 = vmatpush.bf16.msra.mxu0 %v2529
        %3747 = vmatpush.bf16.msra.mxu0 %v2521
        %3748 = vmatpush.bf16.msra.mxu0 %v2513
        %3749 = vmatpush.bf16.msra.mxu0 %v2505
        %3750 = vmatpush.bf16.msra.mxu0 %v2497
        %3751 = vmatmul.bf16.gmra.mxu0 %v943
        %v3752 = vpop.f32.mrf.mxu0
        %v3753 = vadd.f32 %v905, %v3752
        %v3754 = vpop.f32.mrf.mxu0
        %v3755 = vadd.f32 %v905, %v3754
        %3756 = vdwg.mxu0
        %3757 = vmatpush.bf16.msra.mxu0 %v2617
        %3758 = vmatpush.bf16.msra.mxu0 %v2609
        %3759 = vmatpush.bf16.msra.mxu0 %v2601
        %3760 = vmatpush.bf16.msra.mxu0 %v2593
        %3761 = vmatpush.bf16.msra.mxu0 %v2585
        %3762 = vmatpush.bf16.msra.mxu0 %v2577
        %3763 = vmatpush.bf16.msra.mxu0 %v2569
        %3764 = vmatpush.bf16.msra.mxu0 %v2561
        %3765 = vmatmul.bf16.gmra.mxu0 %v944
        %v3766 = vpop.f32.mrf.mxu0
        %v3767 = vadd.f32 %v3753, %v3766
        %v3768 = vpop.f32.mrf.mxu0
        %v3769 = vadd.f32 %v3755, %v3768
        %3770 = vdwg.mxu0
        %3771 = vmatpush.bf16.msra.mxu0 %v2681
        %3772 = vmatpush.bf16.msra.mxu0 %v2673
        %3773 = vmatpush.bf16.msra.mxu0 %v2665
        %3774 = vmatpush.bf16.msra.mxu0 %v2657
        %3775 = vmatpush.bf16.msra.mxu0 %v2649
        %3776 = vmatpush.bf16.msra.mxu0 %v2641
        %3777 = vmatpush.bf16.msra.mxu0 %v2633
        %3778 = vmatpush.bf16.msra.mxu0 %v2625
        %3779 = vmatmul.bf16.gmra.mxu0 %v945
        %v3780 = vpop.f32.mrf.mxu0
        %v3781 = vadd.f32 %v3767, %v3780
        %v3782 = vpop.f32.mrf.mxu0
        %v3783 = vadd.f32 %v3769, %v3782
        %3784 = vdwg.mxu0
        %3785 = vmatpush.bf16.msra.mxu0 %v2745
        %3786 = vmatpush.bf16.msra.mxu0 %v2737
        %3787 = vmatpush.bf16.msra.mxu0 %v2729
        %3788 = vmatpush.bf16.msra.mxu0 %v2721
        %3789 = vmatpush.bf16.msra.mxu0 %v2713
        %3790 = vmatpush.bf16.msra.mxu0 %v2705
        %3791 = vmatpush.bf16.msra.mxu0 %v2697
        %3792 = vmatpush.bf16.msra.mxu0 %v2689
        %3793 = vmatmul.bf16.gmra.mxu0 %v946
        %v3794 = vpop.f32.mrf.mxu0
        %v3795 = vadd.f32 %v3781, %v3794
        %v3796 = vpop.f32.mrf.mxu0
        %v3797 = vadd.f32 %v3783, %v3796
        %3798 = vdwg.mxu0
        %3799 = vmatpush.bf16.msra.mxu0 %v2809
        %3800 = vmatpush.bf16.msra.mxu0 %v2801
        %3801 = vmatpush.bf16.msra.mxu0 %v2793
        %3802 = vmatpush.bf16.msra.mxu0 %v2785
        %3803 = vmatpush.bf16.msra.mxu0 %v2777
        %3804 = vmatpush.bf16.msra.mxu0 %v2769
        %3805 = vmatpush.bf16.msra.mxu0 %v2761
        %3806 = vmatpush.bf16.msra.mxu0 %v2753
        %3807 = vmatmul.bf16.gmra.mxu0 %v947
        %v3808 = vpop.f32.mrf.mxu0
        %v3809 = vadd.f32 %v3795, %v3808
        %v3810 = vpop.f32.mrf.mxu0
        %v3811 = vadd.f32 %v3797, %v3810
        %3812 = vdwg.mxu0
        %3813 = vmatpush.bf16.msra.mxu0 %v2873
        %3814 = vmatpush.bf16.msra.mxu0 %v2865
        %3815 = vmatpush.bf16.msra.mxu0 %v2857
        %3816 = vmatpush.bf16.msra.mxu0 %v2849
        %3817 = vmatpush.bf16.msra.mxu0 %v2841
        %3818 = vmatpush.bf16.msra.mxu0 %v2833
        %3819 = vmatpush.bf16.msra.mxu0 %v2825
        %3820 = vmatpush.bf16.msra.mxu0 %v2817
        %3821 = vmatmul.bf16.gmra.mxu0 %v948
        %v3822 = vpop.f32.mrf.mxu0
        %v3823 = vadd.f32 %v3809, %v3822
        %v3824 = vpop.f32.mrf.mxu0
        %v3825 = vadd.f32 %v3811, %v3824
        %3826 = vdwg.mxu0
        %3827 = vmatpush.bf16.msra.mxu0 %v2937
        %3828 = vmatpush.bf16.msra.mxu0 %v2929
        %3829 = vmatpush.bf16.msra.mxu0 %v2921
        %3830 = vmatpush.bf16.msra.mxu0 %v2913
        %3831 = vmatpush.bf16.msra.mxu0 %v2905
        %3832 = vmatpush.bf16.msra.mxu0 %v2897
        %3833 = vmatpush.bf16.msra.mxu0 %v2889
        %3834 = vmatpush.bf16.msra.mxu0 %v2881
        %3835 = vmatmul.bf16.gmra.mxu0 %v949
        %v3836 = vpop.f32.mrf.mxu0
        %v3837 = vadd.f32 %v3823, %v3836
        %v3838 = vpop.f32.mrf.mxu0
        %v3839 = vadd.f32 %v3825, %v3838
        %3840 = vdwg.mxu0
        %3841 = vmatpush.bf16.msra.mxu0 %v3001
        %3842 = vmatpush.bf16.msra.mxu0 %v2993
        %3843 = vmatpush.bf16.msra.mxu0 %v2985
        %3844 = vmatpush.bf16.msra.mxu0 %v2977
        %3845 = vmatpush.bf16.msra.mxu0 %v2969
        %3846 = vmatpush.bf16.msra.mxu0 %v2961
        %3847 = vmatpush.bf16.msra.mxu0 %v2953
        %3848 = vmatpush.bf16.msra.mxu0 %v2945
        %3849 = vmatmul.bf16.gmra.mxu0 %v950
        %v3850 = vpop.f32.mrf.mxu0
        %v3851 = vadd.f32 %v3837, %v3850
        %v3852 = vpop.f32.mrf.mxu0
        %v3853 = vadd.f32 %v3839, %v3852
        %3854 = vdwg.mxu0
        %3855 = vmatpush.bf16.msra.mxu0 %v2554
        %3856 = vmatpush.bf16.msra.mxu0 %v2546
        %3857 = vmatpush.bf16.msra.mxu0 %v2538
        %3858 = vmatpush.bf16.msra.mxu0 %v2530
        %3859 = vmatpush.bf16.msra.mxu0 %v2522
        %3860 = vmatpush.bf16.msra.mxu0 %v2514
        %3861 = vmatpush.bf16.msra.mxu0 %v2506
        %3862 = vmatpush.bf16.msra.mxu0 %v2498
        %3863 = vmatmul.bf16.gmra.mxu0 %v943
        %v3864 = vpop.f32.mrf.mxu0
        %v3865 = vadd.f32 %v906, %v3864
        %v3866 = vpop.f32.mrf.mxu0
        %v3867 = vadd.f32 %v906, %v3866
        %3868 = vdwg.mxu0
        %3869 = vmatpush.bf16.msra.mxu0 %v2618
        %3870 = vmatpush.bf16.msra.mxu0 %v2610
        %3871 = vmatpush.bf16.msra.mxu0 %v2602
        %3872 = vmatpush.bf16.msra.mxu0 %v2594
        %3873 = vmatpush.bf16.msra.mxu0 %v2586
        %3874 = vmatpush.bf16.msra.mxu0 %v2578
        %3875 = vmatpush.bf16.msra.mxu0 %v2570
        %3876 = vmatpush.bf16.msra.mxu0 %v2562
        %3877 = vmatmul.bf16.gmra.mxu0 %v944
        %v3878 = vpop.f32.mrf.mxu0
        %v3879 = vadd.f32 %v3865, %v3878
        %v3880 = vpop.f32.mrf.mxu0
        %v3881 = vadd.f32 %v3867, %v3880
        %3882 = vdwg.mxu0
        %3883 = vmatpush.bf16.msra.mxu0 %v2682
        %3884 = vmatpush.bf16.msra.mxu0 %v2674
        %3885 = vmatpush.bf16.msra.mxu0 %v2666
        %3886 = vmatpush.bf16.msra.mxu0 %v2658
        %3887 = vmatpush.bf16.msra.mxu0 %v2650
        %3888 = vmatpush.bf16.msra.mxu0 %v2642
        %3889 = vmatpush.bf16.msra.mxu0 %v2634
        %3890 = vmatpush.bf16.msra.mxu0 %v2626
        %3891 = vmatmul.bf16.gmra.mxu0 %v945
        %v3892 = vpop.f32.mrf.mxu0
        %v3893 = vadd.f32 %v3879, %v3892
        %v3894 = vpop.f32.mrf.mxu0
        %v3895 = vadd.f32 %v3881, %v3894
        %3896 = vdwg.mxu0
        %3897 = vmatpush.bf16.msra.mxu0 %v2746
        %3898 = vmatpush.bf16.msra.mxu0 %v2738
        %3899 = vmatpush.bf16.msra.mxu0 %v2730
        %3900 = vmatpush.bf16.msra.mxu0 %v2722
        %3901 = vmatpush.bf16.msra.mxu0 %v2714
        %3902 = vmatpush.bf16.msra.mxu0 %v2706
        %3903 = vmatpush.bf16.msra.mxu0 %v2698
        %3904 = vmatpush.bf16.msra.mxu0 %v2690
        %3905 = vmatmul.bf16.gmra.mxu0 %v946
        %v3906 = vpop.f32.mrf.mxu0
        %v3907 = vadd.f32 %v3893, %v3906
        %v3908 = vpop.f32.mrf.mxu0
        %v3909 = vadd.f32 %v3895, %v3908
        %3910 = vdwg.mxu0
        %3911 = vmatpush.bf16.msra.mxu0 %v2810
        %3912 = vmatpush.bf16.msra.mxu0 %v2802
        %3913 = vmatpush.bf16.msra.mxu0 %v2794
        %3914 = vmatpush.bf16.msra.mxu0 %v2786
        %3915 = vmatpush.bf16.msra.mxu0 %v2778
        %3916 = vmatpush.bf16.msra.mxu0 %v2770
        %3917 = vmatpush.bf16.msra.mxu0 %v2762
        %3918 = vmatpush.bf16.msra.mxu0 %v2754
        %3919 = vmatmul.bf16.gmra.mxu0 %v947
        %v3920 = vpop.f32.mrf.mxu0
        %v3921 = vadd.f32 %v3907, %v3920
        %v3922 = vpop.f32.mrf.mxu0
        %v3923 = vadd.f32 %v3909, %v3922
        %3924 = vdwg.mxu0
        %3925 = vmatpush.bf16.msra.mxu0 %v2874
        %3926 = vmatpush.bf16.msra.mxu0 %v2866
        %3927 = vmatpush.bf16.msra.mxu0 %v2858
        %3928 = vmatpush.bf16.msra.mxu0 %v2850
        %3929 = vmatpush.bf16.msra.mxu0 %v2842
        %3930 = vmatpush.bf16.msra.mxu0 %v2834
        %3931 = vmatpush.bf16.msra.mxu0 %v2826
        %3932 = vmatpush.bf16.msra.mxu0 %v2818
        %3933 = vmatmul.bf16.gmra.mxu0 %v948
        %v3934 = vpop.f32.mrf.mxu0
        %v3935 = vadd.f32 %v3921, %v3934
        %v3936 = vpop.f32.mrf.mxu0
        %v3937 = vadd.f32 %v3923, %v3936
        %3938 = vdwg.mxu0
        %3939 = vmatpush.bf16.msra.mxu0 %v2938
        %3940 = vmatpush.bf16.msra.mxu0 %v2930
        %3941 = vmatpush.bf16.msra.mxu0 %v2922
        %3942 = vmatpush.bf16.msra.mxu0 %v2914
        %3943 = vmatpush.bf16.msra.mxu0 %v2906
        %3944 = vmatpush.bf16.msra.mxu0 %v2898
        %3945 = vmatpush.bf16.msra.mxu0 %v2890
        %3946 = vmatpush.bf16.msra.mxu0 %v2882
        %3947 = vmatmul.bf16.gmra.mxu0 %v949
        %v3948 = vpop.f32.mrf.mxu0
        %v3949 = vadd.f32 %v3935, %v3948
        %v3950 = vpop.f32.mrf.mxu0
        %v3951 = vadd.f32 %v3937, %v3950
        %3952 = vdwg.mxu0
        %3953 = vmatpush.bf16.msra.mxu0 %v3002
        %3954 = vmatpush.bf16.msra.mxu0 %v2994
        %3955 = vmatpush.bf16.msra.mxu0 %v2986
        %3956 = vmatpush.bf16.msra.mxu0 %v2978
        %3957 = vmatpush.bf16.msra.mxu0 %v2970
        %3958 = vmatpush.bf16.msra.mxu0 %v2962
        %3959 = vmatpush.bf16.msra.mxu0 %v2954
        %3960 = vmatpush.bf16.msra.mxu0 %v2946
        %3961 = vmatmul.bf16.gmra.mxu0 %v950
        %v3962 = vpop.f32.mrf.mxu0
        %v3963 = vadd.f32 %v3949, %v3962
        %v3964 = vpop.f32.mrf.mxu0
        %v3965 = vadd.f32 %v3951, %v3964
        %3966 = vdwg.mxu0
        %3967 = vmatpush.bf16.msra.mxu0 %v2555
        %3968 = vmatpush.bf16.msra.mxu0 %v2547
        %3969 = vmatpush.bf16.msra.mxu0 %v2539
        %3970 = vmatpush.bf16.msra.mxu0 %v2531
        %3971 = vmatpush.bf16.msra.mxu0 %v2523
        %3972 = vmatpush.bf16.msra.mxu0 %v2515
        %3973 = vmatpush.bf16.msra.mxu0 %v2507
        %3974 = vmatpush.bf16.msra.mxu0 %v2499
        %3975 = vmatmul.bf16.gmra.mxu0 %v943
        %v3976 = vpop.f32.mrf.mxu0
        %v3977 = vadd.f32 %v907, %v3976
        %v3978 = vpop.f32.mrf.mxu0
        %v3979 = vadd.f32 %v907, %v3978
        %3980 = vdwg.mxu0
        %3981 = vmatpush.bf16.msra.mxu0 %v2619
        %3982 = vmatpush.bf16.msra.mxu0 %v2611
        %3983 = vmatpush.bf16.msra.mxu0 %v2603
        %3984 = vmatpush.bf16.msra.mxu0 %v2595
        %3985 = vmatpush.bf16.msra.mxu0 %v2587
        %3986 = vmatpush.bf16.msra.mxu0 %v2579
        %3987 = vmatpush.bf16.msra.mxu0 %v2571
        %3988 = vmatpush.bf16.msra.mxu0 %v2563
        %3989 = vmatmul.bf16.gmra.mxu0 %v944
        %v3990 = vpop.f32.mrf.mxu0
        %v3991 = vadd.f32 %v3977, %v3990
        %v3992 = vpop.f32.mrf.mxu0
        %v3993 = vadd.f32 %v3979, %v3992
        %3994 = vdwg.mxu0
        %3995 = vmatpush.bf16.msra.mxu0 %v2683
        %3996 = vmatpush.bf16.msra.mxu0 %v2675
        %3997 = vmatpush.bf16.msra.mxu0 %v2667
        %3998 = vmatpush.bf16.msra.mxu0 %v2659
        %3999 = vmatpush.bf16.msra.mxu0 %v2651
        %4000 = vmatpush.bf16.msra.mxu0 %v2643
        %4001 = vmatpush.bf16.msra.mxu0 %v2635
        %4002 = vmatpush.bf16.msra.mxu0 %v2627
        %4003 = vmatmul.bf16.gmra.mxu0 %v945
        %v4004 = vpop.f32.mrf.mxu0
        %v4005 = vadd.f32 %v3991, %v4004
        %v4006 = vpop.f32.mrf.mxu0
        %v4007 = vadd.f32 %v3993, %v4006
        %4008 = vdwg.mxu0
        %4009 = vmatpush.bf16.msra.mxu0 %v2747
        %4010 = vmatpush.bf16.msra.mxu0 %v2739
        %4011 = vmatpush.bf16.msra.mxu0 %v2731
        %4012 = vmatpush.bf16.msra.mxu0 %v2723
        %4013 = vmatpush.bf16.msra.mxu0 %v2715
        %4014 = vmatpush.bf16.msra.mxu0 %v2707
        %4015 = vmatpush.bf16.msra.mxu0 %v2699
        %4016 = vmatpush.bf16.msra.mxu0 %v2691
        %4017 = vmatmul.bf16.gmra.mxu0 %v946
        %v4018 = vpop.f32.mrf.mxu0
        %v4019 = vadd.f32 %v4005, %v4018
        %v4020 = vpop.f32.mrf.mxu0
        %v4021 = vadd.f32 %v4007, %v4020
        %4022 = vdwg.mxu0
        %4023 = vmatpush.bf16.msra.mxu0 %v2811
        %4024 = vmatpush.bf16.msra.mxu0 %v2803
        %4025 = vmatpush.bf16.msra.mxu0 %v2795
        %4026 = vmatpush.bf16.msra.mxu0 %v2787
        %4027 = vmatpush.bf16.msra.mxu0 %v2779
        %4028 = vmatpush.bf16.msra.mxu0 %v2771
        %4029 = vmatpush.bf16.msra.mxu0 %v2763
        %4030 = vmatpush.bf16.msra.mxu0 %v2755
        %4031 = vmatmul.bf16.gmra.mxu0 %v947
        %v4032 = vpop.f32.mrf.mxu0
        %v4033 = vadd.f32 %v4019, %v4032
        %v4034 = vpop.f32.mrf.mxu0
        %v4035 = vadd.f32 %v4021, %v4034
        %4036 = vdwg.mxu0
        %4037 = vmatpush.bf16.msra.mxu0 %v2875
        %4038 = vmatpush.bf16.msra.mxu0 %v2867
        %4039 = vmatpush.bf16.msra.mxu0 %v2859
        %4040 = vmatpush.bf16.msra.mxu0 %v2851
        %4041 = vmatpush.bf16.msra.mxu0 %v2843
        %4042 = vmatpush.bf16.msra.mxu0 %v2835
        %4043 = vmatpush.bf16.msra.mxu0 %v2827
        %4044 = vmatpush.bf16.msra.mxu0 %v2819
        %4045 = vmatmul.bf16.gmra.mxu0 %v948
        %v4046 = vpop.f32.mrf.mxu0
        %v4047 = vadd.f32 %v4033, %v4046
        %v4048 = vpop.f32.mrf.mxu0
        %v4049 = vadd.f32 %v4035, %v4048
        %4050 = vdwg.mxu0
        %4051 = vmatpush.bf16.msra.mxu0 %v2939
        %4052 = vmatpush.bf16.msra.mxu0 %v2931
        %4053 = vmatpush.bf16.msra.mxu0 %v2923
        %4054 = vmatpush.bf16.msra.mxu0 %v2915
        %4055 = vmatpush.bf16.msra.mxu0 %v2907
        %4056 = vmatpush.bf16.msra.mxu0 %v2899
        %4057 = vmatpush.bf16.msra.mxu0 %v2891
        %4058 = vmatpush.bf16.msra.mxu0 %v2883
        %4059 = vmatmul.bf16.gmra.mxu0 %v949
        %v4060 = vpop.f32.mrf.mxu0
        %v4061 = vadd.f32 %v4047, %v4060
        %v4062 = vpop.f32.mrf.mxu0
        %v4063 = vadd.f32 %v4049, %v4062
        %4064 = vdwg.mxu0
        %4065 = vmatpush.bf16.msra.mxu0 %v3003
        %4066 = vmatpush.bf16.msra.mxu0 %v2995
        %4067 = vmatpush.bf16.msra.mxu0 %v2987
        %4068 = vmatpush.bf16.msra.mxu0 %v2979
        %4069 = vmatpush.bf16.msra.mxu0 %v2971
        %4070 = vmatpush.bf16.msra.mxu0 %v2963
        %4071 = vmatpush.bf16.msra.mxu0 %v2955
        %4072 = vmatpush.bf16.msra.mxu0 %v2947
        %4073 = vmatmul.bf16.gmra.mxu0 %v950
        %v4074 = vpop.f32.mrf.mxu0
        %v4075 = vadd.f32 %v4061, %v4074
        %v4076 = vpop.f32.mrf.mxu0
        %v4077 = vadd.f32 %v4063, %v4076
        %4078 = vdwg.mxu0
        %4079 = vmatpush.bf16.msra.mxu0 %v2556
        %4080 = vmatpush.bf16.msra.mxu0 %v2548
        %4081 = vmatpush.bf16.msra.mxu0 %v2540
        %4082 = vmatpush.bf16.msra.mxu0 %v2532
        %4083 = vmatpush.bf16.msra.mxu0 %v2524
        %4084 = vmatpush.bf16.msra.mxu0 %v2516
        %4085 = vmatpush.bf16.msra.mxu0 %v2508
        %4086 = vmatpush.bf16.msra.mxu0 %v2500
        %4087 = vmatmul.bf16.gmra.mxu0 %v943
        %v4088 = vpop.f32.mrf.mxu0
        %v4089 = vadd.f32 %v908, %v4088
        %v4090 = vpop.f32.mrf.mxu0
        %v4091 = vadd.f32 %v908, %v4090
        %4092 = vdwg.mxu0
        %4093 = vmatpush.bf16.msra.mxu0 %v2620
        %4094 = vmatpush.bf16.msra.mxu0 %v2612
        %4095 = vmatpush.bf16.msra.mxu0 %v2604
        %4096 = vmatpush.bf16.msra.mxu0 %v2596
        %4097 = vmatpush.bf16.msra.mxu0 %v2588
        %4098 = vmatpush.bf16.msra.mxu0 %v2580
        %4099 = vmatpush.bf16.msra.mxu0 %v2572
        %4100 = vmatpush.bf16.msra.mxu0 %v2564
        %4101 = vmatmul.bf16.gmra.mxu0 %v944
        %v4102 = vpop.f32.mrf.mxu0
        %v4103 = vadd.f32 %v4089, %v4102
        %v4104 = vpop.f32.mrf.mxu0
        %v4105 = vadd.f32 %v4091, %v4104
        %4106 = vdwg.mxu0
        %4107 = vmatpush.bf16.msra.mxu0 %v2684
        %4108 = vmatpush.bf16.msra.mxu0 %v2676
        %4109 = vmatpush.bf16.msra.mxu0 %v2668
        %4110 = vmatpush.bf16.msra.mxu0 %v2660
        %4111 = vmatpush.bf16.msra.mxu0 %v2652
        %4112 = vmatpush.bf16.msra.mxu0 %v2644
        %4113 = vmatpush.bf16.msra.mxu0 %v2636
        %4114 = vmatpush.bf16.msra.mxu0 %v2628
        %4115 = vmatmul.bf16.gmra.mxu0 %v945
        %v4116 = vpop.f32.mrf.mxu0
        %v4117 = vadd.f32 %v4103, %v4116
        %v4118 = vpop.f32.mrf.mxu0
        %v4119 = vadd.f32 %v4105, %v4118
        %4120 = vdwg.mxu0
        %4121 = vmatpush.bf16.msra.mxu0 %v2748
        %4122 = vmatpush.bf16.msra.mxu0 %v2740
        %4123 = vmatpush.bf16.msra.mxu0 %v2732
        %4124 = vmatpush.bf16.msra.mxu0 %v2724
        %4125 = vmatpush.bf16.msra.mxu0 %v2716
        %4126 = vmatpush.bf16.msra.mxu0 %v2708
        %4127 = vmatpush.bf16.msra.mxu0 %v2700
        %4128 = vmatpush.bf16.msra.mxu0 %v2692
        %4129 = vmatmul.bf16.gmra.mxu0 %v946
        %v4130 = vpop.f32.mrf.mxu0
        %v4131 = vadd.f32 %v4117, %v4130
        %v4132 = vpop.f32.mrf.mxu0
        %v4133 = vadd.f32 %v4119, %v4132
        %4134 = vdwg.mxu0
        %4135 = vmatpush.bf16.msra.mxu0 %v2812
        %4136 = vmatpush.bf16.msra.mxu0 %v2804
        %4137 = vmatpush.bf16.msra.mxu0 %v2796
        %4138 = vmatpush.bf16.msra.mxu0 %v2788
        %4139 = vmatpush.bf16.msra.mxu0 %v2780
        %4140 = vmatpush.bf16.msra.mxu0 %v2772
        %4141 = vmatpush.bf16.msra.mxu0 %v2764
        %4142 = vmatpush.bf16.msra.mxu0 %v2756
        %4143 = vmatmul.bf16.gmra.mxu0 %v947
        %v4144 = vpop.f32.mrf.mxu0
        %v4145 = vadd.f32 %v4131, %v4144
        %v4146 = vpop.f32.mrf.mxu0
        %v4147 = vadd.f32 %v4133, %v4146
        %4148 = vdwg.mxu0
        %4149 = vmatpush.bf16.msra.mxu0 %v2876
        %4150 = vmatpush.bf16.msra.mxu0 %v2868
        %4151 = vmatpush.bf16.msra.mxu0 %v2860
        %4152 = vmatpush.bf16.msra.mxu0 %v2852
        %4153 = vmatpush.bf16.msra.mxu0 %v2844
        %4154 = vmatpush.bf16.msra.mxu0 %v2836
        %4155 = vmatpush.bf16.msra.mxu0 %v2828
        %4156 = vmatpush.bf16.msra.mxu0 %v2820
        %4157 = vmatmul.bf16.gmra.mxu0 %v948
        %v4158 = vpop.f32.mrf.mxu0
        %v4159 = vadd.f32 %v4145, %v4158
        %v4160 = vpop.f32.mrf.mxu0
        %v4161 = vadd.f32 %v4147, %v4160
        %4162 = vdwg.mxu0
        %4163 = vmatpush.bf16.msra.mxu0 %v2940
        %4164 = vmatpush.bf16.msra.mxu0 %v2932
        %4165 = vmatpush.bf16.msra.mxu0 %v2924
        %4166 = vmatpush.bf16.msra.mxu0 %v2916
        %4167 = vmatpush.bf16.msra.mxu0 %v2908
        %4168 = vmatpush.bf16.msra.mxu0 %v2900
        %4169 = vmatpush.bf16.msra.mxu0 %v2892
        %4170 = vmatpush.bf16.msra.mxu0 %v2884
        %4171 = vmatmul.bf16.gmra.mxu0 %v949
        %v4172 = vpop.f32.mrf.mxu0
        %v4173 = vadd.f32 %v4159, %v4172
        %v4174 = vpop.f32.mrf.mxu0
        %v4175 = vadd.f32 %v4161, %v4174
        %4176 = vdwg.mxu0
        %4177 = vmatpush.bf16.msra.mxu0 %v3004
        %4178 = vmatpush.bf16.msra.mxu0 %v2996
        %4179 = vmatpush.bf16.msra.mxu0 %v2988
        %4180 = vmatpush.bf16.msra.mxu0 %v2980
        %4181 = vmatpush.bf16.msra.mxu0 %v2972
        %4182 = vmatpush.bf16.msra.mxu0 %v2964
        %4183 = vmatpush.bf16.msra.mxu0 %v2956
        %4184 = vmatpush.bf16.msra.mxu0 %v2948
        %4185 = vmatmul.bf16.gmra.mxu0 %v950
        %v4186 = vpop.f32.mrf.mxu0
        %v4187 = vadd.f32 %v4173, %v4186
        %v4188 = vpop.f32.mrf.mxu0
        %v4189 = vadd.f32 %v4175, %v4188
        %4190 = vdwg.mxu0
        %4191 = vmatpush.bf16.msra.mxu0 %v2557
        %4192 = vmatpush.bf16.msra.mxu0 %v2549
        %4193 = vmatpush.bf16.msra.mxu0 %v2541
        %4194 = vmatpush.bf16.msra.mxu0 %v2533
        %4195 = vmatpush.bf16.msra.mxu0 %v2525
        %4196 = vmatpush.bf16.msra.mxu0 %v2517
        %4197 = vmatpush.bf16.msra.mxu0 %v2509
        %4198 = vmatpush.bf16.msra.mxu0 %v2501
        %4199 = vmatmul.bf16.gmra.mxu0 %v943
        %v4200 = vpop.f32.mrf.mxu0
        %v4201 = vadd.f32 %v909, %v4200
        %v4202 = vpop.f32.mrf.mxu0
        %v4203 = vadd.f32 %v909, %v4202
        %4204 = vdwg.mxu0
        %4205 = vmatpush.bf16.msra.mxu0 %v2621
        %4206 = vmatpush.bf16.msra.mxu0 %v2613
        %4207 = vmatpush.bf16.msra.mxu0 %v2605
        %4208 = vmatpush.bf16.msra.mxu0 %v2597
        %4209 = vmatpush.bf16.msra.mxu0 %v2589
        %4210 = vmatpush.bf16.msra.mxu0 %v2581
        %4211 = vmatpush.bf16.msra.mxu0 %v2573
        %4212 = vmatpush.bf16.msra.mxu0 %v2565
        %4213 = vmatmul.bf16.gmra.mxu0 %v944
        %v4214 = vpop.f32.mrf.mxu0
        %v4215 = vadd.f32 %v4201, %v4214
        %v4216 = vpop.f32.mrf.mxu0
        %v4217 = vadd.f32 %v4203, %v4216
        %4218 = vdwg.mxu0
        %4219 = vmatpush.bf16.msra.mxu0 %v2685
        %4220 = vmatpush.bf16.msra.mxu0 %v2677
        %4221 = vmatpush.bf16.msra.mxu0 %v2669
        %4222 = vmatpush.bf16.msra.mxu0 %v2661
        %4223 = vmatpush.bf16.msra.mxu0 %v2653
        %4224 = vmatpush.bf16.msra.mxu0 %v2645
        %4225 = vmatpush.bf16.msra.mxu0 %v2637
        %4226 = vmatpush.bf16.msra.mxu0 %v2629
        %4227 = vmatmul.bf16.gmra.mxu0 %v945
        %v4228 = vpop.f32.mrf.mxu0
        %v4229 = vadd.f32 %v4215, %v4228
        %v4230 = vpop.f32.mrf.mxu0
        %v4231 = vadd.f32 %v4217, %v4230
        %4232 = vdwg.mxu0
        %4233 = vmatpush.bf16.msra.mxu0 %v2749
        %4234 = vmatpush.bf16.msra.mxu0 %v2741
        %4235 = vmatpush.bf16.msra.mxu0 %v2733
        %4236 = vmatpush.bf16.msra.mxu0 %v2725
        %4237 = vmatpush.bf16.msra.mxu0 %v2717
        %4238 = vmatpush.bf16.msra.mxu0 %v2709
        %4239 = vmatpush.bf16.msra.mxu0 %v2701
        %4240 = vmatpush.bf16.msra.mxu0 %v2693
        %4241 = vmatmul.bf16.gmra.mxu0 %v946
        %v4242 = vpop.f32.mrf.mxu0
        %v4243 = vadd.f32 %v4229, %v4242
        %v4244 = vpop.f32.mrf.mxu0
        %v4245 = vadd.f32 %v4231, %v4244
        %4246 = vdwg.mxu0
        %4247 = vmatpush.bf16.msra.mxu0 %v2813
        %4248 = vmatpush.bf16.msra.mxu0 %v2805
        %4249 = vmatpush.bf16.msra.mxu0 %v2797
        %4250 = vmatpush.bf16.msra.mxu0 %v2789
        %4251 = vmatpush.bf16.msra.mxu0 %v2781
        %4252 = vmatpush.bf16.msra.mxu0 %v2773
        %4253 = vmatpush.bf16.msra.mxu0 %v2765
        %4254 = vmatpush.bf16.msra.mxu0 %v2757
        %4255 = vmatmul.bf16.gmra.mxu0 %v947
        %v4256 = vpop.f32.mrf.mxu0
        %v4257 = vadd.f32 %v4243, %v4256
        %v4258 = vpop.f32.mrf.mxu0
        %v4259 = vadd.f32 %v4245, %v4258
        %4260 = vdwg.mxu0
        %4261 = vmatpush.bf16.msra.mxu0 %v2877
        %4262 = vmatpush.bf16.msra.mxu0 %v2869
        %4263 = vmatpush.bf16.msra.mxu0 %v2861
        %4264 = vmatpush.bf16.msra.mxu0 %v2853
        %4265 = vmatpush.bf16.msra.mxu0 %v2845
        %4266 = vmatpush.bf16.msra.mxu0 %v2837
        %4267 = vmatpush.bf16.msra.mxu0 %v2829
        %4268 = vmatpush.bf16.msra.mxu0 %v2821
        %4269 = vmatmul.bf16.gmra.mxu0 %v948
        %v4270 = vpop.f32.mrf.mxu0
        %v4271 = vadd.f32 %v4257, %v4270
        %v4272 = vpop.f32.mrf.mxu0
        %v4273 = vadd.f32 %v4259, %v4272
        %4274 = vdwg.mxu0
        %4275 = vmatpush.bf16.msra.mxu0 %v2941
        %4276 = vmatpush.bf16.msra.mxu0 %v2933
        %4277 = vmatpush.bf16.msra.mxu0 %v2925
        %4278 = vmatpush.bf16.msra.mxu0 %v2917
        %4279 = vmatpush.bf16.msra.mxu0 %v2909
        %4280 = vmatpush.bf16.msra.mxu0 %v2901
        %4281 = vmatpush.bf16.msra.mxu0 %v2893
        %4282 = vmatpush.bf16.msra.mxu0 %v2885
        %4283 = vmatmul.bf16.gmra.mxu0 %v949
        %v4284 = vpop.f32.mrf.mxu0
        %v4285 = vadd.f32 %v4271, %v4284
        %v4286 = vpop.f32.mrf.mxu0
        %v4287 = vadd.f32 %v4273, %v4286
        %4288 = vdwg.mxu0
        %4289 = vmatpush.bf16.msra.mxu0 %v3005
        %4290 = vmatpush.bf16.msra.mxu0 %v2997
        %4291 = vmatpush.bf16.msra.mxu0 %v2989
        %4292 = vmatpush.bf16.msra.mxu0 %v2981
        %4293 = vmatpush.bf16.msra.mxu0 %v2973
        %4294 = vmatpush.bf16.msra.mxu0 %v2965
        %4295 = vmatpush.bf16.msra.mxu0 %v2957
        %4296 = vmatpush.bf16.msra.mxu0 %v2949
        %4297 = vmatmul.bf16.gmra.mxu0 %v950
        %v4298 = vpop.f32.mrf.mxu0
        %v4299 = vadd.f32 %v4285, %v4298
        %v4300 = vpop.f32.mrf.mxu0
        %v4301 = vadd.f32 %v4287, %v4300
        %4302 = vdwg.mxu0
        %4303 = vmatpush.bf16.msra.mxu0 %v2558
        %4304 = vmatpush.bf16.msra.mxu0 %v2550
        %4305 = vmatpush.bf16.msra.mxu0 %v2542
        %4306 = vmatpush.bf16.msra.mxu0 %v2534
        %4307 = vmatpush.bf16.msra.mxu0 %v2526
        %4308 = vmatpush.bf16.msra.mxu0 %v2518
        %4309 = vmatpush.bf16.msra.mxu0 %v2510
        %4310 = vmatpush.bf16.msra.mxu0 %v2502
        %4311 = vmatmul.bf16.gmra.mxu0 %v943
        %v4312 = vpop.f32.mrf.mxu0
        %v4313 = vadd.f32 %v910, %v4312
        %v4314 = vpop.f32.mrf.mxu0
        %v4315 = vadd.f32 %v910, %v4314
        %4316 = vdwg.mxu0
        %4317 = vmatpush.bf16.msra.mxu0 %v2622
        %4318 = vmatpush.bf16.msra.mxu0 %v2614
        %4319 = vmatpush.bf16.msra.mxu0 %v2606
        %4320 = vmatpush.bf16.msra.mxu0 %v2598
        %4321 = vmatpush.bf16.msra.mxu0 %v2590
        %4322 = vmatpush.bf16.msra.mxu0 %v2582
        %4323 = vmatpush.bf16.msra.mxu0 %v2574
        %4324 = vmatpush.bf16.msra.mxu0 %v2566
        %4325 = vmatmul.bf16.gmra.mxu0 %v944
        %v4326 = vpop.f32.mrf.mxu0
        %v4327 = vadd.f32 %v4313, %v4326
        %v4328 = vpop.f32.mrf.mxu0
        %v4329 = vadd.f32 %v4315, %v4328
        %4330 = vdwg.mxu0
        %4331 = vmatpush.bf16.msra.mxu0 %v2686
        %4332 = vmatpush.bf16.msra.mxu0 %v2678
        %4333 = vmatpush.bf16.msra.mxu0 %v2670
        %4334 = vmatpush.bf16.msra.mxu0 %v2662
        %4335 = vmatpush.bf16.msra.mxu0 %v2654
        %4336 = vmatpush.bf16.msra.mxu0 %v2646
        %4337 = vmatpush.bf16.msra.mxu0 %v2638
        %4338 = vmatpush.bf16.msra.mxu0 %v2630
        %4339 = vmatmul.bf16.gmra.mxu0 %v945
        %v4340 = vpop.f32.mrf.mxu0
        %v4341 = vadd.f32 %v4327, %v4340
        %v4342 = vpop.f32.mrf.mxu0
        %v4343 = vadd.f32 %v4329, %v4342
        %4344 = vdwg.mxu0
        %4345 = vmatpush.bf16.msra.mxu0 %v2750
        %4346 = vmatpush.bf16.msra.mxu0 %v2742
        %4347 = vmatpush.bf16.msra.mxu0 %v2734
        %4348 = vmatpush.bf16.msra.mxu0 %v2726
        %4349 = vmatpush.bf16.msra.mxu0 %v2718
        %4350 = vmatpush.bf16.msra.mxu0 %v2710
        %4351 = vmatpush.bf16.msra.mxu0 %v2702
        %4352 = vmatpush.bf16.msra.mxu0 %v2694
        %4353 = vmatmul.bf16.gmra.mxu0 %v946
        %v4354 = vpop.f32.mrf.mxu0
        %v4355 = vadd.f32 %v4341, %v4354
        %v4356 = vpop.f32.mrf.mxu0
        %v4357 = vadd.f32 %v4343, %v4356
        %4358 = vdwg.mxu0
        %4359 = vmatpush.bf16.msra.mxu0 %v2814
        %4360 = vmatpush.bf16.msra.mxu0 %v2806
        %4361 = vmatpush.bf16.msra.mxu0 %v2798
        %4362 = vmatpush.bf16.msra.mxu0 %v2790
        %4363 = vmatpush.bf16.msra.mxu0 %v2782
        %4364 = vmatpush.bf16.msra.mxu0 %v2774
        %4365 = vmatpush.bf16.msra.mxu0 %v2766
        %4366 = vmatpush.bf16.msra.mxu0 %v2758
        %4367 = vmatmul.bf16.gmra.mxu0 %v947
        %v4368 = vpop.f32.mrf.mxu0
        %v4369 = vadd.f32 %v4355, %v4368
        %v4370 = vpop.f32.mrf.mxu0
        %v4371 = vadd.f32 %v4357, %v4370
        %4372 = vdwg.mxu0
        %4373 = vmatpush.bf16.msra.mxu0 %v2878
        %4374 = vmatpush.bf16.msra.mxu0 %v2870
        %4375 = vmatpush.bf16.msra.mxu0 %v2862
        %4376 = vmatpush.bf16.msra.mxu0 %v2854
        %4377 = vmatpush.bf16.msra.mxu0 %v2846
        %4378 = vmatpush.bf16.msra.mxu0 %v2838
        %4379 = vmatpush.bf16.msra.mxu0 %v2830
        %4380 = vmatpush.bf16.msra.mxu0 %v2822
        %4381 = vmatmul.bf16.gmra.mxu0 %v948
        %v4382 = vpop.f32.mrf.mxu0
        %v4383 = vadd.f32 %v4369, %v4382
        %v4384 = vpop.f32.mrf.mxu0
        %v4385 = vadd.f32 %v4371, %v4384
        %4386 = vdwg.mxu0
        %4387 = vmatpush.bf16.msra.mxu0 %v2942
        %4388 = vmatpush.bf16.msra.mxu0 %v2934
        %4389 = vmatpush.bf16.msra.mxu0 %v2926
        %4390 = vmatpush.bf16.msra.mxu0 %v2918
        %4391 = vmatpush.bf16.msra.mxu0 %v2910
        %4392 = vmatpush.bf16.msra.mxu0 %v2902
        %4393 = vmatpush.bf16.msra.mxu0 %v2894
        %4394 = vmatpush.bf16.msra.mxu0 %v2886
        %4395 = vmatmul.bf16.gmra.mxu0 %v949
        %v4396 = vpop.f32.mrf.mxu0
        %v4397 = vadd.f32 %v4383, %v4396
        %v4398 = vpop.f32.mrf.mxu0
        %v4399 = vadd.f32 %v4385, %v4398
        %4400 = vdwg.mxu0
        %4401 = vmatpush.bf16.msra.mxu0 %v3006
        %4402 = vmatpush.bf16.msra.mxu0 %v2998
        %4403 = vmatpush.bf16.msra.mxu0 %v2990
        %4404 = vmatpush.bf16.msra.mxu0 %v2982
        %4405 = vmatpush.bf16.msra.mxu0 %v2974
        %4406 = vmatpush.bf16.msra.mxu0 %v2966
        %4407 = vmatpush.bf16.msra.mxu0 %v2958
        %4408 = vmatpush.bf16.msra.mxu0 %v2950
        %4409 = vmatmul.bf16.gmra.mxu0 %v950
        %v4410 = vpop.f32.mrf.mxu0
        %v4411 = vadd.f32 %v4397, %v4410
        %v4412 = vpop.f32.mrf.mxu0
        %v4413 = vadd.f32 %v4399, %v4412
        %4414 = vdwg.mxu0
        %v4415 = vmax.f32 %v3627, 0.0
        %v4416 = vmax.f32 %v3739, 0.0
        %v4417 = vmax.f32 %v3851, 0.0
        %v4418 = vmax.f32 %v3963, 0.0
        %v4419 = vmax.f32 %v4075, 0.0
        %v4420 = vmax.f32 %v4187, 0.0
        %v4421 = vmax.f32 %v4299, 0.0
        %v4422 = vmax.f32 %v4411, 0.0
        %v4423 = vmax.f32 %v3629, 0.0
        %v4424 = vmax.f32 %v3741, 0.0
        %v4425 = vmax.f32 %v3853, 0.0
        %v4426 = vmax.f32 %v3965, 0.0
        %v4427 = vmax.f32 %v4077, 0.0
        %v4428 = vmax.f32 %v4189, 0.0
        %v4429 = vmax.f32 %v4301, 0.0
        %v4430 = vmax.f32 %v4413, 0.0
        %v4431 = vpack.c.bf16 %v4416, %v4415
        %v4432 = vpack.c.bf16 %v4418, %v4417
        %v4433 = vpack.c.bf16 %v4420, %v4419
        %v4434 = vpack.c.bf16 %v4422, %v4421
        %v4435 = vpack.c.bf16 %v4424, %v4423
        %v4436 = vpack.c.bf16 %v4426, %v4425
        %v4437 = vpack.c.bf16 %v4428, %v4427
        %v4438 = vpack.c.bf16 %v4430, %v4429
        %4439 = vst [vmem:[#allocation2] sm:$0xff] %v4431
        %4440 = vst [vmem:[#allocation2 + $0x8] sm:$0xff] %v4432
        %4441 = vst [vmem:[#allocation2 + $0x10] sm:$0xff] %v4433
        %4442 = vst [vmem:[#allocation2 + $0x18] sm:$0xff] %v4434
        %4443 = vst [vmem:[#allocation2 + $0x20] sm:$0xff] %v4435
        %4444 = vst [vmem:[#allocation2 + $0x28] sm:$0xff] %v4436
        %4445 = vst [vmem:[#allocation2 + $0x30] sm:$0xff] %v4437
        %4446 = vst [vmem:[#allocation2 + $0x38] sm:$0xff] %v4438
        %p4447 = scmp.eq.s32.totalorder %s27, 3
        // Predicated region
        $region65: #{tpu_custom_call.1} parent=39 // pred_check
          %p4448 = pneg %p4447
        $region66: #{tpu_custom_call.1} parent=39 // pred_check_branch
          %4450 = sbr.rel (%p4448) target = $region68
        $region67: #{tpu_custom_call.1} parent=39 // pred_region
          %v4451 = vld [vmem:[#allocation2] sm:$0xff]
          %v4452 = vld [vmem:[#allocation2 + $0x8] sm:$0xff]
          %v4453 = vld [vmem:[#allocation2 + $0x10] sm:$0xff]
          %v4454 = vld [vmem:[#allocation2 + $0x18] sm:$0xff]
          %v4455 = vld [vmem:[#allocation2 + $0x20] sm:$0xff]
          %v4456 = vld [vmem:[#allocation2 + $0x28] sm:$0xff]
          %v4457 = vld [vmem:[#allocation2 + $0x30] sm:$0xff]
          %v4458 = vld [vmem:[#allocation2 + $0x38] sm:$0xff]
          %v4459 = vld [vmem:[#allocation9] sm:$0xf]
          %v4460 = vld [vmem:[#allocation9 + $0x4] sm:$0xf]
          %v4461 = vld [vmem:[#allocation9 + $0x8] sm:$0xf]
          %v4462 = vld [vmem:[#allocation9 + $0xc] sm:$0xf]
          %v4463 = vld [vmem:[#allocation9 + $0x10] sm:$0xf]
          %v4464 = vld [vmem:[#allocation9 + $0x14] sm:$0xf]
          %v4465 = vld [vmem:[#allocation9 + $0x18] sm:$0xf]
          %v4466 = vld [vmem:[#allocation9 + $0x1c] sm:$0xf]
          %v4467 = vld [vmem:[#allocation9 + $0x20] sm:$0xf]
          %v4468 = vld [vmem:[#allocation9 + $0x24] sm:$0xf]
          %v4469 = vld [vmem:[#allocation9 + $0x28] sm:$0xf]
          %v4470 = vld [vmem:[#allocation9 + $0x2c] sm:$0xf]
          %v4471 = vld [vmem:[#allocation9 + $0x30] sm:$0xf]
          %v4472 = vld [vmem:[#allocation9 + $0x34] sm:$0xf]
          %v4473 = vld [vmem:[#allocation9 + $0x38] sm:$0xf]
          %v4474 = vld [vmem:[#allocation9 + $0x3c] sm:$0xf]
          %v4475 = vld [vmem:[#allocation9 + $0x40] sm:$0xf]
          %v4476 = vld [vmem:[#allocation9 + $0x44] sm:$0xf]
          %v4477 = vld [vmem:[#allocation9 + $0x48] sm:$0xf]
          %v4478 = vld [vmem:[#allocation9 + $0x4c] sm:$0xf]
          %v4479 = vld [vmem:[#allocation9 + $0x50] sm:$0xf]
          %v4480 = vld [vmem:[#allocation9 + $0x54] sm:$0xf]
          %v4481 = vld [vmem:[#allocation9 + $0x58] sm:$0xf]
          %v4482 = vld [vmem:[#allocation9 + $0x5c] sm:$0xf]
          %v4483 = vld [vmem:[#allocation9 + $0x60] sm:$0xf]
          %v4484 = vld [vmem:[#allocation9 + $0x64] sm:$0xf]
          %v4485 = vld [vmem:[#allocation9 + $0x68] sm:$0xf]
          %v4486 = vld [vmem:[#allocation9 + $0x6c] sm:$0xf]
          %v4487 = vld [vmem:[#allocation9 + $0x70] sm:$0xf]
          %v4488 = vld [vmem:[#allocation9 + $0x74] sm:$0xf]
          %v4489 = vld [vmem:[#allocation9 + $0x78] sm:$0xf]
          %v4490 = vld [vmem:[#allocation9 + $0x7c] sm:$0xf]
          %v4491 = vld [vmem:[#allocation9 + $0x80] sm:$0xf]
          %v4492 = vld [vmem:[#allocation9 + $0x84] sm:$0xf]
          %v4493 = vld [vmem:[#allocation9 + $0x88] sm:$0xf]
          %v4494 = vld [vmem:[#allocation9 + $0x8c] sm:$0xf]
          %v4495 = vld [vmem:[#allocation9 + $0x90] sm:$0xf]
          %v4496 = vld [vmem:[#allocation9 + $0x94] sm:$0xf]
          %v4497 = vld [vmem:[#allocation9 + $0x98] sm:$0xf]
          %v4498 = vld [vmem:[#allocation9 + $0x9c] sm:$0xf]
          %v4499 = vld [vmem:[#allocation9 + $0xa0] sm:$0xf]
          %v4500 = vld [vmem:[#allocation9 + $0xa4] sm:$0xf]
          %v4501 = vld [vmem:[#allocation9 + $0xa8] sm:$0xf]
          %v4502 = vld [vmem:[#allocation9 + $0xac] sm:$0xf]
          %v4503 = vld [vmem:[#allocation9 + $0xb0] sm:$0xf]
          %v4504 = vld [vmem:[#allocation9 + $0xb4] sm:$0xf]
          %v4505 = vld [vmem:[#allocation9 + $0xb8] sm:$0xf]
          %v4506 = vld [vmem:[#allocation9 + $0xbc] sm:$0xf]
          %v4507 = vld [vmem:[#allocation9 + $0xc0] sm:$0xf]
          %v4508 = vld [vmem:[#allocation9 + $0xc4] sm:$0xf]
          %v4509 = vld [vmem:[#allocation9 + $0xc8] sm:$0xf]
          %v4510 = vld [vmem:[#allocation9 + $0xcc] sm:$0xf]
          %v4511 = vld [vmem:[#allocation9 + $0xd0] sm:$0xf]
          %v4512 = vld [vmem:[#allocation9 + $0xd4] sm:$0xf]
          %v4513 = vld [vmem:[#allocation9 + $0xd8] sm:$0xf]
          %v4514 = vld [vmem:[#allocation9 + $0xdc] sm:$0xf]
          %v4515 = vld [vmem:[#allocation9 + $0xe0] sm:$0xf]
          %v4516 = vld [vmem:[#allocation9 + $0xe4] sm:$0xf]
          %v4517 = vld [vmem:[#allocation9 + $0xe8] sm:$0xf]
          %v4518 = vld [vmem:[#allocation9 + $0xec] sm:$0xf]
          %v4519 = vld [vmem:[#allocation9 + $0xf0] sm:$0xf]
          %v4520 = vld [vmem:[#allocation9 + $0xf4] sm:$0xf]
          %v4521 = vld [vmem:[#allocation9 + $0xf8] sm:$0xf]
          %v4522 = vld [vmem:[#allocation9 + $0xfc] sm:$0xf]
          %v4523 = vld [vmem:[#allocation9 + $0x100] sm:$0xf]
          %v4524 = vld [vmem:[#allocation9 + $0x104] sm:$0xf]
          %v4525 = vld [vmem:[#allocation9 + $0x108] sm:$0xf]
          %v4526 = vld [vmem:[#allocation9 + $0x10c] sm:$0xf]
          %v4527 = vld [vmem:[#allocation9 + $0x110] sm:$0xf]
          %v4528 = vld [vmem:[#allocation9 + $0x114] sm:$0xf]
          %v4529 = vld [vmem:[#allocation9 + $0x118] sm:$0xf]
          %v4530 = vld [vmem:[#allocation9 + $0x11c] sm:$0xf]
          %v4531 = vld [vmem:[#allocation9 + $0x120] sm:$0xf]
          %v4532 = vld [vmem:[#allocation9 + $0x124] sm:$0xf]
          %v4533 = vld [vmem:[#allocation9 + $0x128] sm:$0xf]
          %v4534 = vld [vmem:[#allocation9 + $0x12c] sm:$0xf]
          %v4535 = vld [vmem:[#allocation9 + $0x130] sm:$0xf]
          %v4536 = vld [vmem:[#allocation9 + $0x134] sm:$0xf]
          %v4537 = vld [vmem:[#allocation9 + $0x138] sm:$0xf]
          %v4538 = vld [vmem:[#allocation9 + $0x13c] sm:$0xf]
          %v4539 = vld [vmem:[#allocation9 + $0x140] sm:$0xf]
          %v4540 = vld [vmem:[#allocation9 + $0x144] sm:$0xf]
          %v4541 = vld [vmem:[#allocation9 + $0x148] sm:$0xf]
          %v4542 = vld [vmem:[#allocation9 + $0x14c] sm:$0xf]
          %v4543 = vld [vmem:[#allocation9 + $0x150] sm:$0xf]
          %v4544 = vld [vmem:[#allocation9 + $0x154] sm:$0xf]
          %v4545 = vld [vmem:[#allocation9 + $0x158] sm:$0xf]
          %v4546 = vld [vmem:[#allocation9 + $0x15c] sm:$0xf]
          %v4547 = vld [vmem:[#allocation9 + $0x160] sm:$0xf]
          %v4548 = vld [vmem:[#allocation9 + $0x164] sm:$0xf]
          %v4549 = vld [vmem:[#allocation9 + $0x168] sm:$0xf]
          %v4550 = vld [vmem:[#allocation9 + $0x16c] sm:$0xf]
          %v4551 = vld [vmem:[#allocation9 + $0x170] sm:$0xf]
          %v4552 = vld [vmem:[#allocation9 + $0x174] sm:$0xf]
          %v4553 = vld [vmem:[#allocation9 + $0x178] sm:$0xf]
          %v4554 = vld [vmem:[#allocation9 + $0x17c] sm:$0xf]
          %v4555 = vld [vmem:[#allocation9 + $0x180] sm:$0xf]
          %v4556 = vld [vmem:[#allocation9 + $0x184] sm:$0xf]
          %v4557 = vld [vmem:[#allocation9 + $0x188] sm:$0xf]
          %v4558 = vld [vmem:[#allocation9 + $0x18c] sm:$0xf]
          %v4559 = vld [vmem:[#allocation9 + $0x190] sm:$0xf]
          %v4560 = vld [vmem:[#allocation9 + $0x194] sm:$0xf]
          %v4561 = vld [vmem:[#allocation9 + $0x198] sm:$0xf]
          %v4562 = vld [vmem:[#allocation9 + $0x19c] sm:$0xf]
          %v4563 = vld [vmem:[#allocation9 + $0x1a0] sm:$0xf]
          %v4564 = vld [vmem:[#allocation9 + $0x1a4] sm:$0xf]
          %v4565 = vld [vmem:[#allocation9 + $0x1a8] sm:$0xf]
          %v4566 = vld [vmem:[#allocation9 + $0x1ac] sm:$0xf]
          %v4567 = vld [vmem:[#allocation9 + $0x1b0] sm:$0xf]
          %v4568 = vld [vmem:[#allocation9 + $0x1b4] sm:$0xf]
          %v4569 = vld [vmem:[#allocation9 + $0x1b8] sm:$0xf]
          %v4570 = vld [vmem:[#allocation9 + $0x1bc] sm:$0xf]
          %v4571 = vld [vmem:[#allocation9 + $0x1c0] sm:$0xf]
          %v4572 = vld [vmem:[#allocation9 + $0x1c4] sm:$0xf]
          %v4573 = vld [vmem:[#allocation9 + $0x1c8] sm:$0xf]
          %v4574 = vld [vmem:[#allocation9 + $0x1cc] sm:$0xf]
          %v4575 = vld [vmem:[#allocation9 + $0x1d0] sm:$0xf]
          %v4576 = vld [vmem:[#allocation9 + $0x1d4] sm:$0xf]
          %v4577 = vld [vmem:[#allocation9 + $0x1d8] sm:$0xf]
          %v4578 = vld [vmem:[#allocation9 + $0x1dc] sm:$0xf]
          %v4579 = vld [vmem:[#allocation9 + $0x1e0] sm:$0xf]
          %v4580 = vld [vmem:[#allocation9 + $0x1e4] sm:$0xf]
          %v4581 = vld [vmem:[#allocation9 + $0x1e8] sm:$0xf]
          %v4582 = vld [vmem:[#allocation9 + $0x1ec] sm:$0xf]
          %v4583 = vld [vmem:[#allocation9 + $0x1f0] sm:$0xf]
          %v4584 = vld [vmem:[#allocation9 + $0x1f4] sm:$0xf]
          %v4585 = vld [vmem:[#allocation9 + $0x1f8] sm:$0xf]
          %v4586 = vld [vmem:[#allocation9 + $0x1fc] sm:$0xf]
          %v4587 = vld [vmem:[#allocation11] sm:$0x1]
          %v4589 = vperm.slane %v4587, 0
          %v4599 = vunpack.c.l.b16 %v4451
          %v4600 = vunpack.c.h.b16 %v4451
          %v4601 = vunpack.c.l.b16 %v4452
          %v4602 = vunpack.c.h.b16 %v4452
          %v4603 = vunpack.c.l.b16 %v4453
          %v4604 = vunpack.c.h.b16 %v4453
          %v4605 = vunpack.c.l.b16 %v4454
          %v4606 = vunpack.c.h.b16 %v4454
          %v4607 = vunpack.c.l.b16 %v4455
          %v4608 = vunpack.c.h.b16 %v4455
          %v4609 = vunpack.c.l.b16 %v4456
          %v4610 = vunpack.c.h.b16 %v4456
          %v4611 = vunpack.c.l.b16 %v4457
          %v4612 = vunpack.c.h.b16 %v4457
          %v4613 = vunpack.c.l.b16 %v4458
          %v4614 = vunpack.c.h.b16 %v4458
          %v4615 = vpack.c.b16 %v4607, %v4599
          %v4616 = vpack.c.b16 %v4608, %v4600
          %v4617 = vpack.c.b16 %v4609, %v4601
          %v4618 = vpack.c.b16 %v4610, %v4602
          %v4619 = vpack.c.b16 %v4611, %v4603
          %v4620 = vpack.c.b16 %v4612, %v4604
          %v4621 = vpack.c.b16 %v4613, %v4605
          %v4622 = vpack.c.b16 %v4614, %v4606
          %v4759 = vunpack.c.l.b16 %v4459
          %v4760 = vunpack.c.l.b16 %v4460
          %v4761 = vunpack.c.l.b16 %v4461
          %v4762 = vunpack.c.l.b16 %v4462
          %v4763 = vunpack.c.l.b16 %v4463
          %v4764 = vunpack.c.l.b16 %v4464
          %v4765 = vunpack.c.l.b16 %v4465
          %v4766 = vunpack.c.l.b16 %v4466
          %v4767 = vunpack.c.l.b16 %v4467
          %v4768 = vunpack.c.l.b16 %v4468
          %v4769 = vunpack.c.l.b16 %v4469
          %v4770 = vunpack.c.l.b16 %v4470
          %v4771 = vunpack.c.l.b16 %v4471
          %v4772 = vunpack.c.l.b16 %v4472
          %v4773 = vunpack.c.l.b16 %v4473
          %v4774 = vunpack.c.l.b16 %v4474
          %v4775 = vunpack.c.l.b16 %v4475
          %v4776 = vunpack.c.l.b16 %v4476
          %v4777 = vunpack.c.l.b16 %v4477
          %v4778 = vunpack.c.l.b16 %v4478
          %v4779 = vunpack.c.l.b16 %v4479
          %v4780 = vunpack.c.l.b16 %v4480
          %v4781 = vunpack.c.l.b16 %v4481
          %v4782 = vunpack.c.l.b16 %v4482
          %v4783 = vunpack.c.l.b16 %v4483
          %v4784 = vunpack.c.l.b16 %v4484
          %v4785 = vunpack.c.l.b16 %v4485
          %v4786 = vunpack.c.l.b16 %v4486
          %v4787 = vunpack.c.l.b16 %v4487
          %v4788 = vunpack.c.l.b16 %v4488
          %v4789 = vunpack.c.l.b16 %v4489
          %v4790 = vunpack.c.l.b16 %v4490
          %v4791 = vunpack.c.l.b16 %v4491
          %v4792 = vunpack.c.l.b16 %v4492
          %v4793 = vunpack.c.l.b16 %v4493
          %v4794 = vunpack.c.l.b16 %v4494
          %v4795 = vunpack.c.l.b16 %v4495
          %v4796 = vunpack.c.l.b16 %v4496
          %v4797 = vunpack.c.l.b16 %v4497
          %v4798 = vunpack.c.l.b16 %v4498
          %v4799 = vunpack.c.l.b16 %v4499
          %v4800 = vunpack.c.l.b16 %v4500
          %v4801 = vunpack.c.l.b16 %v4501
          %v4802 = vunpack.c.l.b16 %v4502
          %v4803 = vunpack.c.l.b16 %v4503
          %v4804 = vunpack.c.l.b16 %v4504
          %v4805 = vunpack.c.l.b16 %v4505
          %v4806 = vunpack.c.l.b16 %v4506
          %v4807 = vunpack.c.l.b16 %v4507
          %v4808 = vunpack.c.l.b16 %v4508
          %v4809 = vunpack.c.l.b16 %v4509
          %v4810 = vunpack.c.l.b16 %v4510
          %v4811 = vunpack.c.l.b16 %v4511
          %v4812 = vunpack.c.l.b16 %v4512
          %v4813 = vunpack.c.l.b16 %v4513
          %v4814 = vunpack.c.l.b16 %v4514
          %v4815 = vunpack.c.l.b16 %v4515
          %v4816 = vunpack.c.l.b16 %v4516
          %v4817 = vunpack.c.l.b16 %v4517
          %v4818 = vunpack.c.l.b16 %v4518
          %v4819 = vunpack.c.l.b16 %v4519
          %v4820 = vunpack.c.l.b16 %v4520
          %v4821 = vunpack.c.l.b16 %v4521
          %v4822 = vunpack.c.l.b16 %v4522
          %v4823 = vunpack.c.l.b16 %v4523
          %v4824 = vunpack.c.l.b16 %v4524
          %v4825 = vunpack.c.l.b16 %v4525
          %v4826 = vunpack.c.l.b16 %v4526
          %v4827 = vunpack.c.l.b16 %v4527
          %v4828 = vunpack.c.l.b16 %v4528
          %v4829 = vunpack.c.l.b16 %v4529
          %v4830 = vunpack.c.l.b16 %v4530
          %v4831 = vunpack.c.l.b16 %v4531
          %v4832 = vunpack.c.l.b16 %v4532
          %v4833 = vunpack.c.l.b16 %v4533
          %v4834 = vunpack.c.l.b16 %v4534
          %v4835 = vunpack.c.l.b16 %v4535
          %v4836 = vunpack.c.l.b16 %v4536
          %v4837 = vunpack.c.l.b16 %v4537
          %v4838 = vunpack.c.l.b16 %v4538
          %v4839 = vunpack.c.l.b16 %v4539
          %v4840 = vunpack.c.l.b16 %v4540
          %v4841 = vunpack.c.l.b16 %v4541
          %v4842 = vunpack.c.l.b16 %v4542
          %v4843 = vunpack.c.l.b16 %v4543
          %v4844 = vunpack.c.l.b16 %v4544
          %v4845 = vunpack.c.l.b16 %v4545
          %v4846 = vunpack.c.l.b16 %v4546
          %v4847 = vunpack.c.l.b16 %v4547
          %v4848 = vunpack.c.l.b16 %v4548
          %v4849 = vunpack.c.l.b16 %v4549
          %v4850 = vunpack.c.l.b16 %v4550
          %v4851 = vunpack.c.l.b16 %v4551
          %v4852 = vunpack.c.l.b16 %v4552
          %v4853 = vunpack.c.l.b16 %v4553
          %v4854 = vunpack.c.l.b16 %v4554
          %v4855 = vunpack.c.l.b16 %v4555
          %v4856 = vunpack.c.l.b16 %v4556
          %v4857 = vunpack.c.l.b16 %v4557
          %v4858 = vunpack.c.l.b16 %v4558
          %v4859 = vunpack.c.l.b16 %v4559
          %v4860 = vunpack.c.l.b16 %v4560
          %v4861 = vunpack.c.l.b16 %v4561
          %v4862 = vunpack.c.l.b16 %v4562
          %v4863 = vunpack.c.l.b16 %v4563
          %v4864 = vunpack.c.l.b16 %v4564
          %v4865 = vunpack.c.l.b16 %v4565
          %v4866 = vunpack.c.l.b16 %v4566
          %v4867 = vunpack.c.l.b16 %v4567
          %v4868 = vunpack.c.l.b16 %v4568
          %v4869 = vunpack.c.l.b16 %v4569
          %v4870 = vunpack.c.l.b16 %v4570
          %v4871 = vunpack.c.l.b16 %v4571
          %v4872 = vunpack.c.l.b16 %v4572
          %v4873 = vunpack.c.l.b16 %v4573
          %v4874 = vunpack.c.l.b16 %v4574
          %v4875 = vunpack.c.l.b16 %v4575
          %v4876 = vunpack.c.l.b16 %v4576
          %v4877 = vunpack.c.l.b16 %v4577
          %v4878 = vunpack.c.l.b16 %v4578
          %v4879 = vunpack.c.l.b16 %v4579
          %v4880 = vunpack.c.l.b16 %v4580
          %v4881 = vunpack.c.l.b16 %v4581
          %v4882 = vunpack.c.l.b16 %v4582
          %v4883 = vunpack.c.l.b16 %v4583
          %v4884 = vunpack.c.l.b16 %v4584
          %v4885 = vunpack.c.l.b16 %v4585
          %v4886 = vunpack.c.l.b16 %v4586
          %v4887 = vpack.c.b16 %v4760, %v4759
          %v4888 = vpack.c.b16 %v4762, %v4761
          %v4889 = vpack.c.b16 %v4764, %v4763
          %v4890 = vpack.c.b16 %v4766, %v4765
          %v4891 = vpack.c.b16 %v4768, %v4767
          %v4892 = vpack.c.b16 %v4770, %v4769
          %v4893 = vpack.c.b16 %v4772, %v4771
          %v4894 = vpack.c.b16 %v4774, %v4773
          %v4895 = vpack.c.b16 %v4776, %v4775
          %v4896 = vpack.c.b16 %v4778, %v4777
          %v4897 = vpack.c.b16 %v4780, %v4779
          %v4898 = vpack.c.b16 %v4782, %v4781
          %v4899 = vpack.c.b16 %v4784, %v4783
          %v4900 = vpack.c.b16 %v4786, %v4785
          %v4901 = vpack.c.b16 %v4788, %v4787
          %v4902 = vpack.c.b16 %v4790, %v4789
          %v4903 = vpack.c.b16 %v4792, %v4791
          %v4904 = vpack.c.b16 %v4794, %v4793
          %v4905 = vpack.c.b16 %v4796, %v4795
          %v4906 = vpack.c.b16 %v4798, %v4797
          %v4907 = vpack.c.b16 %v4800, %v4799
          %v4908 = vpack.c.b16 %v4802, %v4801
          %v4909 = vpack.c.b16 %v4804, %v4803
          %v4910 = vpack.c.b16 %v4806, %v4805
          %v4911 = vpack.c.b16 %v4808, %v4807
          %v4912 = vpack.c.b16 %v4810, %v4809
          %v4913 = vpack.c.b16 %v4812, %v4811
          %v4914 = vpack.c.b16 %v4814, %v4813
          %v4915 = vpack.c.b16 %v4816, %v4815
          %v4916 = vpack.c.b16 %v4818, %v4817
          %v4917 = vpack.c.b16 %v4820, %v4819
          %v4918 = vpack.c.b16 %v4822, %v4821
          %v4919 = vpack.c.b16 %v4824, %v4823
          %v4920 = vpack.c.b16 %v4826, %v4825
          %v4921 = vpack.c.b16 %v4828, %v4827
          %v4922 = vpack.c.b16 %v4830, %v4829
          %v4923 = vpack.c.b16 %v4832, %v4831
          %v4924 = vpack.c.b16 %v4834, %v4833
          %v4925 = vpack.c.b16 %v4836, %v4835
          %v4926 = vpack.c.b16 %v4838, %v4837
          %v4927 = vpack.c.b16 %v4840, %v4839
          %v4928 = vpack.c.b16 %v4842, %v4841
          %v4929 = vpack.c.b16 %v4844, %v4843
          %v4930 = vpack.c.b16 %v4846, %v4845
          %v4931 = vpack.c.b16 %v4848, %v4847
          %v4932 = vpack.c.b16 %v4850, %v4849
          %v4933 = vpack.c.b16 %v4852, %v4851
          %v4934 = vpack.c.b16 %v4854, %v4853
          %v4935 = vpack.c.b16 %v4856, %v4855
          %v4936 = vpack.c.b16 %v4858, %v4857
          %v4937 = vpack.c.b16 %v4860, %v4859
          %v4938 = vpack.c.b16 %v4862, %v4861
          %v4939 = vpack.c.b16 %v4864, %v4863
          %v4940 = vpack.c.b16 %v4866, %v4865
          %v4941 = vpack.c.b16 %v4868, %v4867
          %v4942 = vpack.c.b16 %v4870, %v4869
          %v4943 = vpack.c.b16 %v4872, %v4871
          %v4944 = vpack.c.b16 %v4874, %v4873
          %v4945 = vpack.c.b16 %v4876, %v4875
          %v4946 = vpack.c.b16 %v4878, %v4877
          %v4947 = vpack.c.b16 %v4880, %v4879
          %v4948 = vpack.c.b16 %v4882, %v4881
          %v4949 = vpack.c.b16 %v4884, %v4883
          %v4950 = vpack.c.b16 %v4886, %v4885
          %5015 = vmatpush.bf16.msra.mxu0 %v4894
          %5016 = vmatpush.bf16.msra.mxu0 %v4893
          %5017 = vmatpush.bf16.msra.mxu0 %v4892
          %5018 = vmatpush.bf16.msra.mxu0 %v4891
          %5019 = vmatpush.bf16.msra.mxu0 %v4890
          %5020 = vmatpush.bf16.msra.mxu0 %v4889
          %5021 = vmatpush.bf16.msra.mxu0 %v4888
          %5022 = vmatpush.bf16.msra.mxu0 %v4887
          %5023 = vmatmul.bf16.gmra.mxu0 %v4615
          %v5024 = vpop.f32.mrf.mxu0
          %v5025 = vadd.f32 %v4589, %v5024
          %v5026 = vpop.f32.mrf.mxu0
          %v5027 = vadd.f32 %v4589, %v5026
          %5028 = vdwg.mxu0
          %5029 = vmatpush.bf16.msra.mxu0 %v4902
          %5030 = vmatpush.bf16.msra.mxu0 %v4901
          %5031 = vmatpush.bf16.msra.mxu0 %v4900
          %5032 = vmatpush.bf16.msra.mxu0 %v4899
          %5033 = vmatpush.bf16.msra.mxu0 %v4898
          %5034 = vmatpush.bf16.msra.mxu0 %v4897
          %5035 = vmatpush.bf16.msra.mxu0 %v4896
          %5036 = vmatpush.bf16.msra.mxu0 %v4895
          %5037 = vmatmul.bf16.gmra.mxu0 %v4616
          %v5038 = vpop.f32.mrf.mxu0
          %v5039 = vadd.f32 %v5025, %v5038
          %v5040 = vpop.f32.mrf.mxu0
          %v5041 = vadd.f32 %v5027, %v5040
          %5042 = vdwg.mxu0
          %5043 = vmatpush.bf16.msra.mxu0 %v4910
          %5044 = vmatpush.bf16.msra.mxu0 %v4909
          %5045 = vmatpush.bf16.msra.mxu0 %v4908
          %5046 = vmatpush.bf16.msra.mxu0 %v4907
          %5047 = vmatpush.bf16.msra.mxu0 %v4906
          %5048 = vmatpush.bf16.msra.mxu0 %v4905
          %5049 = vmatpush.bf16.msra.mxu0 %v4904
          %5050 = vmatpush.bf16.msra.mxu0 %v4903
          %5051 = vmatmul.bf16.gmra.mxu0 %v4617
          %v5052 = vpop.f32.mrf.mxu0
          %v5053 = vadd.f32 %v5039, %v5052
          %v5054 = vpop.f32.mrf.mxu0
          %v5055 = vadd.f32 %v5041, %v5054
          %5056 = vdwg.mxu0
          %5057 = vmatpush.bf16.msra.mxu0 %v4918
          %5058 = vmatpush.bf16.msra.mxu0 %v4917
          %5059 = vmatpush.bf16.msra.mxu0 %v4916
          %5060 = vmatpush.bf16.msra.mxu0 %v4915
          %5061 = vmatpush.bf16.msra.mxu0 %v4914
          %5062 = vmatpush.bf16.msra.mxu0 %v4913
          %5063 = vmatpush.bf16.msra.mxu0 %v4912
          %5064 = vmatpush.bf16.msra.mxu0 %v4911
          %5065 = vmatmul.bf16.gmra.mxu0 %v4618
          %v5066 = vpop.f32.mrf.mxu0
          %v5067 = vadd.f32 %v5053, %v5066
          %v5068 = vpop.f32.mrf.mxu0
          %v5069 = vadd.f32 %v5055, %v5068
          %5070 = vdwg.mxu0
          %5071 = vmatpush.bf16.msra.mxu0 %v4926
          %5072 = vmatpush.bf16.msra.mxu0 %v4925
          %5073 = vmatpush.bf16.msra.mxu0 %v4924
          %5074 = vmatpush.bf16.msra.mxu0 %v4923
          %5075 = vmatpush.bf16.msra.mxu0 %v4922
          %5076 = vmatpush.bf16.msra.mxu0 %v4921
          %5077 = vmatpush.bf16.msra.mxu0 %v4920
          %5078 = vmatpush.bf16.msra.mxu0 %v4919
          %5079 = vmatmul.bf16.gmra.mxu0 %v4619
          %v5080 = vpop.f32.mrf.mxu0
          %v5081 = vadd.f32 %v5067, %v5080
          %v5082 = vpop.f32.mrf.mxu0
          %v5083 = vadd.f32 %v5069, %v5082
          %5084 = vdwg.mxu0
          %5085 = vmatpush.bf16.msra.mxu0 %v4934
          %5086 = vmatpush.bf16.msra.mxu0 %v4933
          %5087 = vmatpush.bf16.msra.mxu0 %v4932
          %5088 = vmatpush.bf16.msra.mxu0 %v4931
          %5089 = vmatpush.bf16.msra.mxu0 %v4930
          %5090 = vmatpush.bf16.msra.mxu0 %v4929
          %5091 = vmatpush.bf16.msra.mxu0 %v4928
          %5092 = vmatpush.bf16.msra.mxu0 %v4927
          %5093 = vmatmul.bf16.gmra.mxu0 %v4620
          %v5094 = vpop.f32.mrf.mxu0
          %v5095 = vadd.f32 %v5081, %v5094
          %v5096 = vpop.f32.mrf.mxu0
          %v5097 = vadd.f32 %v5083, %v5096
          %5098 = vdwg.mxu0
          %5099 = vmatpush.bf16.msra.mxu0 %v4942
          %5100 = vmatpush.bf16.msra.mxu0 %v4941
          %5101 = vmatpush.bf16.msra.mxu0 %v4940
          %5102 = vmatpush.bf16.msra.mxu0 %v4939
          %5103 = vmatpush.bf16.msra.mxu0 %v4938
          %5104 = vmatpush.bf16.msra.mxu0 %v4937
          %5105 = vmatpush.bf16.msra.mxu0 %v4936
          %5106 = vmatpush.bf16.msra.mxu0 %v4935
          %5107 = vmatmul.bf16.gmra.mxu0 %v4621
          %v5108 = vpop.f32.mrf.mxu0
          %v5109 = vadd.f32 %v5095, %v5108
          %v5110 = vpop.f32.mrf.mxu0
          %v5111 = vadd.f32 %v5097, %v5110
          %5112 = vdwg.mxu0
          %5113 = vmatpush.bf16.msra.mxu0 %v4950
          %5114 = vmatpush.bf16.msra.mxu0 %v4949
          %5115 = vmatpush.bf16.msra.mxu0 %v4948
          %5116 = vmatpush.bf16.msra.mxu0 %v4947
          %5117 = vmatpush.bf16.msra.mxu0 %v4946
          %5118 = vmatpush.bf16.msra.mxu0 %v4945
          %5119 = vmatpush.bf16.msra.mxu0 %v4944
          %5120 = vmatpush.bf16.msra.mxu0 %v4943
          %5121 = vmatmul.bf16.gmra.mxu0 %v4622
          %v5122 = vpop.f32.mrf.mxu0
          %v5123 = vadd.f32 %v5109, %v5122
          %v5124 = vpop.f32.mrf.mxu0
          %v5125 = vadd.f32 %v5111, %v5124
          %5126 = vdwg.mxu0
          %5127 = vst [vmem:[#allocation12] sm:$0xff] %v5123
          %5128 = vst [vmem:[#allocation12 + $0x8] sm:$0xff] %v5125
        $region68: #{tpu_custom_call.1} parent=39 // pred_fallthru
          _
        // Predicated region
        $region69: #{tpu_custom_call.1} parent=39 // pred_check
          %p5129 = pneg %p172
        $region70: #{tpu_custom_call.1} parent=39 // pred_check_branch
          %5131 = sbr.rel (%p5129) target = $region72
        $region71: #{tpu_custom_call.1} parent=39 // pred_region
          %s5132 = smul.u32 2, %s26
          %5134 = vsyncadd [#allocation5], 0
          %s5135 = smul.addr %s5132, 8
          %s5136 = scalar_lea.hbm %s5, %s5135
          %s5137 = sshll.u32 [#allocation12], 4
          %s5138 = int_to_ptr.vmem [resolvable:$true] %s5137
          %s5139 = sshll.u32 %s5136, 4
          %s5140 = int_to_ptr.hbm [resolvable:$true] %s5139
          %5145 = dma.vmem_to_hbm [thread:$0]  %s5138, 256, %s5140, [#allocation5], 128, 128, 8
        $region72: #{tpu_custom_call.1} parent=39 // pred_fallthru
          _
        // Predicated region
        $region73: #{tpu_custom_call.1} parent=39 // pred_check
          %p5146 = pneg %p172
        $region74: #{tpu_custom_call.1} parent=39 // pred_check_branch
          %5148 = sbr.rel (%p5146) target = $region76
        $region75: #{tpu_custom_call.1} parent=39 // pred_region
          %5150 = dma.done [#allocation5], 256
        $region76: #{tpu_custom_call.1} parent=39 // pred_fallthru
          _
      $region40: #{tpu_custom_call.1} parent=5 // pred_fallthru
        _
      %p5151 = scmp.le.s32.totalorder 2, %s17
      // Predicated region
      $region77: #{tpu_custom_call.1} parent=5 // pred_check
        %p5152 = pneg %p5151
      $region78: #{tpu_custom_call.1} parent=5 // pred_check_branch
        %5154 = sbr.rel (%p5152) target = $region80
      $region79: #{tpu_custom_call.1} parent=5 // pred_region
        %s5155 = ssub.s32 %s17, 2
      $region80: #{tpu_custom_call.1} parent=5 // pred_fallthru
        _
    $region6: #{tpu_custom_call.1} parent=1 // loop_footer
      %s21 = sadd.s32 1, %s17
    $region7: #{tpu_custom_call.1} parent=1 // loop_footer_branch
      %16 = sbr.rel target = $region3
    $region8: #{tpu_custom_call.1} parent=1 // loop_exit
      _
    %5156 = vsyncpa [#allocation4], 1
    %s5157 = scalar_lea.sflag [#allocation4], 1
    %5158 = vsyncpa %s5157, 1
    %5159 = vsyncpa [#allocation7], 1
    %s5160 = scalar_lea.sflag [#allocation7], 1
    %5161 = vsyncpa %s5160, 1
    %5162 = vsyncpa [#allocation10], 1
    %5163 = vsyncpa [#allocation5], 1
    %s5164 = scalar_lea.sflag [#allocation5], 1
    %5165 = vsyncpa %s5164, 1

</llo_original>
